<compile_context>
chip_gen: v7x
topology: tpu7x:2x2x1
jax: 0.10.0
libtpu: 0.0.40
codegen_flags: <defaults>
</compile_context>

<pallas_src>
import functools

import jax
import jax.numpy as jnp
from jax.experimental import pallas as pl
from jax.experimental.pallas import tpu as pltpu


def _round_up(x, m):
    return (x + m - 1) // m * m


# ----------------------------------------------------------------------------
# Kernel: fused nearest-up2x + conv3x3x3 (+bias) for one (batch, depth-chunk).
# ----------------------------------------------------------------------------
def _subpixel_conv_kernel(lo_ref, body_ref, hi_ref, w_ref, b_ref, o_ref, *,
                          bd, H, W, cin, k_pad):
    """lo_ref:   (1, 1,  H+2, W+2, Cin) bf16  halo slice at depth d0-1 (zeros at the edge)
    body_ref: (1, bd, H+2, W+2, Cin) bf16  depth slices d0 .. d0+bd-1
    hi_ref:   (1, 1,  H+2, W+2, Cin) bf16  halo slice at depth d0+bd (zeros at the edge)
    w_ref:    (k_pad, 8*Cout)        bf16  packed weights, K order = (tap, cin), zero-row pad
    b_ref:    (1, 8*Cout)            f32   bias replicated over the 8 output parities
    o_ref:    (1, bd, H*W, 8*Cout)   bf16  packed output, lane order = (pd, ph, pw, c)
    """
    m = bd * H * W
    # Halo'd depth window [d0-1, d0+bd] as a single value (major-axis concat).
    win = jnp.concatenate([lo_ref[0], body_ref[0], hi_ref[0]], axis=0)

    # Register-level im2col: one (m, Cin) piece per 3x3x3 tap, lane-concatenated
    # into a single (m, k_pad) LHS so the entire 27*Cin contraction runs as ONE
    # MXU matmul (no per-tap f32 accumulation passes).
    pieces = []
    for od in range(3):
        for oh in range(3):
            for ow in range(3):
                p = win[od:od + bd, oh:oh + H, ow:ow + W, :]
                pieces.append(p.reshape(m, cin))
    if k_pad > 27 * cin:
        # Zero columns line up with the zero rows padded onto the weights.
        pieces.append(jnp.zeros((m, k_pad - 27 * cin), dtype=win.dtype))
    lhs = jnp.concatenate(pieces, axis=-1)                       # (m, k_pad) bf16

    acc = jnp.dot(lhs, w_ref[...], preferred_element_type=jnp.float32)
    acc = acc + b_ref[...]                                       # f32 bias add
    o_ref[0] = acc.reshape(bd, H * W, acc.shape[-1]).astype(o_ref.dtype)


# ----------------------------------------------------------------------------
# Plain-JAX glue: sub-pixel weight/bias packing and the final pixel-shuffle.
# ----------------------------------------------------------------------------
# Per-dim coupling between halo offset o (0,1,2), output parity p (0,1) and the
# original kernel tap k (0,1,2) under nearest-2x upsampling:
#   out[2*i + p] = sum_o ( M[o, p, :] . w_taps ) * x_padded[i + o]
_M = jnp.array(
    [[[1., 0., 0.], [0., 0., 0.]],
     [[0., 1., 1.], [1., 1., 0.]],
     [[0., 0., 0.], [0., 0., 1.]]], dtype=jnp.float32)   # (offset, parity, tap)


def pack_subpixel_weights(w, k_pad):
    """PyTorch Conv3d weight (Cout, Cin, 3, 3, 3) -> (k_pad, 8*Cout), K order =
    tap-major (od*9+oh*3+ow), cin-minor, zero rows padding K up to k_pad."""
    cout, cin = w.shape[0], w.shape[1]
    wp = jnp.einsum('dak,ebl,fcm,oiklm->defiabco', _M, _M, _M, w)
    wp = wp.reshape(27 * cin, 8 * cout)
    return jnp.pad(wp, ((0, k_pad - 27 * cin), (0, 0)))


def _step_vmem_bytes(bd, H, W, cin, co8, k_pad):
    m = bd * H * W
    in_b = (bd + 2) * (H + 2) * (W + 2) * cin * 2          # halo'd input slabs (bf16)
    out_b = m * co8 * 2                                    # packed output tile (bf16)
    work = in_b + 2 * m * k_pad * 2 + m * co8 * 4          # win + lhs(+copies) + f32 acc
    return 2 * (in_b + out_b) + k_pad * co8 * 2 + work     # 2x = double buffering


def _pick_depth_chunk(D, H, W, cin, co8, k_pad, cap=4, budget=12 * 2**20):
    best = 1
    for bd in range(1, min(D, cap) + 1):
        if D % bd == 0 and _step_vmem_bytes(bd, H, W, cin, co8, k_pad) <= budget:
            best = bd
    return best


@jax.jit
def resize_conv_forward(x, w, b):
    """x: (N, D, H, W, Cin) channels-last.  Returns (N, 2D, 2H, 2W, Cout) f32."""
    N, D, H, W, Cin = x.shape
    Cout = w.shape[0]
    CO8 = 8 * Cout
    assert H % 8 == 0 and W % 8 == 0, "keep spatial dims sublane-aligned"

    K_pad = _round_up(27 * Cin, 128)
    BD = _pick_depth_chunk(D, H, W, Cin, CO8, K_pad)
    assert D % BD == 0

    # bf16 MXU operands (f32 accumulation).  Depth is padded by (BD, 1) zero
    # slices so that the per-chunk body block starts on a BD-aligned offset and
    # both halo slabs are always in-bounds (edge halos land on zero rows).
    xb = x.astype(jnp.bfloat16)
    xp = jnp.pad(xb, ((0, 0), (BD, 1), (1, 1), (1, 1), (0, 0)))
    w_pack = pack_subpixel_weights(w, K_pad).astype(jnp.bfloat16)
    b_pack = jnp.tile(b.astype(jnp.float32), 8).reshape(1, CO8)

    kernel = functools.partial(_subpixel_conv_kernel,
                               bd=BD, H=H, W=W, cin=Cin, k_pad=K_pad)

    lo_spec = pl.BlockSpec((1, 1, H + 2, W + 2, Cin),
                           lambda n, d: (n, (d + 1) * BD - 1, 0, 0, 0))
    body_spec = pl.BlockSpec((1, BD, H + 2, W + 2, Cin),
                             lambda n, d: (n, d + 1, 0, 0, 0))
    hi_spec = pl.BlockSpec((1, 1, H + 2, W + 2, Cin),
                           lambda n, d: (n, (d + 2) * BD, 0, 0, 0))

    flops = 2 * N * D * H * W * 27 * Cin * CO8
    bytes_accessed = (N * (D + 2) * (H + 2) * (W + 2) * Cin * 2
                      + K_pad * CO8 * 2
                      + N * D * H * W * CO8 * 2)
    vmem_limit = int(min(100 * 2**20,
                         max(32 * 2**20, 2 * _step_vmem_bytes(BD, H, W, Cin, CO8, K_pad))))

    packed = pl.pallas_call(
        kernel,
        out_shape=jax.ShapeDtypeStruct((N, D, H * W, CO8), jnp.bfloat16),
        grid_spec=pltpu.PrefetchScalarGridSpec(
            num_scalar_prefetch=0,
            grid=(N, D // BD),
            in_specs=[
                lo_spec, body_spec, hi_spec,
                pl.BlockSpec((K_pad, CO8), lambda n, d: (0, 0)),
                pl.BlockSpec((1, CO8), lambda n, d: (0, 0)),
            ],
            out_specs=pl.BlockSpec((1, BD, H * W, CO8), lambda n, d: (n, d, 0, 0)),
        ),
        compiler_params=pltpu.CompilerParams(
            dimension_semantics=("parallel", "parallel"),
            vmem_limit_bytes=vmem_limit,
        ),
        cost_estimate=pl.CostEstimate(flops=flops, transcendentals=0,
                                      bytes_accessed=bytes_accessed),
    )(xp, xp, xp, w_pack, b_pack)

    # Pixel-shuffle the packed (pd, ph, pw, c) lanes back to NDHWC.  Reads the
    # bf16 packed tensor (half the traffic of v1's f32) and writes f32 output.
    y = packed.reshape(N, D, H, W, 2, 2, 2, Cout)
    y = jnp.transpose(y, (0, 1, 4, 2, 5, 3, 6, 7))
    return y.reshape(N, 2 * D, 2 * H, 2 * W, Cout).astype(jnp.float32)


# ----------------------------------------------------------------------------
# Pure-JAX reference (NCDHW, PyTorch semantics) for a sanity check.
# ----------------------------------------------------------------------------
def ref_forward_ncdhw(x_ncdhw, w, b):
    u = x_ncdhw
    for ax in (2, 3, 4):
        u = jnp.repeat(u, 2, axis=ax)                       # nearest upsample 2x
    dn = ("NCDHW", "OIDHW", "NCDHW")
    y = jax.lax.conv_general_dilated(u, w, (1, 1, 1), [(1, 1)] * 3,
                                     dimension_numbers=dn)
    return y + b.reshape(1, -1, 1, 1, 1)


if __name__ == "__main__":
    key = jax.random.PRNGKey(0)
    # Small shapes; Cout=16 makes the packed lane dim 8*Cout = 128 (lane-dense).
    N, Cin, Cout, D, H, W = 2, 4, 16, 8, 8, 8
    k1, k2, k3 = jax.random.split(key, 3)

    x_ncdhw = jax.random.normal(k1, (N, Cin, D, H, W), jnp.float32)
    w = jax.random.normal(k2, (Cout, Cin, 3, 3, 3), jnp.float32) / jnp.sqrt(27.0 * Cin)
    b = 0.1 * jax.random.normal(k3, (Cout,), jnp.float32)

    # Kernel consumes channels-last NDHWC.
    x_ndhwc = jnp.transpose(x_ncdhw, (0, 2, 3, 4, 1))
    y_ndhwc = resize_conv_forward(x_ndhwc, w, b)
    jax.block_until_ready(y_ndhwc)

    ref = ref_forward_ncdhw(x_ncdhw, w, b)
    y_ncdhw = jnp.transpose(y_ndhwc, (0, 4, 1, 2, 3))
    assert y_ncdhw.shape == (N, Cout, 2 * D, 2 * H, 2 * W)
    # Tolerance reflects bf16 MXU operands + bf16 packed output (f32 accumulation).
    err = float(jnp.max(jnp.abs(y_ncdhw - ref)))
    assert jnp.allclose(y_ncdhw, ref, atol=5e-2, rtol=5e-2), f"max abs err {err}"

    print("KERNEL_OK")
</pallas_src>

<mosaic_0001>
module attributes {stable_mosaic.version = 11 : i64} {
  func.func @_subpixel_conv_kernel(%arg0: i32, %arg1: i32, %arg2: memref<1x1x10x10x4xbf16, #tpu.memory_space<vmem>>, %arg3: memref<1x4x10x10x4xbf16, #tpu.memory_space<vmem>>, %arg4: memref<1x1x10x10x4xbf16, #tpu.memory_space<vmem>>, %arg5: memref<128x128xbf16, #tpu.memory_space<vmem>>, %arg6: memref<1x128xf32, #tpu.memory_space<vmem>>, %arg7: memref<1x4x64x128xbf16, #tpu.memory_space<vmem>>) attributes {dimension_semantics = [#tpu.dimension_semantics<parallel>, #tpu.dimension_semantics<parallel>], iteration_bounds = array<i64: 2, 2>, scalar_prefetch = 0 : i64, scratch_operands = 0 : i64, tpu.core_type = #tpu.core_type<tc>, window_params = [{transform_indices = @transform_0, window_bounds = array<i64: 1, 1, 10, 10, 4>}, {transform_indices = @transform_1, window_bounds = array<i64: 1, 4, 10, 10, 4>}, {transform_indices = @transform_2, window_bounds = array<i64: 1, 1, 10, 10, 4>}, {pipeline_mode = #tpu.pipeline_mode<synchronous>, transform_indices = @transform_3, window_bounds = array<i64: 128, 128>}, {pipeline_mode = #tpu.pipeline_mode<synchronous>, transform_indices = @transform_4, window_bounds = array<i64: 1, 128>}, {transform_indices = @transform_5, window_bounds = array<i64: 1, 4, 64, 128>}]} {
    %c0 = arith.constant 0 : index
    %c0_0 = arith.constant 0 : index
    %c0_1 = arith.constant 0 : index
    %c0_2 = arith.constant 0 : index
    %c0_3 = arith.constant 0 : index
    %0 = vector.load %arg2[%c0, %c0_0, %c0_1, %c0_2, %c0_3] : memref<1x1x10x10x4xbf16, #tpu.memory_space<vmem>>, vector<1x1x10x10x4xbf16>
    %1 = vector.shape_cast %0 : vector<1x1x10x10x4xbf16> to vector<1x10x10x4xbf16>
    %c0_4 = arith.constant 0 : index
    %c0_5 = arith.constant 0 : index
    %c0_6 = arith.constant 0 : index
    %c0_7 = arith.constant 0 : index
    %c0_8 = arith.constant 0 : index
    %2 = vector.load %arg3[%c0_4, %c0_5, %c0_6, %c0_7, %c0_8] : memref<1x4x10x10x4xbf16, #tpu.memory_space<vmem>>, vector<1x4x10x10x4xbf16>
    %3 = vector.shape_cast %2 : vector<1x4x10x10x4xbf16> to vector<4x10x10x4xbf16>
    %c0_9 = arith.constant 0 : index
    %c0_10 = arith.constant 0 : index
    %c0_11 = arith.constant 0 : index
    %c0_12 = arith.constant 0 : index
    %c0_13 = arith.constant 0 : index
    %4 = vector.load %arg4[%c0_9, %c0_10, %c0_11, %c0_12, %c0_13] : memref<1x1x10x10x4xbf16, #tpu.memory_space<vmem>>, vector<1x1x10x10x4xbf16>
    %5 = vector.shape_cast %4 : vector<1x1x10x10x4xbf16> to vector<1x10x10x4xbf16>
    %6 = tpu.concatenate %1, %3, %5 in 0 : vector<1x10x10x4xbf16>, vector<4x10x10x4xbf16>, vector<1x10x10x4xbf16> -> vector<6x10x10x4xbf16>
    %7 = vector.extract_strided_slice %6 {offsets = [0, 0, 0, 0], sizes = [4, 8, 8, 4], strides = [1, 1, 1, 1]} : vector<6x10x10x4xbf16> to vector<4x8x8x4xbf16>
    %8 = vector.shape_cast %7 : vector<4x8x8x4xbf16> to vector<256x4xbf16>
    %9 = vector.extract_strided_slice %6 {offsets = [0, 0, 1, 0], sizes = [4, 8, 8, 4], strides = [1, 1, 1, 1]} : vector<6x10x10x4xbf16> to vector<4x8x8x4xbf16>
    %10 = vector.shape_cast %9 : vector<4x8x8x4xbf16> to vector<256x4xbf16>
    %11 = vector.extract_strided_slice %6 {offsets = [0, 0, 2, 0], sizes = [4, 8, 8, 4], strides = [1, 1, 1, 1]} : vector<6x10x10x4xbf16> to vector<4x8x8x4xbf16>
    %12 = vector.shape_cast %11 : vector<4x8x8x4xbf16> to vector<256x4xbf16>
    %13 = vector.extract_strided_slice %6 {offsets = [0, 1, 0, 0], sizes = [4, 8, 8, 4], strides = [1, 1, 1, 1]} : vector<6x10x10x4xbf16> to vector<4x8x8x4xbf16>
    %14 = vector.shape_cast %13 : vector<4x8x8x4xbf16> to vector<256x4xbf16>
    %15 = vector.extract_strided_slice %6 {offsets = [0, 1, 1, 0], sizes = [4, 8, 8, 4], strides = [1, 1, 1, 1]} : vector<6x10x10x4xbf16> to vector<4x8x8x4xbf16>
    %16 = vector.shape_cast %15 : vector<4x8x8x4xbf16> to vector<256x4xbf16>
    %17 = vector.extract_strided_slice %6 {offsets = [0, 1, 2, 0], sizes = [4, 8, 8, 4], strides = [1, 1, 1, 1]} : vector<6x10x10x4xbf16> to vector<4x8x8x4xbf16>
    %18 = vector.shape_cast %17 : vector<4x8x8x4xbf16> to vector<256x4xbf16>
    %19 = vector.extract_strided_slice %6 {offsets = [0, 2, 0, 0], sizes = [4, 8, 8, 4], strides = [1, 1, 1, 1]} : vector<6x10x10x4xbf16> to vector<4x8x8x4xbf16>
    %20 = vector.shape_cast %19 : vector<4x8x8x4xbf16> to vector<256x4xbf16>
    %21 = vector.extract_strided_slice %6 {offsets = [0, 2, 1, 0], sizes = [4, 8, 8, 4], strides = [1, 1, 1, 1]} : vector<6x10x10x4xbf16> to vector<4x8x8x4xbf16>
    %22 = vector.shape_cast %21 : vector<4x8x8x4xbf16> to vector<256x4xbf16>
    %23 = vector.extract_strided_slice %6 {offsets = [0, 2, 2, 0], sizes = [4, 8, 8, 4], strides = [1, 1, 1, 1]} : vector<6x10x10x4xbf16> to vector<4x8x8x4xbf16>
    %24 = vector.shape_cast %23 : vector<4x8x8x4xbf16> to vector<256x4xbf16>
    %25 = vector.extract_strided_slice %6 {offsets = [1, 0, 0, 0], sizes = [4, 8, 8, 4], strides = [1, 1, 1, 1]} : vector<6x10x10x4xbf16> to vector<4x8x8x4xbf16>
    %26 = vector.shape_cast %25 : vector<4x8x8x4xbf16> to vector<256x4xbf16>
    %27 = vector.extract_strided_slice %6 {offsets = [1, 0, 1, 0], sizes = [4, 8, 8, 4], strides = [1, 1, 1, 1]} : vector<6x10x10x4xbf16> to vector<4x8x8x4xbf16>
    %28 = vector.shape_cast %27 : vector<4x8x8x4xbf16> to vector<256x4xbf16>
    %29 = vector.extract_strided_slice %6 {offsets = [1, 0, 2, 0], sizes = [4, 8, 8, 4], strides = [1, 1, 1, 1]} : vector<6x10x10x4xbf16> to vector<4x8x8x4xbf16>
    %30 = vector.shape_cast %29 : vector<4x8x8x4xbf16> to vector<256x4xbf16>
    %31 = vector.extract_strided_slice %6 {offsets = [1, 1, 0, 0], sizes = [4, 8, 8, 4], strides = [1, 1, 1, 1]} : vector<6x10x10x4xbf16> to vector<4x8x8x4xbf16>
    %32 = vector.shape_cast %31 : vector<4x8x8x4xbf16> to vector<256x4xbf16>
    %33 = vector.extract_strided_slice %6 {offsets = [1, 1, 1, 0], sizes = [4, 8, 8, 4], strides = [1, 1, 1, 1]} : vector<6x10x10x4xbf16> to vector<4x8x8x4xbf16>
    %34 = vector.shape_cast %33 : vector<4x8x8x4xbf16> to vector<256x4xbf16>
    %35 = vector.extract_strided_slice %6 {offsets = [1, 1, 2, 0], sizes = [4, 8, 8, 4], strides = [1, 1, 1, 1]} : vector<6x10x10x4xbf16> to vector<4x8x8x4xbf16>
    %36 = vector.shape_cast %35 : vector<4x8x8x4xbf16> to vector<256x4xbf16>
    %37 = vector.extract_strided_slice %6 {offsets = [1, 2, 0, 0], sizes = [4, 8, 8, 4], strides = [1, 1, 1, 1]} : vector<6x10x10x4xbf16> to vector<4x8x8x4xbf16>
    %38 = vector.shape_cast %37 : vector<4x8x8x4xbf16> to vector<256x4xbf16>
    %39 = vector.extract_strided_slice %6 {offsets = [1, 2, 1, 0], sizes = [4, 8, 8, 4], strides = [1, 1, 1, 1]} : vector<6x10x10x4xbf16> to vector<4x8x8x4xbf16>
    %40 = vector.shape_cast %39 : vector<4x8x8x4xbf16> to vector<256x4xbf16>
    %41 = vector.extract_strided_slice %6 {offsets = [1, 2, 2, 0], sizes = [4, 8, 8, 4], strides = [1, 1, 1, 1]} : vector<6x10x10x4xbf16> to vector<4x8x8x4xbf16>
    %42 = vector.shape_cast %41 : vector<4x8x8x4xbf16> to vector<256x4xbf16>
    %43 = vector.extract_strided_slice %6 {offsets = [2, 0, 0, 0], sizes = [4, 8, 8, 4], strides = [1, 1, 1, 1]} : vector<6x10x10x4xbf16> to vector<4x8x8x4xbf16>
    %44 = vector.shape_cast %43 : vector<4x8x8x4xbf16> to vector<256x4xbf16>
    %45 = vector.extract_strided_slice %6 {offsets = [2, 0, 1, 0], sizes = [4, 8, 8, 4], strides = [1, 1, 1, 1]} : vector<6x10x10x4xbf16> to vector<4x8x8x4xbf16>
    %46 = vector.shape_cast %45 : vector<4x8x8x4xbf16> to vector<256x4xbf16>
    %47 = vector.extract_strided_slice %6 {offsets = [2, 0, 2, 0], sizes = [4, 8, 8, 4], strides = [1, 1, 1, 1]} : vector<6x10x10x4xbf16> to vector<4x8x8x4xbf16>
    %48 = vector.shape_cast %47 : vector<4x8x8x4xbf16> to vector<256x4xbf16>
    %49 = vector.extract_strided_slice %6 {offsets = [2, 1, 0, 0], sizes = [4, 8, 8, 4], strides = [1, 1, 1, 1]} : vector<6x10x10x4xbf16> to vector<4x8x8x4xbf16>
    %50 = vector.shape_cast %49 : vector<4x8x8x4xbf16> to vector<256x4xbf16>
    %51 = vector.extract_strided_slice %6 {offsets = [2, 1, 1, 0], sizes = [4, 8, 8, 4], strides = [1, 1, 1, 1]} : vector<6x10x10x4xbf16> to vector<4x8x8x4xbf16>
    %52 = vector.shape_cast %51 : vector<4x8x8x4xbf16> to vector<256x4xbf16>
    %53 = vector.extract_strided_slice %6 {offsets = [2, 1, 2, 0], sizes = [4, 8, 8, 4], strides = [1, 1, 1, 1]} : vector<6x10x10x4xbf16> to vector<4x8x8x4xbf16>
    %54 = vector.shape_cast %53 : vector<4x8x8x4xbf16> to vector<256x4xbf16>
    %55 = vector.extract_strided_slice %6 {offsets = [2, 2, 0, 0], sizes = [4, 8, 8, 4], strides = [1, 1, 1, 1]} : vector<6x10x10x4xbf16> to vector<4x8x8x4xbf16>
    %56 = vector.shape_cast %55 : vector<4x8x8x4xbf16> to vector<256x4xbf16>
    %57 = vector.extract_strided_slice %6 {offsets = [2, 2, 1, 0], sizes = [4, 8, 8, 4], strides = [1, 1, 1, 1]} : vector<6x10x10x4xbf16> to vector<4x8x8x4xbf16>
    %58 = vector.shape_cast %57 : vector<4x8x8x4xbf16> to vector<256x4xbf16>
    %59 = vector.extract_strided_slice %6 {offsets = [2, 2, 2, 0], sizes = [4, 8, 8, 4], strides = [1, 1, 1, 1]} : vector<6x10x10x4xbf16> to vector<4x8x8x4xbf16>
    %60 = vector.shape_cast %59 : vector<4x8x8x4xbf16> to vector<256x4xbf16>
    %cst = arith.constant 0.000000e+00 : bf16
    %61 = vector.broadcast %cst : bf16 to vector<256x20xbf16>
    %62 = tpu.concatenate %8, %10, %12, %14, %16, %18, %20, %22, %24, %26, %28, %30, %32, %34, %36, %38 in 1 : vector<256x4xbf16>, vector<256x4xbf16>, vector<256x4xbf16>, vector<256x4xbf16>, vector<256x4xbf16>, vector<256x4xbf16>, vector<256x4xbf16>, vector<256x4xbf16>, vector<256x4xbf16>, vector<256x4xbf16>, vector<256x4xbf16>, vector<256x4xbf16>, vector<256x4xbf16>, vector<256x4xbf16>, vector<256x4xbf16>, vector<256x4xbf16> -> vector<256x64xbf16>
    %63 = tpu.concatenate %40, %42, %44, %46, %48, %50, %52, %54, %56, %58, %60, %61 in 1 : vector<256x4xbf16>, vector<256x4xbf16>, vector<256x4xbf16>, vector<256x4xbf16>, vector<256x4xbf16>, vector<256x4xbf16>, vector<256x4xbf16>, vector<256x4xbf16>, vector<256x4xbf16>, vector<256x4xbf16>, vector<256x4xbf16>, vector<256x20xbf16> -> vector<256x64xbf16>
    %64 = tpu.concatenate %62, %63 in 1 : vector<256x64xbf16>, vector<256x64xbf16> -> vector<256x128xbf16>
    %c0_14 = arith.constant 0 : index
    %c0_15 = arith.constant 0 : index
    %65 = vector.load %arg5[%c0_14, %c0_15] : memref<128x128xbf16, #tpu.memory_space<vmem>>, vector<128x128xbf16>
    %cst_16 = arith.constant dense<0.000000e+00> : vector<256x128xf32>
    %66 = tpu.matmul %64, %65, %cst_16 {dimension_numbers = #tpu.dot_dimension_numbers<[1], [0], [0], [1], [0, 0, 1, 1], [], []>} : vector<256x128xbf16>, vector<128x128xbf16>, vector<256x128xf32> -> vector<256x128xf32>
    %c0_17 = arith.constant 0 : index
    %c0_18 = arith.constant 0 : index
    %67 = vector.load %arg6[%c0_17, %c0_18] : memref<1x128xf32, #tpu.memory_space<vmem>>, vector<1x128xf32>
    %68 = vector.broadcast %67 : vector<1x128xf32> to vector<256x128xf32>
    %69 = arith.addf %66, %68 : vector<256x128xf32>
    %70 = vector.shape_cast %69 : vector<256x128xf32> to vector<4x64x128xf32>
    %71 = arith.truncf %70 : vector<4x64x128xf32> to vector<4x64x128xbf16>
    %c0_19 = arith.constant 0 : index
    %c0_20 = arith.constant 0 : index
    %c0_21 = arith.constant 0 : index
    %c0_22 = arith.constant 0 : index
    %72 = vector.load %arg7[%c0_19, %c0_20, %c0_21, %c0_22] : memref<1x4x64x128xbf16, #tpu.memory_space<vmem>>, vector<1x4x64x128xbf16>
    %73 = vector.shape_cast %72 : vector<1x4x64x128xbf16> to vector<4x64x128xbf16>
    %74 = vector.shape_cast %71 : vector<4x64x128xbf16> to vector<1x4x64x128xbf16>
    tpu.vector_store %arg7[%c0_19, %c0_20, %c0_21, %c0_22], %74 {strides = array<i32>} : memref<1x4x64x128xbf16, #tpu.memory_space<vmem>>, vector<1x4x64x128xbf16>,
    return
  }
  func.func @transform_0(%arg0: i32, %arg1: i32) -> (i32, i32, i32, i32, i32) {
    %c1_i32 = arith.constant 1 : i32
    %0 = arith.addi %arg1, %c1_i32 : i32
    %c4_i32 = arith.constant 4 : i32
    %1 = arith.muli %0, %c4_i32 : i32
    %c1_i32_0 = arith.constant 1 : i32
    %2 = arith.subi %1, %c1_i32_0 : i32
    %c0_i32 = arith.constant 0 : i32
    %c0_i32_1 = arith.constant 0 : i32
    %c0_i32_2 = arith.constant 0 : i32
    %c0_i32_3 = arith.constant 0 : i32
    return %arg0, %2, %c0_i32, %c0_i32_1, %c0_i32_2 : i32, i32, i32, i32, i32
  }
  func.func @transform_1(%arg0: i32, %arg1: i32) -> (i32, i32, i32, i32, i32) {
    %c1_i32 = arith.constant 1 : i32
    %0 = arith.addi %arg1, %c1_i32 : i32
    %c0_i32 = arith.constant 0 : i32
    %c0_i32_0 = arith.constant 0 : i32
    %c0_i32_1 = arith.constant 0 : i32
    %c0_i32_2 = arith.constant 0 : i32
    return %arg0, %0, %c0_i32, %c0_i32_0, %c0_i32_1 : i32, i32, i32, i32, i32
  }
  func.func @transform_2(%arg0: i32, %arg1: i32) -> (i32, i32, i32, i32, i32) {
    %c2_i32 = arith.constant 2 : i32
    %0 = arith.addi %arg1, %c2_i32 : i32
    %c4_i32 = arith.constant 4 : i32
    %1 = arith.muli %0, %c4_i32 : i32
    %c0_i32 = arith.constant 0 : i32
    %c0_i32_0 = arith.constant 0 : i32
    %c0_i32_1 = arith.constant 0 : i32
    %c0_i32_2 = arith.constant 0 : i32
    return %arg0, %1, %c0_i32, %c0_i32_0, %c0_i32_1 : i32, i32, i32, i32, i32
  }
  func.func @transform_3(%arg0: i32, %arg1: i32) -> (i32, i32) {
    %c0_i32 = arith.constant 0 : i32
    %c0_i32_0 = arith.constant 0 : i32
    %c0_i32_1 = arith.constant 0 : i32
    return %c0_i32, %c0_i32_0 : i32, i32
  }
  func.func @transform_4(%arg0: i32, %arg1: i32) -> (i32, i32) {
    %c0_i32 = arith.constant 0 : i32
    %c0_i32_0 = arith.constant 0 : i32
    %c0_i32_1 = arith.constant 0 : i32
    return %c0_i32, %c0_i32_0 : i32, i32
  }
  func.func @transform_5(%arg0: i32, %arg1: i32) -> (i32, i32, i32, i32) {
    %c0_i32 = arith.constant 0 : i32
    %c0_i32_0 = arith.constant 0 : i32
    %c0_i32_1 = arith.constant 0 : i32
    return %arg0, %arg1, %c0_i32, %c0_i32_0 : i32, i32, i32, i32
  }
}

</mosaic_0001>

<llo_original>
// kernel: tile.9
$region0: #{tile.9}
  %s0 = inlined_call_operand.vmem [shape: f32[8,16], index: 0, kind: input, shape index: {}]
  %s1 = inlined_call_operand.vmem [shape: f32[1,128], index: 1, kind: output, shape index: {}]
  $region1: #{tile.9} parent=0
    #allocation0 [shape = 'u8[4096]{0}', space=vmem, size = 0x1000, scoped, tag = 'scoped mem for output reshape']
    %v2 = vld [vmem:[%s0] sm:$0x1]
    %vm3 = vcmask 130048
    %4 = vst.msk [vmem:[#allocation0] sm:$0x1] %vm3, %v2
    %s5 = scalar_lea.vmem %s0, 7
    %v6 = vld [vmem:[%s5] sm:$0x1]
    %7 = vrot.lane.b32.xlu0 %v6, 112
    %v8 = vpop.permute.xlu0 %7
    %vm9 = vcmask 1048448
    %10 = vst.msk [vmem:[#allocation0] sm:$0x1] %vm9, %v8
    %s11 = scalar_lea.vmem %s0, 6
    %v12 = vld [vmem:[%s11] sm:$0x1]
    %13 = vrot.lane.b32.xlu0 %v12, 96
    %v14 = vpop.permute.xlu0 %13
    %vm15 = vcmask 917248
    %16 = vst.msk [vmem:[#allocation0] sm:$0x1] %vm15, %v14
    %s17 = scalar_lea.vmem %s0, 5
    %v18 = vld [vmem:[%s17] sm:$0x1]
    %19 = vrot.lane.b32.xlu0 %v18, 80
    %v20 = vpop.permute.xlu0 %19
    %vm21 = vcmask 786048
    %22 = vst.msk [vmem:[#allocation0] sm:$0x1] %vm21, %v20
    %s23 = scalar_lea.vmem %s0, 4
    %v24 = vld [vmem:[%s23] sm:$0x1]
    %25 = vrot.lane.b32.xlu0 %v24, 64
    %v26 = vpop.permute.xlu0 %25
    %vm27 = vcmask 654848
    %28 = vst.msk [vmem:[#allocation0] sm:$0x1] %vm27, %v26
    %s29 = scalar_lea.vmem %s0, 3
    %v30 = vld [vmem:[%s29] sm:$0x1]
    %31 = vrot.lane.b32.xlu0 %v30, 48
    %v32 = vpop.permute.xlu0 %31
    %vm33 = vcmask 523648
    %34 = vst.msk [vmem:[#allocation0] sm:$0x1] %vm33, %v32
    %s35 = scalar_lea.vmem %s0, 2
    %v36 = vld [vmem:[%s35] sm:$0x1]
    %37 = vrot.lane.b32.xlu0 %v36, 32
    %v38 = vpop.permute.xlu0 %37
    %vm39 = vcmask 392448
    %40 = vst.msk [vmem:[#allocation0] sm:$0x1] %vm39, %v38
    %s41 = scalar_lea.vmem %s0, 1
    %v42 = vld [vmem:[%s41] sm:$0x1]
    %43 = vrot.lane.b32.xlu0 %v42, 16
    %v44 = vpop.permute.xlu0 %43
    %vm45 = vcmask 261248
    %46 = vst.msk [vmem:[#allocation0] sm:$0x1] %vm45, %v44
    %s48 = sshllo.u32 0, 1
    %v50 = vld [vmem:[#allocation0] sm:%s48]
    %s51 = sshllo.u32 0, 1
    %52 = vst [vmem:[%s1] sm:%s51] %v50

// kernel: tile.8
$region0: #{tile.8}
  #allocation2 [shape = 's32[1]{0}', space=sflag, size = 0x4, scoped, tag = 'scoped memory for tile.8']
  %s0 = inlined_call_operand.hbm [shape: f32[16], index: 0, kind: input, shape index: {}]
  %s1 = inlined_call_operand.vmem [shape: f32[8,16], index: 1, kind: output, shape index: {}]
  $region1: #{tile.8} parent=0
    #allocation0 [shape = 'u8[512]{0}', space=vmem, size = 0x400, scoped, tag = 'operand span for operand 0']
    #allocation1 [shape = 's32[1]{0}', space=sflag, size = 0x4, scoped, tag = 'scoped memory for tile.8']
    %2 = vsyncpa [#allocation1], 0
    // Predicated region
    $region2: #{tile.8} parent=1 // pred_check
      _
    $region3: #{tile.8} parent=1 // pred_check_branch
      %4 = sbr.rel (0) target = $region5
    $region4: #{tile.8} parent=1 // pred_region
      %s6 = ssub.s32 16, 16
      %7 = vsyncadd [#allocation1], %s6
      %s9 = sshll.u32 [#allocation0], 4
      %s10 = int_to_ptr.vmem [resolvable:$true] %s9
      %12 = dma.hbm_to_vmem [thread:$0]  %s0, 16, %s10, [#allocation1]
    $region5: #{tile.8} parent=1 // pred_fallthru
      _
    // Predicated region
    $region6: #{tile.8} parent=1 // pred_check
      _
    $region7: #{tile.8} parent=1 // pred_check_branch
      %14 = sbr.rel (0) target = $region9
    $region8: #{tile.8} parent=1 // pred_region
      %15 = dma.done [#allocation1], 16
    $region9: #{tile.8} parent=1 // pred_fallthru
      _
    %v16 = vld [vmem:[#allocation0] ss:$0 sm:$0xff]
    %17 = vst [vmem:[%s1] sm:$0xff] %v16
    %18 = vsyncpa [#allocation1], 1

// kernel: resize_conv_forward.1
$region0: #{resize_conv_forward.1}
  #allocation0 [shape = 'u32[]', space=smem, size = 0x4, offset = 0x4, fixed_abs, tag = 'smem constant byte address 0x4 - core index']
  #allocation1 [shape = 'u32[144,128]{1,0:T(1,128)}', space=vmem, size = 0x12000, scoped, tag = 'internal scratch']
  %s0 = inlined_call_operand.vmem [shape: bf16[2,13,10,10,4], index: 0, kind: input, shape index: {}, may-alias: {0,1,2}]
  %s1 = inlined_call_operand.vmem [shape: bf16[2,13,10,10,4], index: 1, kind: input, shape index: {}, may-alias: {0,1,2}]
  %s2 = inlined_call_operand.vmem [shape: bf16[2,13,10,10,4], index: 2, kind: input, shape index: {}, may-alias: {0,1,2}]
  %s3 = inlined_call_operand.vmem [shape: bf16[128,128], index: 3, kind: input, shape index: {}]
  %s4 = inlined_call_operand.vmem [shape: f32[1,128], index: 4, kind: input, shape index: {}]
  %s5 = inlined_call_operand.vmem [shape: bf16[2,8,64,128], index: 5, kind: output, shape index: {}]
  %s6 = sld [smem:[#allocation0]]
  $region53: #{resize_conv_forward.1} parent=0
    _
  %s8 = ssub.s32 1, %s6
  %s9 = scalar_select 0, %s8, %s6
  loop: start=0, step=1, limit=6
  $region2: #{resize_conv_forward.1} parent=0 // loop_pre_header
    _
  $region3: #{resize_conv_forward.1} parent=0 // loop_header
    %s11 = sphi 0, %s15
    %p12 = scmp.ge.s32.totalorder %s11, 6
    %s18 = sphi 0, %s30
    %s19 = sphi 0, %s26
    %s20 = sphi 0, %s18
    %s21 = sphi 0, %s19
    %s22 = sphi 0, %s20
    %s23 = sphi 0, %s21
    %s41 = sphi 0, %s43
    %s44 = sphi 0, %s41
    %s45 = sphi 0, %s44
    %s61 = sphi 0, %s45
    %s71 = sphi 0, %s73
    %s74 = sphi 0, %s71
    %s75 = sphi 0, %s74
    %s91 = sphi 0, %s75
    %s103 = sphi 0, %s105
    %s106 = sphi 0, %s103
    %s107 = sphi 0, %s106
    %s123 = sphi 0, %s107
    %s127 = sphi 0, %s127
    %s129 = sphi 0, %s127
    %s130 = sphi 0, %s129
    %s144 = sphi 0, %s130
    %s148 = sphi 0, %s148
    %s150 = sphi 0, %s148
    %s151 = sphi 0, %s150
    %s165 = sphi 0, %s151
    %s173 = sphi 0, %s175
    %s176 = sphi 0, %s173
    %s177 = sphi 0, %s176
    %s193 = sphi 0, %s177
  $region4: #{resize_conv_forward.1} parent=0 // loop_header_branch
    %14 = sbr.rel (%p12) target = $region8
  $region5: #{resize_conv_forward.1} parent=0 // loop_body
    %s16 = ssub.s32 %s11, 1
    %s17 = ssub.s32 %s11, 2
    %s24 = sadd.s32 1, %s19
    %p25 = scmp.ge.s32.totalorder %s24, 2
    %s26 = scalar_select %p25, 0, %s24
    %s27 = sadd.s32 1, %s18
    %s28 = scalar_select %p25, %s27, %s18
    %p29 = scmp.ge.s32.totalorder %s28, 2
    %s30 = scalar_select %p29, 0, %s28
    %s31 = sadd.s32 %s19, 1
    %s32 = smul.u32 %s31, 4
    %s33 = ssub.s32 %s32, 1
    %s34 = sadd.s32 %s26, 1
    %s35 = smul.u32 %s34, 4
    %s36 = ssub.s32 %s35, 1
    %s37 = ssub.s32 %s18, %s30
    %s38 = ssub.s32 %s33, %s36
    %s39 = sor.u32 %s37, %s38
    %p40 = scmp.eq.s32.totalorder %s39, 0
    %s42 = sadd.s32 %s41, 1
    %s43 = scalar_select %p40, %s41, %s42
    %p46 = pneg %p40
    %p47 = scmp.eq.s32.totalorder %s11, 3
    %p48 = por %p46, %p47
    %p49 = scmp.ne.s32.totalorder %s41, %s44
    %p50 = scmp.eq.s32.totalorder %s11, 0
    %p51 = por %p49, %p50
    %p52 = scmp.ne.s32.totalorder %s41, %s44
    %p53 = scmp.eq.s32.totalorder %s16, 3
    %p54 = por %p52, %p53
    %p55 = scmp.ne.s32.totalorder %s44, %s45
    %p56 = scmp.eq.s32.totalorder %s16, 0
    %p57 = por %p55, %p56
    %p58 = scmp.ne.s32.totalorder %s44, %s45
    %p59 = scmp.eq.s32.totalorder %s17, 3
    %p60 = por %p58, %p59
    %p62 = scmp.ne.s32.totalorder %s45, %s61
    %p63 = scmp.eq.s32.totalorder %s17, 0
    %p64 = por %p62, %p63
    %s65 = sadd.s32 %s19, 1
    %s66 = sadd.s32 %s26, 1
    %s67 = ssub.s32 %s18, %s30
    %s68 = ssub.s32 %s65, %s66
    %s69 = sor.u32 %s67, %s68
    %p70 = scmp.eq.s32.totalorder %s69, 0
    %s72 = sadd.s32 %s71, 1
    %s73 = scalar_select %p70, %s71, %s72
    %p76 = pneg %p70
    %p77 = scmp.eq.s32.totalorder %s11, 3
    %p78 = por %p76, %p77
    %p79 = scmp.ne.s32.totalorder %s71, %s74
    %p80 = scmp.eq.s32.totalorder %s11, 0
    %p81 = por %p79, %p80
    %p82 = scmp.ne.s32.totalorder %s71, %s74
    %p83 = scmp.eq.s32.totalorder %s16, 3
    %p84 = por %p82, %p83
    %p85 = scmp.ne.s32.totalorder %s74, %s75
    %p86 = scmp.eq.s32.totalorder %s16, 0
    %p87 = por %p85, %p86
    %p88 = scmp.ne.s32.totalorder %s74, %s75
    %p89 = scmp.eq.s32.totalorder %s17, 3
    %p90 = por %p88, %p89
    %p92 = scmp.ne.s32.totalorder %s75, %s91
    %p93 = scmp.eq.s32.totalorder %s17, 0
    %p94 = por %p92, %p93
    %s95 = sadd.s32 %s19, 2
    %s96 = smul.u32 %s95, 4
    %s97 = sadd.s32 %s26, 2
    %s98 = smul.u32 %s97, 4
    %s99 = ssub.s32 %s18, %s30
    %s100 = ssub.s32 %s96, %s98
    %s101 = sor.u32 %s99, %s100
    %p102 = scmp.eq.s32.totalorder %s101, 0
    %s104 = sadd.s32 %s103, 1
    %s105 = scalar_select %p102, %s103, %s104
    %p108 = pneg %p102
    %p109 = scmp.eq.s32.totalorder %s11, 3
    %p110 = por %p108, %p109
    %p111 = scmp.ne.s32.totalorder %s103, %s106
    %p112 = scmp.eq.s32.totalorder %s11, 0
    %p113 = por %p111, %p112
    %p114 = scmp.ne.s32.totalorder %s103, %s106
    %p115 = scmp.eq.s32.totalorder %s16, 3
    %p116 = por %p114, %p115
    %p117 = scmp.ne.s32.totalorder %s106, %s107
    %p118 = scmp.eq.s32.totalorder %s16, 0
    %p119 = por %p117, %p118
    %p120 = scmp.ne.s32.totalorder %s106, %s107
    %p121 = scmp.eq.s32.totalorder %s17, 3
    %p122 = por %p120, %p121
    %p124 = scmp.ne.s32.totalorder %s107, %s123
    %p125 = scmp.eq.s32.totalorder %s17, 0
    %p126 = por %p124, %p125
    %s128 = sadd.s32 %s127, 1
    %p131 = scmp.eq.s32.totalorder %s11, 3
    %p132 = scmp.ne.s32.totalorder %s127, %s129
    %p133 = scmp.eq.s32.totalorder %s11, 0
    %p134 = por %p132, %p133
    %p135 = scmp.ne.s32.totalorder %s127, %s129
    %p136 = scmp.eq.s32.totalorder %s16, 3
    %p137 = por %p135, %p136
    %p138 = scmp.ne.s32.totalorder %s129, %s130
    %p139 = scmp.eq.s32.totalorder %s16, 0
    %p140 = por %p138, %p139
    %p141 = scmp.ne.s32.totalorder %s129, %s130
    %p142 = scmp.eq.s32.totalorder %s17, 3
    %p143 = por %p141, %p142
    %p145 = scmp.ne.s32.totalorder %s130, %s144
    %p146 = scmp.eq.s32.totalorder %s17, 0
    %p147 = por %p145, %p146
    %s149 = sadd.s32 %s148, 1
    %p152 = scmp.eq.s32.totalorder %s11, 3
    %p153 = scmp.ne.s32.totalorder %s148, %s150
    %p154 = scmp.eq.s32.totalorder %s11, 0
    %p155 = por %p153, %p154
    %p156 = scmp.ne.s32.totalorder %s148, %s150
    %p157 = scmp.eq.s32.totalorder %s16, 3
    %p158 = por %p156, %p157
    %p159 = scmp.ne.s32.totalorder %s150, %s151
    %p160 = scmp.eq.s32.totalorder %s16, 0
    %p161 = por %p159, %p160
    %p162 = scmp.ne.s32.totalorder %s150, %s151
    %p163 = scmp.eq.s32.totalorder %s17, 3
    %p164 = por %p162, %p163
    %p166 = scmp.ne.s32.totalorder %s151, %s165
    %p167 = scmp.eq.s32.totalorder %s17, 0
    %p168 = por %p166, %p167
    %s169 = ssub.s32 %s18, %s30
    %s170 = ssub.s32 %s19, %s26
    %s171 = sor.u32 %s169, %s170
    %p172 = scmp.eq.s32.totalorder %s171, 0
    %s174 = sadd.s32 %s173, 1
    %s175 = scalar_select %p172, %s173, %s174
    %p178 = pneg %p172
    %p179 = scmp.eq.s32.totalorder %s11, 3
    %p180 = por %p178, %p179
    %p181 = scmp.ne.s32.totalorder %s173, %s176
    %p182 = scmp.eq.s32.totalorder %s11, 0
    %p183 = por %p181, %p182
    %p184 = scmp.ne.s32.totalorder %s173, %s176
    %p185 = scmp.eq.s32.totalorder %s16, 3
    %p186 = por %p184, %p185
    %p187 = scmp.ne.s32.totalorder %s176, %s177
    %p188 = scmp.eq.s32.totalorder %s16, 0
    %p189 = por %p187, %p188
    %p190 = scmp.ne.s32.totalorder %s176, %s177
    %p191 = scmp.eq.s32.totalorder %s17, 3
    %p192 = por %p190, %p191
    %p194 = scmp.ne.s32.totalorder %s177, %s193
    %p195 = scmp.eq.s32.totalorder %s17, 0
    %p196 = por %p194, %p195
    %p197 = scmp.le.s32.totalorder 1, %s11
    %p198 = scmp.lt.s32.totalorder %s11, 5
    %p199 = pnand %p197, %p198
    %p200 = pneg %p199
    // Predicated region
    $region9: #{resize_conv_forward.1} parent=5 // pred_check
      _
    $region10: #{resize_conv_forward.1} parent=5 // pred_check_branch
      %202 = sbr.rel (%p199) target = $region12
    $region11: #{resize_conv_forward.1} parent=5 // pred_region
      %s203 = ssub.s32 %s11, 1
      // Predicated region
      $region13: #{resize_conv_forward.1} parent=11 // pred_check
        %p204 = pneg %p140
      $region14: #{resize_conv_forward.1} parent=11 // pred_check_branch
        %206 = sbr.rel (%p204) target = $region16
      $region15: #{resize_conv_forward.1} parent=11 // pred_region
        _
      $region16: #{resize_conv_forward.1} parent=11 // pred_fallthru
        _
      // Predicated region
      $region17: #{resize_conv_forward.1} parent=11 // pred_check
        %p207 = pneg %p161
      $region18: #{resize_conv_forward.1} parent=11 // pred_check_branch
        %209 = sbr.rel (%p207) target = $region20
      $region19: #{resize_conv_forward.1} parent=11 // pred_region
        _
      $region20: #{resize_conv_forward.1} parent=11 // pred_fallthru
        _
    $region12: #{resize_conv_forward.1} parent=5 // pred_fallthru
      _
    %p210 = scmp.lt.s32.totalorder %s11, 4
    // Predicated region
    $region21: #{resize_conv_forward.1} parent=5 // pred_check
      %p211 = pneg %p210
    $region22: #{resize_conv_forward.1} parent=5 // pred_check_branch
      %213 = sbr.rel (%p211) target = $region24
    $region23: #{resize_conv_forward.1} parent=5 // pred_region
      // Predicated region
      $region25: #{resize_conv_forward.1} parent=23 // pred_check
        %p214 = pneg %p51
      $region26: #{resize_conv_forward.1} parent=23 // pred_check_branch
        %216 = sbr.rel (%p214) target = $region28
      $region27: #{resize_conv_forward.1} parent=23 // pred_region
        %s217 = sadd.s32 %s19, 1
        %s218 = smul.u32 %s217, 4
        %s219 = ssub.s32 %s218, 1
        %p220 = scmp.lt.s32.totalorder %s18, 1
        %s221 = scalar_select %p220, %s18, 1
        %p222 = scmp.lt.s32.totalorder %s219, 12
        %s223 = scalar_select %p222, %s219, 12
        %s224 = smul.addr %s223, 20
        %s225 = smul.addr %s221, 260
        %s226 = sadd.s32 %s224, %s225
        %s227 = smul.addr %s226, 4
        %s228 = scalar_lea.vmem %s0, %s227
        %s229 = sadd.s32 %s19, 1
        %s230 = smul.u32 %s229, 4
        %s231 = ssub.s32 %s230, 1
      $region28: #{resize_conv_forward.1} parent=23 // pred_fallthru
        _
      // Predicated region
      $region29: #{resize_conv_forward.1} parent=23 // pred_check
        %p232 = pneg %p81
      $region30: #{resize_conv_forward.1} parent=23 // pred_check_branch
        %234 = sbr.rel (%p232) target = $region32
      $region31: #{resize_conv_forward.1} parent=23 // pred_region
        %s235 = sadd.s32 %s19, 1
        %s236 = smul.u32 4, %s235
        %s237 = ssub.s32 13, %s236
        %p238 = scmp.lt.s32.totalorder %s237, 4
        %s239 = scalar_select %p238, %s237, 4
        %s240 = smul.u32 64, %s239
        %s241 = smul.u32 %s240, 10
        %s242 = smul.u32 %s241, 2
        %p243 = scmp.lt.s32.totalorder %s18, 1
        %s244 = scalar_select %p243, %s18, 1
        %p245 = scmp.lt.s32.totalorder %s236, 12
        %s246 = scalar_select %p245, %s236, 12
        %s247 = smul.addr %s246, 20
        %s248 = smul.addr %s244, 260
        %s249 = sadd.s32 %s247, %s248
        %s250 = smul.addr %s249, 4
        %s251 = scalar_lea.vmem %s1, %s250
        %s252 = sadd.s32 %s19, 1
        %s253 = smul.u32 4, %s252
        %s254 = ssub.s32 13, %s253
        %p255 = scmp.lt.s32.totalorder %s254, 4
        %s256 = scalar_select %p255, %s254, 4
        %s257 = smul.u32 64, %s256
        %s258 = smul.u32 %s257, 10
        %s259 = smul.u32 %s258, 2
      $region32: #{resize_conv_forward.1} parent=23 // pred_fallthru
        _
      // Predicated region
      $region33: #{resize_conv_forward.1} parent=23 // pred_check
        %p260 = pneg %p113
      $region34: #{resize_conv_forward.1} parent=23 // pred_check_branch
        %262 = sbr.rel (%p260) target = $region36
      $region35: #{resize_conv_forward.1} parent=23 // pred_region
        %s263 = sadd.s32 %s19, 2
        %s264 = smul.u32 %s263, 4
        %p265 = scmp.lt.s32.totalorder %s18, 1
        %s266 = scalar_select %p265, %s18, 1
        %p267 = scmp.lt.s32.totalorder %s264, 12
        %s268 = scalar_select %p267, %s264, 12
        %s269 = smul.addr %s268, 20
        %s270 = smul.addr %s266, 260
        %s271 = sadd.s32 %s269, %s270
        %s272 = smul.addr %s271, 4
        %s273 = scalar_lea.vmem %s2, %s272
        %s274 = sadd.s32 %s19, 2
        %s275 = smul.u32 %s274, 4
      $region36: #{resize_conv_forward.1} parent=23 // pred_fallthru
        _
    $region24: #{resize_conv_forward.1} parent=5 // pred_fallthru
      _
    %p276 = scmp.le.s32.totalorder 1, %s11
    %p277 = scmp.lt.s32.totalorder %s11, 5
    %p278 = pnand %p276, %p277
    %p279 = pneg %p278
    // Predicated region
    $region37: #{resize_conv_forward.1} parent=5 // pred_check
      _
    $region38: #{resize_conv_forward.1} parent=5 // pred_check_branch
      %281 = sbr.rel (%p278) target = $region40
    $region39: #{resize_conv_forward.1} parent=5 // pred_region
      %s282 = ssub.s32 %s11, 1
      %s283 = sadd.s32 %s21, 1
      %s284 = smul.u32 %s283, 4
      %s285 = ssub.s32 %s284, 1
      %p286 = scmp.lt.s32.totalorder %s20, 1
      %s287 = scalar_select %p286, %s20, 1
      %p288 = scmp.lt.s32.totalorder %s285, 12
      %s289 = scalar_select %p288, %s285, 12
      %s290 = smul.addr %s289, 20
      %s291 = smul.addr %s287, 260
      %s292 = sadd.s32 %s290, %s291
      %s293 = smul.addr %s292, 4
      %s294 = scalar_lea.vmem %s0, %s293
      %p295 = pneg %p57
      %p296 = pneg %p54
      %s297 = sadd.s32 %s21, 1
      %s298 = smul.u32 4, %s297
      %s299 = ssub.s32 13, %s298
      %p300 = scmp.lt.s32.totalorder %s299, 4
      %s301 = scalar_select %p300, %s299, 4
      %s302 = smul.u32 64, %s301
      %s303 = smul.u32 %s302, 10
      %s304 = smul.u32 %s303, 2
      %p305 = scmp.lt.s32.totalorder %s20, 1
      %s306 = scalar_select %p305, %s20, 1
      %p307 = scmp.lt.s32.totalorder %s298, 12
      %s308 = scalar_select %p307, %s298, 12
      %s309 = smul.addr %s308, 20
      %s310 = smul.addr %s306, 260
      %s311 = sadd.s32 %s309, %s310
      %s312 = smul.addr %s311, 4
      %s313 = scalar_lea.vmem %s1, %s312
      %p314 = pneg %p87
      %p315 = pneg %p84
      %s316 = sadd.s32 %s21, 2
      %s317 = smul.u32 %s316, 4
      %p318 = scmp.lt.s32.totalorder %s20, 1
      %s319 = scalar_select %p318, %s20, 1
      %p320 = scmp.lt.s32.totalorder %s317, 12
      %s321 = scalar_select %p320, %s317, 12
      %s322 = smul.addr %s321, 20
      %s323 = smul.addr %s319, 260
      %s324 = sadd.s32 %s322, %s323
      %s325 = smul.addr %s324, 4
      %s326 = scalar_lea.vmem %s2, %s325
      %p327 = pneg %p119
      %p328 = pneg %p116
      %p329 = pneg %p140
      %p330 = pneg %p137
      %p331 = pneg %p161
      %p332 = pneg %p158
      %p333 = pneg %p189
      %p334 = pneg %p186
      %s335 = smul.u32 4, %s21
      %p336 = scmp.lt.s32.totalorder %s20, 1
      %s337 = scalar_select %p336, %s20, 1
      %p338 = scmp.lt.s32.totalorder %s335, 7
      %s339 = scalar_select %p338, %s335, 7
      %s340 = smul.addr %s339, 8
      %s341 = smul.addr %s337, 64
      %s342 = sadd.s32 %s340, %s341
      %s343 = smul.addr %s342, 4
      %s344 = scalar_lea.vmem %s5, %s343
      %s345 = sadd.s32 %s21, 1
      %s346 = smul.u32 %s345, 4
      %s347 = ssub.s32 %s346, 1
      %p348 = scmp.lt.s32.totalorder %s20, 1
      %s349 = scalar_select %p348, %s20, 1
      %p350 = scmp.lt.s32.totalorder %s347, 12
      %s351 = scalar_select %p350, %s347, 12
      %s352 = smul.addr %s351, 20
      %s353 = smul.addr %s349, 260
      %s354 = sadd.s32 %s352, %s353
      %s355 = smul.addr %s354, 4
      %s356 = scalar_lea.vmem %s0, %s355
      %s357 = sadd.s32 %s21, 1
      %s358 = smul.u32 %s357, 4
      %s359 = ssub.s32 %s358, 1
      %s360 = sadd.s32 %s21, 1
      %s361 = smul.u32 4, %s360
      %s362 = ssub.s32 13, %s361
      %p363 = scmp.lt.s32.totalorder %s362, 4
      %s364 = scalar_select %p363, %s362, 4
      %s365 = smul.u32 64, %s364
      %s366 = smul.u32 %s365, 10
      %s367 = smul.u32 %s366, 2
      %p368 = scmp.lt.s32.totalorder %s20, 1
      %s369 = scalar_select %p368, %s20, 1
      %p370 = scmp.lt.s32.totalorder %s361, 12
      %s371 = scalar_select %p370, %s361, 12
      %s372 = smul.addr %s371, 20
      %s373 = smul.addr %s369, 260
      %s374 = sadd.s32 %s372, %s373
      %s375 = smul.addr %s374, 4
      %s376 = scalar_lea.vmem %s1, %s375
      %s377 = sadd.s32 %s21, 1
      %s378 = smul.u32 4, %s377
      %s379 = ssub.s32 13, %s378
      %p380 = scmp.lt.s32.totalorder %s379, 4
      %s381 = scalar_select %p380, %s379, 4
      %s382 = smul.u32 64, %s381
      %s383 = smul.u32 %s382, 10
      %s384 = smul.u32 %s383, 2
      %s385 = sadd.s32 %s21, 2
      %s386 = smul.u32 %s385, 4
      %p387 = scmp.lt.s32.totalorder %s20, 1
      %s388 = scalar_select %p387, %s20, 1
      %p389 = scmp.lt.s32.totalorder %s386, 12
      %s390 = scalar_select %p389, %s386, 12
      %s391 = smul.addr %s390, 20
      %s392 = smul.addr %s388, 260
      %s393 = sadd.s32 %s391, %s392
      %s394 = smul.addr %s393, 4
      %s395 = scalar_lea.vmem %s2, %s394
      %s396 = sadd.s32 %s21, 2
      %s397 = smul.u32 %s396, 4
      %s398 = smul.u32 4, %s21
      %p399 = scmp.lt.s32.totalorder %s20, 1
      %s400 = scalar_select %p399, %s20, 1
      %p401 = scmp.lt.s32.totalorder %s398, 7
      %s402 = scalar_select %p401, %s398, 7
      %s403 = smul.addr %s402, 8
      %s404 = smul.addr %s400, 64
      %s405 = sadd.s32 %s403, %s404
      %s406 = smul.addr %s405, 4
      %s407 = scalar_lea.vmem %s5, %s406
      %s408 = smul.u32 4, %s21
      %v410 = vld [vmem:[%s356] sm:$0xf]
      %v411 = vld [vmem:[%s356 + $0x4] sm:$0x1]
      %v412 = vld [vmem:[%s356 + $0x8] sm:$0xf]
      %v413 = vld [vmem:[%s356 + $0xc] sm:$0x1]
      %v414 = vld [vmem:[%s356 + $0x10] sm:$0xf]
      %v415 = vld [vmem:[%s356 + $0x14] sm:$0x1]
      %v416 = vld [vmem:[%s356 + $0x18] sm:$0xf]
      %v417 = vld [vmem:[%s356 + $0x1c] sm:$0x1]
      %v418 = vld [vmem:[%s356 + $0x20] sm:$0xf]
      %v419 = vld [vmem:[%s356 + $0x24] sm:$0x1]
      %v420 = vld [vmem:[%s356 + $0x28] sm:$0xf]
      %v421 = vld [vmem:[%s356 + $0x2c] sm:$0x1]
      %v422 = vld [vmem:[%s356 + $0x30] sm:$0xf]
      %v423 = vld [vmem:[%s356 + $0x34] sm:$0x1]
      %v424 = vld [vmem:[%s356 + $0x38] sm:$0xf]
      %v425 = vld [vmem:[%s356 + $0x3c] sm:$0x1]
      %v426 = vld [vmem:[%s356 + $0x40] sm:$0xf]
      %v427 = vld [vmem:[%s356 + $0x44] sm:$0x1]
      %v428 = vld [vmem:[%s356 + $0x48] sm:$0xf]
      %v429 = vld [vmem:[%s356 + $0x4c] sm:$0x1]
      %v430 = vld [vmem:[%s376] sm:$0xf]
      %v431 = vld [vmem:[%s376 + $0x4] sm:$0x1]
      %v432 = vld [vmem:[%s376 + $0x8] sm:$0xf]
      %v433 = vld [vmem:[%s376 + $0xc] sm:$0x1]
      %v434 = vld [vmem:[%s376 + $0x10] sm:$0xf]
      %v435 = vld [vmem:[%s376 + $0x14] sm:$0x1]
      %v436 = vld [vmem:[%s376 + $0x18] sm:$0xf]
      %v437 = vld [vmem:[%s376 + $0x1c] sm:$0x1]
      %v438 = vld [vmem:[%s376 + $0x20] sm:$0xf]
      %v439 = vld [vmem:[%s376 + $0x24] sm:$0x1]
      %v440 = vld [vmem:[%s376 + $0x28] sm:$0xf]
      %v441 = vld [vmem:[%s376 + $0x2c] sm:$0x1]
      %v442 = vld [vmem:[%s376 + $0x30] sm:$0xf]
      %v443 = vld [vmem:[%s376 + $0x34] sm:$0x1]
      %v444 = vld [vmem:[%s376 + $0x38] sm:$0xf]
      %v445 = vld [vmem:[%s376 + $0x3c] sm:$0x1]
      %v446 = vld [vmem:[%s376 + $0x40] sm:$0xf]
      %v447 = vld [vmem:[%s376 + $0x44] sm:$0x1]
      %v448 = vld [vmem:[%s376 + $0x48] sm:$0xf]
      %v449 = vld [vmem:[%s376 + $0x4c] sm:$0x1]
      %v450 = vld [vmem:[%s376 + $0x50] sm:$0xf]
      %v451 = vld [vmem:[%s376 + $0x54] sm:$0x1]
      %v452 = vld [vmem:[%s376 + $0x58] sm:$0xf]
      %v453 = vld [vmem:[%s376 + $0x5c] sm:$0x1]
      %v454 = vld [vmem:[%s376 + $0x60] sm:$0xf]
      %v455 = vld [vmem:[%s376 + $0x64] sm:$0x1]
      %v456 = vld [vmem:[%s376 + $0x68] sm:$0xf]
      %v457 = vld [vmem:[%s376 + $0x6c] sm:$0x1]
      %v458 = vld [vmem:[%s376 + $0x70] sm:$0xf]
      %v459 = vld [vmem:[%s376 + $0x74] sm:$0x1]
      %v460 = vld [vmem:[%s376 + $0x78] sm:$0xf]
      %v461 = vld [vmem:[%s376 + $0x7c] sm:$0x1]
      %v462 = vld [vmem:[%s376 + $0x80] sm:$0xf]
      %v463 = vld [vmem:[%s376 + $0x84] sm:$0x1]
      %v464 = vld [vmem:[%s376 + $0x88] sm:$0xf]
      %v465 = vld [vmem:[%s376 + $0x8c] sm:$0x1]
      %v466 = vld [vmem:[%s376 + $0x90] sm:$0xf]
      %v467 = vld [vmem:[%s376 + $0x94] sm:$0x1]
      %v468 = vld [vmem:[%s376 + $0x98] sm:$0xf]
      %v469 = vld [vmem:[%s376 + $0x9c] sm:$0x1]
      %v470 = vld [vmem:[%s376 + $0xa0] sm:$0xf]
      %v471 = vld [vmem:[%s376 + $0xa4] sm:$0x1]
      %v472 = vld [vmem:[%s376 + $0xa8] sm:$0xf]
      %v473 = vld [vmem:[%s376 + $0xac] sm:$0x1]
      %v474 = vld [vmem:[%s376 + $0xb0] sm:$0xf]
      %v475 = vld [vmem:[%s376 + $0xb4] sm:$0x1]
      %v476 = vld [vmem:[%s376 + $0xb8] sm:$0xf]
      %v477 = vld [vmem:[%s376 + $0xbc] sm:$0x1]
      %v478 = vld [vmem:[%s376 + $0xc0] sm:$0xf]
      %v479 = vld [vmem:[%s376 + $0xc4] sm:$0x1]
      %v480 = vld [vmem:[%s376 + $0xc8] sm:$0xf]
      %v481 = vld [vmem:[%s376 + $0xcc] sm:$0x1]
      %v482 = vld [vmem:[%s376 + $0xd0] sm:$0xf]
      %v483 = vld [vmem:[%s376 + $0xd4] sm:$0x1]
      %v484 = vld [vmem:[%s376 + $0xd8] sm:$0xf]
      %v485 = vld [vmem:[%s376 + $0xdc] sm:$0x1]
      %v486 = vld [vmem:[%s376 + $0xe0] sm:$0xf]
      %v487 = vld [vmem:[%s376 + $0xe4] sm:$0x1]
      %v488 = vld [vmem:[%s376 + $0xe8] sm:$0xf]
      %v489 = vld [vmem:[%s376 + $0xec] sm:$0x1]
      %v490 = vld [vmem:[%s376 + $0xf0] sm:$0xf]
      %v491 = vld [vmem:[%s376 + $0xf4] sm:$0x1]
      %v492 = vld [vmem:[%s376 + $0xf8] sm:$0xf]
      %v493 = vld [vmem:[%s376 + $0xfc] sm:$0x1]
      %v494 = vld [vmem:[%s376 + $0x100] sm:$0xf]
      %v495 = vld [vmem:[%s376 + $0x104] sm:$0x1]
      %v496 = vld [vmem:[%s376 + $0x108] sm:$0xf]
      %v497 = vld [vmem:[%s376 + $0x10c] sm:$0x1]
      %v498 = vld [vmem:[%s376 + $0x110] sm:$0xf]
      %v499 = vld [vmem:[%s376 + $0x114] sm:$0x1]
      %v500 = vld [vmem:[%s376 + $0x118] sm:$0xf]
      %v501 = vld [vmem:[%s376 + $0x11c] sm:$0x1]
      %v502 = vld [vmem:[%s376 + $0x120] sm:$0xf]
      %v503 = vld [vmem:[%s376 + $0x124] sm:$0x1]
      %v504 = vld [vmem:[%s376 + $0x128] sm:$0xf]
      %v505 = vld [vmem:[%s376 + $0x12c] sm:$0x1]
      %v506 = vld [vmem:[%s376 + $0x130] sm:$0xf]
      %v507 = vld [vmem:[%s376 + $0x134] sm:$0x1]
      %v508 = vld [vmem:[%s376 + $0x138] sm:$0xf]
      %v509 = vld [vmem:[%s376 + $0x13c] sm:$0x1]
      %v510 = vld [vmem:[%s395] sm:$0xf]
      %v511 = vld [vmem:[%s395 + $0x4] sm:$0x1]
      %v512 = vld [vmem:[%s395 + $0x8] sm:$0xf]
      %v513 = vld [vmem:[%s395 + $0xc] sm:$0x1]
      %v514 = vld [vmem:[%s395 + $0x10] sm:$0xf]
      %v515 = vld [vmem:[%s395 + $0x14] sm:$0x1]
      %v516 = vld [vmem:[%s395 + $0x18] sm:$0xf]
      %v517 = vld [vmem:[%s395 + $0x1c] sm:$0x1]
      %v518 = vld [vmem:[%s395 + $0x20] sm:$0xf]
      %v519 = vld [vmem:[%s395 + $0x24] sm:$0x1]
      %v520 = vld [vmem:[%s395 + $0x28] sm:$0xf]
      %v521 = vld [vmem:[%s395 + $0x2c] sm:$0x1]
      %v522 = vld [vmem:[%s395 + $0x30] sm:$0xf]
      %v523 = vld [vmem:[%s395 + $0x34] sm:$0x1]
      %v524 = vld [vmem:[%s395 + $0x38] sm:$0xf]
      %v525 = vld [vmem:[%s395 + $0x3c] sm:$0x1]
      %v526 = vld [vmem:[%s395 + $0x40] sm:$0xf]
      %v527 = vld [vmem:[%s395 + $0x44] sm:$0x1]
      %v528 = vld [vmem:[%s395 + $0x48] sm:$0xf]
      %v529 = vld [vmem:[%s395 + $0x4c] sm:$0x1]
      %vm530 = vsmask.f32 3328
      %vm531 = vsmask.f32 7440
      %vm532 = vmor %vm530, %vm531
      %v534 = vshrl.u32 %v410, 16
      %v536 = vrot.slane %v534, 4
      %v537 = vshll.u32 %v410, 16
      %v539 = vrot.slane %v537, 5
      %v540 = vor.u32 %v536, %v539
      %v541 = vrot.slane %v540, 4
      %v543 = vshll.u32 %v411, 16
      %v545 = vrot.slane %v543, 5
      %v546 = vsel %vm532, %v541, %v545
      %v548 = vshrl.u32 %v412, 16
      %v550 = vrot.slane %v548, 4
      %v551 = vshll.u32 %v412, 16
      %v553 = vrot.slane %v551, 5
      %v554 = vor.u32 %v550, %v553
      %v555 = vrot.slane %v554, 4
      %v557 = vshll.u32 %v413, 16
      %v559 = vrot.slane %v557, 5
      %v560 = vsel %vm532, %v555, %v559
      %v562 = vshrl.u32 %v414, 16
      %v564 = vrot.slane %v562, 4
      %v565 = vshll.u32 %v414, 16
      %v567 = vrot.slane %v565, 5
      %v568 = vor.u32 %v564, %v567
      %v569 = vrot.slane %v568, 4
      %v571 = vshll.u32 %v415, 16
      %v573 = vrot.slane %v571, 5
      %v574 = vsel %vm532, %v569, %v573
      %v576 = vshrl.u32 %v416, 16
      %v578 = vrot.slane %v576, 4
      %v579 = vshll.u32 %v416, 16
      %v581 = vrot.slane %v579, 5
      %v582 = vor.u32 %v578, %v581
      %v583 = vrot.slane %v582, 4
      %v585 = vshll.u32 %v417, 16
      %v587 = vrot.slane %v585, 5
      %v588 = vsel %vm532, %v583, %v587
      %v590 = vshrl.u32 %v418, 16
      %v592 = vrot.slane %v590, 4
      %v593 = vshll.u32 %v418, 16
      %v595 = vrot.slane %v593, 5
      %v596 = vor.u32 %v592, %v595
      %v597 = vrot.slane %v596, 4
      %v599 = vshll.u32 %v419, 16
      %v601 = vrot.slane %v599, 5
      %v602 = vsel %vm532, %v597, %v601
      %v604 = vshrl.u32 %v420, 16
      %v606 = vrot.slane %v604, 4
      %v607 = vshll.u32 %v420, 16
      %v609 = vrot.slane %v607, 5
      %v610 = vor.u32 %v606, %v609
      %v611 = vrot.slane %v610, 4
      %v613 = vshll.u32 %v421, 16
      %v615 = vrot.slane %v613, 5
      %v616 = vsel %vm532, %v611, %v615
      %v618 = vshrl.u32 %v422, 16
      %v620 = vrot.slane %v618, 4
      %v621 = vshll.u32 %v422, 16
      %v623 = vrot.slane %v621, 5
      %v624 = vor.u32 %v620, %v623
      %v625 = vrot.slane %v624, 4
      %v627 = vshll.u32 %v423, 16
      %v629 = vrot.slane %v627, 5
      %v630 = vsel %vm532, %v625, %v629
      %v632 = vshrl.u32 %v424, 16
      %v634 = vrot.slane %v632, 4
      %v635 = vshll.u32 %v424, 16
      %v637 = vrot.slane %v635, 5
      %v638 = vor.u32 %v634, %v637
      %v639 = vrot.slane %v638, 4
      %v641 = vshll.u32 %v425, 16
      %v643 = vrot.slane %v641, 5
      %v644 = vsel %vm532, %v639, %v643
      %v646 = vshrl.u32 %v430, 16
      %v648 = vrot.slane %v646, 4
      %v649 = vshll.u32 %v430, 16
      %v651 = vrot.slane %v649, 5
      %v652 = vor.u32 %v648, %v651
      %v653 = vrot.slane %v652, 4
      %v655 = vshll.u32 %v431, 16
      %v657 = vrot.slane %v655, 5
      %v658 = vsel %vm532, %v653, %v657
      %v660 = vshrl.u32 %v432, 16
      %v662 = vrot.slane %v660, 4
      %v663 = vshll.u32 %v432, 16
      %v665 = vrot.slane %v663, 5
      %v666 = vor.u32 %v662, %v665
      %v667 = vrot.slane %v666, 4
      %v669 = vshll.u32 %v433, 16
      %v671 = vrot.slane %v669, 5
      %v672 = vsel %vm532, %v667, %v671
      %v674 = vshrl.u32 %v434, 16
      %v676 = vrot.slane %v674, 4
      %v677 = vshll.u32 %v434, 16
      %v679 = vrot.slane %v677, 5
      %v680 = vor.u32 %v676, %v679
      %v681 = vrot.slane %v680, 4
      %v683 = vshll.u32 %v435, 16
      %v685 = vrot.slane %v683, 5
      %v686 = vsel %vm532, %v681, %v685
      %v688 = vshrl.u32 %v436, 16
      %v690 = vrot.slane %v688, 4
      %v691 = vshll.u32 %v436, 16
      %v693 = vrot.slane %v691, 5
      %v694 = vor.u32 %v690, %v693
      %v695 = vrot.slane %v694, 4
      %v697 = vshll.u32 %v437, 16
      %v699 = vrot.slane %v697, 5
      %v700 = vsel %vm532, %v695, %v699
      %v702 = vshrl.u32 %v438, 16
      %v704 = vrot.slane %v702, 4
      %v705 = vshll.u32 %v438, 16
      %v707 = vrot.slane %v705, 5
      %v708 = vor.u32 %v704, %v707
      %v709 = vrot.slane %v708, 4
      %v711 = vshll.u32 %v439, 16
      %v713 = vrot.slane %v711, 5
      %v714 = vsel %vm532, %v709, %v713
      %v716 = vshrl.u32 %v440, 16
      %v718 = vrot.slane %v716, 4
      %v719 = vshll.u32 %v440, 16
      %v721 = vrot.slane %v719, 5
      %v722 = vor.u32 %v718, %v721
      %v723 = vrot.slane %v722, 4
      %v725 = vshll.u32 %v441, 16
      %v727 = vrot.slane %v725, 5
      %v728 = vsel %vm532, %v723, %v727
      %v730 = vshrl.u32 %v442, 16
      %v732 = vrot.slane %v730, 4
      %v733 = vshll.u32 %v442, 16
      %v735 = vrot.slane %v733, 5
      %v736 = vor.u32 %v732, %v735
      %v737 = vrot.slane %v736, 4
      %v739 = vshll.u32 %v443, 16
      %v741 = vrot.slane %v739, 5
      %v742 = vsel %vm532, %v737, %v741
      %v744 = vshrl.u32 %v444, 16
      %v746 = vrot.slane %v744, 4
      %v747 = vshll.u32 %v444, 16
      %v749 = vrot.slane %v747, 5
      %v750 = vor.u32 %v746, %v749
      %v751 = vrot.slane %v750, 4
      %v753 = vshll.u32 %v445, 16
      %v755 = vrot.slane %v753, 5
      %v756 = vsel %vm532, %v751, %v755
      %v758 = vshrl.u32 %v450, 16
      %v760 = vrot.slane %v758, 4
      %v761 = vshll.u32 %v450, 16
      %v763 = vrot.slane %v761, 5
      %v764 = vor.u32 %v760, %v763
      %v765 = vrot.slane %v764, 4
      %v767 = vshll.u32 %v451, 16
      %v769 = vrot.slane %v767, 5
      %v770 = vsel %vm532, %v765, %v769
      %v772 = vshrl.u32 %v452, 16
      %v774 = vrot.slane %v772, 4
      %v775 = vshll.u32 %v452, 16
      %v777 = vrot.slane %v775, 5
      %v778 = vor.u32 %v774, %v777
      %v779 = vrot.slane %v778, 4
      %v781 = vshll.u32 %v453, 16
      %v783 = vrot.slane %v781, 5
      %v784 = vsel %vm532, %v779, %v783
      %v786 = vshrl.u32 %v454, 16
      %v788 = vrot.slane %v786, 4
      %v789 = vshll.u32 %v454, 16
      %v791 = vrot.slane %v789, 5
      %v792 = vor.u32 %v788, %v791
      %v793 = vrot.slane %v792, 4
      %v795 = vshll.u32 %v455, 16
      %v797 = vrot.slane %v795, 5
      %v798 = vsel %vm532, %v793, %v797
      %v800 = vshrl.u32 %v456, 16
      %v802 = vrot.slane %v800, 4
      %v803 = vshll.u32 %v456, 16
      %v805 = vrot.slane %v803, 5
      %v806 = vor.u32 %v802, %v805
      %v807 = vrot.slane %v806, 4
      %v809 = vshll.u32 %v457, 16
      %v811 = vrot.slane %v809, 5
      %v812 = vsel %vm532, %v807, %v811
      %v814 = vshrl.u32 %v458, 16
      %v816 = vrot.slane %v814, 4
      %v817 = vshll.u32 %v458, 16
      %v819 = vrot.slane %v817, 5
      %v820 = vor.u32 %v816, %v819
      %v821 = vrot.slane %v820, 4
      %v823 = vshll.u32 %v459, 16
      %v825 = vrot.slane %v823, 5
      %v826 = vsel %vm532, %v821, %v825
      %v828 = vshrl.u32 %v460, 16
      %v830 = vrot.slane %v828, 4
      %v831 = vshll.u32 %v460, 16
      %v833 = vrot.slane %v831, 5
      %v834 = vor.u32 %v830, %v833
      %v835 = vrot.slane %v834, 4
      %v837 = vshll.u32 %v461, 16
      %v839 = vrot.slane %v837, 5
      %v840 = vsel %vm532, %v835, %v839
      %v842 = vshrl.u32 %v462, 16
      %v844 = vrot.slane %v842, 4
      %v845 = vshll.u32 %v462, 16
      %v847 = vrot.slane %v845, 5
      %v848 = vor.u32 %v844, %v847
      %v849 = vrot.slane %v848, 4
      %v851 = vshll.u32 %v463, 16
      %v853 = vrot.slane %v851, 5
      %v854 = vsel %vm532, %v849, %v853
      %v856 = vshrl.u32 %v464, 16
      %v858 = vrot.slane %v856, 4
      %v859 = vshll.u32 %v464, 16
      %v861 = vrot.slane %v859, 5
      %v862 = vor.u32 %v858, %v861
      %v863 = vrot.slane %v862, 4
      %v865 = vshll.u32 %v465, 16
      %v867 = vrot.slane %v865, 5
      %v868 = vsel %vm532, %v863, %v867
      %v870 = vshrl.u32 %v470, 16
      %v872 = vrot.slane %v870, 4
      %v873 = vshll.u32 %v470, 16
      %v875 = vrot.slane %v873, 5
      %v876 = vor.u32 %v872, %v875
      %v877 = vrot.slane %v876, 4
      %v879 = vshll.u32 %v471, 16
      %v881 = vrot.slane %v879, 5
      %v882 = vsel %vm532, %v877, %v881
      %v884 = vshrl.u32 %v472, 16
      %v886 = vrot.slane %v884, 4
      %v887 = vshll.u32 %v472, 16
      %v889 = vrot.slane %v887, 5
      %v890 = vor.u32 %v886, %v889
      %v891 = vrot.slane %v890, 4
      %v893 = vshll.u32 %v473, 16
      %v895 = vrot.slane %v893, 5
      %v896 = vsel %vm532, %v891, %v895
      %v898 = vshrl.u32 %v474, 16
      %v900 = vrot.slane %v898, 4
      %v901 = vshll.u32 %v474, 16
      %v903 = vrot.slane %v901, 5
      %v904 = vor.u32 %v900, %v903
      %v905 = vrot.slane %v904, 4
      %v907 = vshll.u32 %v475, 16
      %v909 = vrot.slane %v907, 5
      %v910 = vsel %vm532, %v905, %v909
      %v912 = vshrl.u32 %v476, 16
      %v914 = vrot.slane %v912, 4
      %v915 = vshll.u32 %v476, 16
      %v917 = vrot.slane %v915, 5
      %v918 = vor.u32 %v914, %v917
      %v919 = vrot.slane %v918, 4
      %v921 = vshll.u32 %v477, 16
      %v923 = vrot.slane %v921, 5
      %v924 = vsel %vm532, %v919, %v923
      %v926 = vshrl.u32 %v478, 16
      %v928 = vrot.slane %v926, 4
      %v929 = vshll.u32 %v478, 16
      %v931 = vrot.slane %v929, 5
      %v932 = vor.u32 %v928, %v931
      %v933 = vrot.slane %v932, 4
      %v935 = vshll.u32 %v479, 16
      %v937 = vrot.slane %v935, 5
      %v938 = vsel %vm532, %v933, %v937
      %v940 = vshrl.u32 %v480, 16
      %v942 = vrot.slane %v940, 4
      %v943 = vshll.u32 %v480, 16
      %v945 = vrot.slane %v943, 5
      %v946 = vor.u32 %v942, %v945
      %v947 = vrot.slane %v946, 4
      %v949 = vshll.u32 %v481, 16
      %v951 = vrot.slane %v949, 5
      %v952 = vsel %vm532, %v947, %v951
      %v954 = vshrl.u32 %v482, 16
      %v956 = vrot.slane %v954, 4
      %v957 = vshll.u32 %v482, 16
      %v959 = vrot.slane %v957, 5
      %v960 = vor.u32 %v956, %v959
      %v961 = vrot.slane %v960, 4
      %v963 = vshll.u32 %v483, 16
      %v965 = vrot.slane %v963, 5
      %v966 = vsel %vm532, %v961, %v965
      %v968 = vshrl.u32 %v484, 16
      %v970 = vrot.slane %v968, 4
      %v971 = vshll.u32 %v484, 16
      %v973 = vrot.slane %v971, 5
      %v974 = vor.u32 %v970, %v973
      %v975 = vrot.slane %v974, 4
      %v977 = vshll.u32 %v485, 16
      %v979 = vrot.slane %v977, 5
      %v980 = vsel %vm532, %v975, %v979
      %vm1045 = vcmask 1042432
      %vm1046 = vcmask 1046532
      %vm1047 = vmor %vm1045, %vm1046
      %v1048 = vrot.slane %v410, 5
      %v1049 = vrot.slane %v1048, 4
      %v1050 = vrot.slane %v411, 5
      %v1051 = vsel %vm1047, %v1049, %v1050
      %v1052 = vrot.slane %v412, 5
      %v1053 = vrot.slane %v1052, 4
      %v1054 = vrot.slane %v413, 5
      %v1055 = vsel %vm1047, %v1053, %v1054
      %v1056 = vrot.slane %v414, 5
      %v1057 = vrot.slane %v1056, 4
      %v1058 = vrot.slane %v415, 5
      %v1059 = vsel %vm1047, %v1057, %v1058
      %v1060 = vrot.slane %v416, 5
      %v1061 = vrot.slane %v1060, 4
      %v1062 = vrot.slane %v417, 5
      %v1063 = vsel %vm1047, %v1061, %v1062
      %v1064 = vrot.slane %v418, 5
      %v1065 = vrot.slane %v1064, 4
      %v1066 = vrot.slane %v419, 5
      %v1067 = vsel %vm1047, %v1065, %v1066
      %v1068 = vrot.slane %v420, 5
      %v1069 = vrot.slane %v1068, 4
      %v1070 = vrot.slane %v421, 5
      %v1071 = vsel %vm1047, %v1069, %v1070
      %v1072 = vrot.slane %v422, 5
      %v1073 = vrot.slane %v1072, 4
      %v1074 = vrot.slane %v423, 5
      %v1075 = vsel %vm1047, %v1073, %v1074
      %v1076 = vrot.slane %v424, 5
      %v1077 = vrot.slane %v1076, 4
      %v1078 = vrot.slane %v425, 5
      %v1079 = vsel %vm1047, %v1077, %v1078
      %v1080 = vrot.slane %v430, 5
      %v1081 = vrot.slane %v1080, 4
      %v1082 = vrot.slane %v431, 5
      %v1083 = vsel %vm1047, %v1081, %v1082
      %v1084 = vrot.slane %v432, 5
      %v1085 = vrot.slane %v1084, 4
      %v1086 = vrot.slane %v433, 5
      %v1087 = vsel %vm1047, %v1085, %v1086
      %v1088 = vrot.slane %v434, 5
      %v1089 = vrot.slane %v1088, 4
      %v1090 = vrot.slane %v435, 5
      %v1091 = vsel %vm1047, %v1089, %v1090
      %v1092 = vrot.slane %v436, 5
      %v1093 = vrot.slane %v1092, 4
      %v1094 = vrot.slane %v437, 5
      %v1095 = vsel %vm1047, %v1093, %v1094
      %v1096 = vrot.slane %v438, 5
      %v1097 = vrot.slane %v1096, 4
      %v1098 = vrot.slane %v439, 5
      %v1099 = vsel %vm1047, %v1097, %v1098
      %v1100 = vrot.slane %v440, 5
      %v1101 = vrot.slane %v1100, 4
      %v1102 = vrot.slane %v441, 5
      %v1103 = vsel %vm1047, %v1101, %v1102
      %v1104 = vrot.slane %v442, 5
      %v1105 = vrot.slane %v1104, 4
      %v1106 = vrot.slane %v443, 5
      %v1107 = vsel %vm1047, %v1105, %v1106
      %v1108 = vrot.slane %v444, 5
      %v1109 = vrot.slane %v1108, 4
      %v1110 = vrot.slane %v445, 5
      %v1111 = vsel %vm1047, %v1109, %v1110
      %v1112 = vrot.slane %v450, 5
      %v1113 = vrot.slane %v1112, 4
      %v1114 = vrot.slane %v451, 5
      %v1115 = vsel %vm1047, %v1113, %v1114
      %v1116 = vrot.slane %v452, 5
      %v1117 = vrot.slane %v1116, 4
      %v1118 = vrot.slane %v453, 5
      %v1119 = vsel %vm1047, %v1117, %v1118
      %v1120 = vrot.slane %v454, 5
      %v1121 = vrot.slane %v1120, 4
      %v1122 = vrot.slane %v455, 5
      %v1123 = vsel %vm1047, %v1121, %v1122
      %v1124 = vrot.slane %v456, 5
      %v1125 = vrot.slane %v1124, 4
      %v1126 = vrot.slane %v457, 5
      %v1127 = vsel %vm1047, %v1125, %v1126
      %v1128 = vrot.slane %v458, 5
      %v1129 = vrot.slane %v1128, 4
      %v1130 = vrot.slane %v459, 5
      %v1131 = vsel %vm1047, %v1129, %v1130
      %v1132 = vrot.slane %v460, 5
      %v1133 = vrot.slane %v1132, 4
      %v1134 = vrot.slane %v461, 5
      %v1135 = vsel %vm1047, %v1133, %v1134
      %v1136 = vrot.slane %v462, 5
      %v1137 = vrot.slane %v1136, 4
      %v1138 = vrot.slane %v463, 5
      %v1139 = vsel %vm1047, %v1137, %v1138
      %v1140 = vrot.slane %v464, 5
      %v1141 = vrot.slane %v1140, 4
      %v1142 = vrot.slane %v465, 5
      %v1143 = vsel %vm1047, %v1141, %v1142
      %v1144 = vrot.slane %v470, 5
      %v1145 = vrot.slane %v1144, 4
      %v1146 = vrot.slane %v471, 5
      %v1147 = vsel %vm1047, %v1145, %v1146
      %v1148 = vrot.slane %v472, 5
      %v1149 = vrot.slane %v1148, 4
      %v1150 = vrot.slane %v473, 5
      %v1151 = vsel %vm1047, %v1149, %v1150
      %v1152 = vrot.slane %v474, 5
      %v1153 = vrot.slane %v1152, 4
      %v1154 = vrot.slane %v475, 5
      %v1155 = vsel %vm1047, %v1153, %v1154
      %v1156 = vrot.slane %v476, 5
      %v1157 = vrot.slane %v1156, 4
      %v1158 = vrot.slane %v477, 5
      %v1159 = vsel %vm1047, %v1157, %v1158
      %v1160 = vrot.slane %v478, 5
      %v1161 = vrot.slane %v1160, 4
      %v1162 = vrot.slane %v479, 5
      %v1163 = vsel %vm1047, %v1161, %v1162
      %v1164 = vrot.slane %v480, 5
      %v1165 = vrot.slane %v1164, 4
      %v1166 = vrot.slane %v481, 5
      %v1167 = vsel %vm1047, %v1165, %v1166
      %v1168 = vrot.slane %v482, 5
      %v1169 = vrot.slane %v1168, 4
      %v1170 = vrot.slane %v483, 5
      %v1171 = vsel %vm1047, %v1169, %v1170
      %v1172 = vrot.slane %v484, 5
      %v1173 = vrot.slane %v1172, 4
      %v1174 = vrot.slane %v485, 5
      %v1175 = vsel %vm1047, %v1173, %v1174
      %v1177 = vshrl.u32 %v426, 16
      %v1179 = vrot.slane %v1177, 4
      %v1180 = vshll.u32 %v426, 16
      %v1182 = vrot.slane %v1180, 5
      %v1183 = vor.u32 %v1179, %v1182
      %v1184 = vrot.slane %v1183, 4
      %v1186 = vshll.u32 %v427, 16
      %v1188 = vrot.slane %v1186, 5
      %v1189 = vsel %vm532, %v1184, %v1188
      %v1191 = vshrl.u32 %v446, 16
      %v1193 = vrot.slane %v1191, 4
      %v1194 = vshll.u32 %v446, 16
      %v1196 = vrot.slane %v1194, 5
      %v1197 = vor.u32 %v1193, %v1196
      %v1198 = vrot.slane %v1197, 4
      %v1200 = vshll.u32 %v447, 16
      %v1202 = vrot.slane %v1200, 5
      %v1203 = vsel %vm532, %v1198, %v1202
      %v1205 = vshrl.u32 %v466, 16
      %v1207 = vrot.slane %v1205, 4
      %v1208 = vshll.u32 %v466, 16
      %v1210 = vrot.slane %v1208, 5
      %v1211 = vor.u32 %v1207, %v1210
      %v1212 = vrot.slane %v1211, 4
      %v1214 = vshll.u32 %v467, 16
      %v1216 = vrot.slane %v1214, 5
      %v1217 = vsel %vm532, %v1212, %v1216
      %v1219 = vshrl.u32 %v486, 16
      %v1221 = vrot.slane %v1219, 4
      %v1222 = vshll.u32 %v486, 16
      %v1224 = vrot.slane %v1222, 5
      %v1225 = vor.u32 %v1221, %v1224
      %v1226 = vrot.slane %v1225, 4
      %v1228 = vshll.u32 %v487, 16
      %v1230 = vrot.slane %v1228, 5
      %v1231 = vsel %vm532, %v1226, %v1230
      %v1240 = vrot.slane %v426, 5
      %v1241 = vrot.slane %v1240, 4
      %v1242 = vrot.slane %v427, 5
      %v1243 = vsel %vm1047, %v1241, %v1242
      %v1244 = vrot.slane %v446, 5
      %v1245 = vrot.slane %v1244, 4
      %v1246 = vrot.slane %v447, 5
      %v1247 = vsel %vm1047, %v1245, %v1246
      %v1248 = vrot.slane %v466, 5
      %v1249 = vrot.slane %v1248, 4
      %v1250 = vrot.slane %v467, 5
      %v1251 = vsel %vm1047, %v1249, %v1250
      %v1252 = vrot.slane %v486, 5
      %v1253 = vrot.slane %v1252, 4
      %v1254 = vrot.slane %v487, 5
      %v1255 = vsel %vm1047, %v1253, %v1254
      %v1257 = vshrl.u32 %v428, 16
      %v1259 = vrot.slane %v1257, 4
      %v1260 = vshll.u32 %v428, 16
      %v1262 = vrot.slane %v1260, 5
      %v1263 = vor.u32 %v1259, %v1262
      %v1264 = vrot.slane %v1263, 4
      %v1266 = vshll.u32 %v429, 16
      %v1268 = vrot.slane %v1266, 5
      %v1269 = vsel %vm532, %v1264, %v1268
      %v1271 = vshrl.u32 %v448, 16
      %v1273 = vrot.slane %v1271, 4
      %v1274 = vshll.u32 %v448, 16
      %v1276 = vrot.slane %v1274, 5
      %v1277 = vor.u32 %v1273, %v1276
      %v1278 = vrot.slane %v1277, 4
      %v1280 = vshll.u32 %v449, 16
      %v1282 = vrot.slane %v1280, 5
      %v1283 = vsel %vm532, %v1278, %v1282
      %v1285 = vshrl.u32 %v468, 16
      %v1287 = vrot.slane %v1285, 4
      %v1288 = vshll.u32 %v468, 16
      %v1290 = vrot.slane %v1288, 5
      %v1291 = vor.u32 %v1287, %v1290
      %v1292 = vrot.slane %v1291, 4
      %v1294 = vshll.u32 %v469, 16
      %v1296 = vrot.slane %v1294, 5
      %v1297 = vsel %vm532, %v1292, %v1296
      %v1299 = vshrl.u32 %v488, 16
      %v1301 = vrot.slane %v1299, 4
      %v1302 = vshll.u32 %v488, 16
      %v1304 = vrot.slane %v1302, 5
      %v1305 = vor.u32 %v1301, %v1304
      %v1306 = vrot.slane %v1305, 4
      %v1308 = vshll.u32 %v489, 16
      %v1310 = vrot.slane %v1308, 5
      %v1311 = vsel %vm532, %v1306, %v1310
      %v1320 = vrot.slane %v428, 5
      %v1321 = vrot.slane %v1320, 4
      %v1322 = vrot.slane %v429, 5
      %v1323 = vsel %vm1047, %v1321, %v1322
      %v1324 = vrot.slane %v448, 5
      %v1325 = vrot.slane %v1324, 4
      %v1326 = vrot.slane %v449, 5
      %v1327 = vsel %vm1047, %v1325, %v1326
      %v1328 = vrot.slane %v468, 5
      %v1329 = vrot.slane %v1328, 4
      %v1330 = vrot.slane %v469, 5
      %v1331 = vsel %vm1047, %v1329, %v1330
      %v1332 = vrot.slane %v488, 5
      %v1333 = vrot.slane %v1332, 4
      %v1334 = vrot.slane %v489, 5
      %v1335 = vsel %vm1047, %v1333, %v1334
      %v1337 = vshrl.u32 %v490, 16
      %v1339 = vrot.slane %v1337, 4
      %v1340 = vshll.u32 %v490, 16
      %v1342 = vrot.slane %v1340, 5
      %v1343 = vor.u32 %v1339, %v1342
      %v1344 = vrot.slane %v1343, 4
      %v1346 = vshll.u32 %v491, 16
      %v1348 = vrot.slane %v1346, 5
      %v1349 = vsel %vm532, %v1344, %v1348
      %v1351 = vshrl.u32 %v492, 16
      %v1353 = vrot.slane %v1351, 4
      %v1354 = vshll.u32 %v492, 16
      %v1356 = vrot.slane %v1354, 5
      %v1357 = vor.u32 %v1353, %v1356
      %v1358 = vrot.slane %v1357, 4
      %v1360 = vshll.u32 %v493, 16
      %v1362 = vrot.slane %v1360, 5
      %v1363 = vsel %vm532, %v1358, %v1362
      %v1365 = vshrl.u32 %v494, 16
      %v1367 = vrot.slane %v1365, 4
      %v1368 = vshll.u32 %v494, 16
      %v1370 = vrot.slane %v1368, 5
      %v1371 = vor.u32 %v1367, %v1370
      %v1372 = vrot.slane %v1371, 4
      %v1374 = vshll.u32 %v495, 16
      %v1376 = vrot.slane %v1374, 5
      %v1377 = vsel %vm532, %v1372, %v1376
      %v1379 = vshrl.u32 %v496, 16
      %v1381 = vrot.slane %v1379, 4
      %v1382 = vshll.u32 %v496, 16
      %v1384 = vrot.slane %v1382, 5
      %v1385 = vor.u32 %v1381, %v1384
      %v1386 = vrot.slane %v1385, 4
      %v1388 = vshll.u32 %v497, 16
      %v1390 = vrot.slane %v1388, 5
      %v1391 = vsel %vm532, %v1386, %v1390
      %v1393 = vshrl.u32 %v498, 16
      %v1395 = vrot.slane %v1393, 4
      %v1396 = vshll.u32 %v498, 16
      %v1398 = vrot.slane %v1396, 5
      %v1399 = vor.u32 %v1395, %v1398
      %v1400 = vrot.slane %v1399, 4
      %v1402 = vshll.u32 %v499, 16
      %v1404 = vrot.slane %v1402, 5
      %v1405 = vsel %vm532, %v1400, %v1404
      %v1407 = vshrl.u32 %v500, 16
      %v1409 = vrot.slane %v1407, 4
      %v1410 = vshll.u32 %v500, 16
      %v1412 = vrot.slane %v1410, 5
      %v1413 = vor.u32 %v1409, %v1412
      %v1414 = vrot.slane %v1413, 4
      %v1416 = vshll.u32 %v501, 16
      %v1418 = vrot.slane %v1416, 5
      %v1419 = vsel %vm532, %v1414, %v1418
      %v1421 = vshrl.u32 %v502, 16
      %v1423 = vrot.slane %v1421, 4
      %v1424 = vshll.u32 %v502, 16
      %v1426 = vrot.slane %v1424, 5
      %v1427 = vor.u32 %v1423, %v1426
      %v1428 = vrot.slane %v1427, 4
      %v1430 = vshll.u32 %v503, 16
      %v1432 = vrot.slane %v1430, 5
      %v1433 = vsel %vm532, %v1428, %v1432
      %v1435 = vshrl.u32 %v504, 16
      %v1437 = vrot.slane %v1435, 4
      %v1438 = vshll.u32 %v504, 16
      %v1440 = vrot.slane %v1438, 5
      %v1441 = vor.u32 %v1437, %v1440
      %v1442 = vrot.slane %v1441, 4
      %v1444 = vshll.u32 %v505, 16
      %v1446 = vrot.slane %v1444, 5
      %v1447 = vsel %vm532, %v1442, %v1446
      %v1464 = vrot.slane %v490, 5
      %v1465 = vrot.slane %v1464, 4
      %v1466 = vrot.slane %v491, 5
      %v1467 = vsel %vm1047, %v1465, %v1466
      %v1468 = vrot.slane %v492, 5
      %v1469 = vrot.slane %v1468, 4
      %v1470 = vrot.slane %v493, 5
      %v1471 = vsel %vm1047, %v1469, %v1470
      %v1472 = vrot.slane %v494, 5
      %v1473 = vrot.slane %v1472, 4
      %v1474 = vrot.slane %v495, 5
      %v1475 = vsel %vm1047, %v1473, %v1474
      %v1476 = vrot.slane %v496, 5
      %v1477 = vrot.slane %v1476, 4
      %v1478 = vrot.slane %v497, 5
      %v1479 = vsel %vm1047, %v1477, %v1478
      %v1480 = vrot.slane %v498, 5
      %v1481 = vrot.slane %v1480, 4
      %v1482 = vrot.slane %v499, 5
      %v1483 = vsel %vm1047, %v1481, %v1482
      %v1484 = vrot.slane %v500, 5
      %v1485 = vrot.slane %v1484, 4
      %v1486 = vrot.slane %v501, 5
      %v1487 = vsel %vm1047, %v1485, %v1486
      %v1488 = vrot.slane %v502, 5
      %v1489 = vrot.slane %v1488, 4
      %v1490 = vrot.slane %v503, 5
      %v1491 = vsel %vm1047, %v1489, %v1490
      %v1492 = vrot.slane %v504, 5
      %v1493 = vrot.slane %v1492, 4
      %v1494 = vrot.slane %v505, 5
      %v1495 = vsel %vm1047, %v1493, %v1494
      %v1497 = vshrl.u32 %v506, 16
      %v1499 = vrot.slane %v1497, 4
      %v1500 = vshll.u32 %v506, 16
      %v1502 = vrot.slane %v1500, 5
      %v1503 = vor.u32 %v1499, %v1502
      %v1504 = vrot.slane %v1503, 4
      %v1506 = vshll.u32 %v507, 16
      %v1508 = vrot.slane %v1506, 5
      %v1509 = vsel %vm532, %v1504, %v1508
      %v1512 = vrot.slane %v506, 5
      %v1513 = vrot.slane %v1512, 4
      %v1514 = vrot.slane %v507, 5
      %v1515 = vsel %vm1047, %v1513, %v1514
      %v1517 = vshrl.u32 %v508, 16
      %v1519 = vrot.slane %v1517, 4
      %v1520 = vshll.u32 %v508, 16
      %v1522 = vrot.slane %v1520, 5
      %v1523 = vor.u32 %v1519, %v1522
      %v1524 = vrot.slane %v1523, 4
      %v1526 = vshll.u32 %v509, 16
      %v1528 = vrot.slane %v1526, 5
      %v1529 = vsel %vm532, %v1524, %v1528
      %v1532 = vrot.slane %v508, 5
      %v1533 = vrot.slane %v1532, 4
      %v1534 = vrot.slane %v509, 5
      %v1535 = vsel %vm1047, %v1533, %v1534
      %v1537 = vshrl.u32 %v510, 16
      %v1539 = vrot.slane %v1537, 4
      %v1540 = vshll.u32 %v510, 16
      %v1542 = vrot.slane %v1540, 5
      %v1543 = vor.u32 %v1539, %v1542
      %v1544 = vrot.slane %v1543, 4
      %v1546 = vshll.u32 %v511, 16
      %v1548 = vrot.slane %v1546, 5
      %v1549 = vsel %vm532, %v1544, %v1548
      %v1551 = vshrl.u32 %v512, 16
      %v1553 = vrot.slane %v1551, 4
      %v1554 = vshll.u32 %v512, 16
      %v1556 = vrot.slane %v1554, 5
      %v1557 = vor.u32 %v1553, %v1556
      %v1558 = vrot.slane %v1557, 4
      %v1560 = vshll.u32 %v513, 16
      %v1562 = vrot.slane %v1560, 5
      %v1563 = vsel %vm532, %v1558, %v1562
      %v1565 = vshrl.u32 %v514, 16
      %v1567 = vrot.slane %v1565, 4
      %v1568 = vshll.u32 %v514, 16
      %v1570 = vrot.slane %v1568, 5
      %v1571 = vor.u32 %v1567, %v1570
      %v1572 = vrot.slane %v1571, 4
      %v1574 = vshll.u32 %v515, 16
      %v1576 = vrot.slane %v1574, 5
      %v1577 = vsel %vm532, %v1572, %v1576
      %v1579 = vshrl.u32 %v516, 16
      %v1581 = vrot.slane %v1579, 4
      %v1582 = vshll.u32 %v516, 16
      %v1584 = vrot.slane %v1582, 5
      %v1585 = vor.u32 %v1581, %v1584
      %v1586 = vrot.slane %v1585, 4
      %v1588 = vshll.u32 %v517, 16
      %v1590 = vrot.slane %v1588, 5
      %v1591 = vsel %vm532, %v1586, %v1590
      %v1593 = vshrl.u32 %v518, 16
      %v1595 = vrot.slane %v1593, 4
      %v1596 = vshll.u32 %v518, 16
      %v1598 = vrot.slane %v1596, 5
      %v1599 = vor.u32 %v1595, %v1598
      %v1600 = vrot.slane %v1599, 4
      %v1602 = vshll.u32 %v519, 16
      %v1604 = vrot.slane %v1602, 5
      %v1605 = vsel %vm532, %v1600, %v1604
      %v1607 = vshrl.u32 %v520, 16
      %v1609 = vrot.slane %v1607, 4
      %v1610 = vshll.u32 %v520, 16
      %v1612 = vrot.slane %v1610, 5
      %v1613 = vor.u32 %v1609, %v1612
      %v1614 = vrot.slane %v1613, 4
      %v1616 = vshll.u32 %v521, 16
      %v1618 = vrot.slane %v1616, 5
      %v1619 = vsel %vm532, %v1614, %v1618
      %v1621 = vshrl.u32 %v522, 16
      %v1623 = vrot.slane %v1621, 4
      %v1624 = vshll.u32 %v522, 16
      %v1626 = vrot.slane %v1624, 5
      %v1627 = vor.u32 %v1623, %v1626
      %v1628 = vrot.slane %v1627, 4
      %v1630 = vshll.u32 %v523, 16
      %v1632 = vrot.slane %v1630, 5
      %v1633 = vsel %vm532, %v1628, %v1632
      %v1635 = vshrl.u32 %v524, 16
      %v1637 = vrot.slane %v1635, 4
      %v1638 = vshll.u32 %v524, 16
      %v1640 = vrot.slane %v1638, 5
      %v1641 = vor.u32 %v1637, %v1640
      %v1642 = vrot.slane %v1641, 4
      %v1644 = vshll.u32 %v525, 16
      %v1646 = vrot.slane %v1644, 5
      %v1647 = vsel %vm532, %v1642, %v1646
      %v1664 = vrot.slane %v510, 5
      %v1665 = vrot.slane %v1664, 4
      %v1666 = vrot.slane %v511, 5
      %v1667 = vsel %vm1047, %v1665, %v1666
      %v1668 = vrot.slane %v512, 5
      %v1669 = vrot.slane %v1668, 4
      %v1670 = vrot.slane %v513, 5
      %v1671 = vsel %vm1047, %v1669, %v1670
      %v1672 = vrot.slane %v514, 5
      %v1673 = vrot.slane %v1672, 4
      %v1674 = vrot.slane %v515, 5
      %v1675 = vsel %vm1047, %v1673, %v1674
      %v1676 = vrot.slane %v516, 5
      %v1677 = vrot.slane %v1676, 4
      %v1678 = vrot.slane %v517, 5
      %v1679 = vsel %vm1047, %v1677, %v1678
      %v1680 = vrot.slane %v518, 5
      %v1681 = vrot.slane %v1680, 4
      %v1682 = vrot.slane %v519, 5
      %v1683 = vsel %vm1047, %v1681, %v1682
      %v1684 = vrot.slane %v520, 5
      %v1685 = vrot.slane %v1684, 4
      %v1686 = vrot.slane %v521, 5
      %v1687 = vsel %vm1047, %v1685, %v1686
      %v1688 = vrot.slane %v522, 5
      %v1689 = vrot.slane %v1688, 4
      %v1690 = vrot.slane %v523, 5
      %v1691 = vsel %vm1047, %v1689, %v1690
      %v1692 = vrot.slane %v524, 5
      %v1693 = vrot.slane %v1692, 4
      %v1694 = vrot.slane %v525, 5
      %v1695 = vsel %vm1047, %v1693, %v1694
      %v1697 = vshrl.u32 %v526, 16
      %v1699 = vrot.slane %v1697, 4
      %v1700 = vshll.u32 %v526, 16
      %v1702 = vrot.slane %v1700, 5
      %v1703 = vor.u32 %v1699, %v1702
      %v1704 = vrot.slane %v1703, 4
      %v1706 = vshll.u32 %v527, 16
      %v1708 = vrot.slane %v1706, 5
      %v1709 = vsel %vm532, %v1704, %v1708
      %v1712 = vrot.slane %v526, 5
      %v1713 = vrot.slane %v1712, 4
      %v1714 = vrot.slane %v527, 5
      %v1715 = vsel %vm1047, %v1713, %v1714
      %v1717 = vshrl.u32 %v528, 16
      %v1719 = vrot.slane %v1717, 4
      %v1720 = vshll.u32 %v528, 16
      %v1722 = vrot.slane %v1720, 5
      %v1723 = vor.u32 %v1719, %v1722
      %v1724 = vrot.slane %v1723, 4
      %v1726 = vshll.u32 %v529, 16
      %v1728 = vrot.slane %v1726, 5
      %v1729 = vsel %vm532, %v1724, %v1728
      %v1732 = vrot.slane %v528, 5
      %v1733 = vrot.slane %v1732, 4
      %v1734 = vrot.slane %v529, 5
      %v1735 = vsel %vm1047, %v1733, %v1734
      %v1736 = vunpack.c.l.b16 %v410
      %v1737 = vunpack.c.l.b16 %v412
      %v1738 = vunpack.c.l.b16 %v414
      %v1739 = vunpack.c.l.b16 %v416
      %v1740 = vunpack.c.l.b16 %v418
      %v1741 = vunpack.c.l.b16 %v420
      %v1742 = vunpack.c.l.b16 %v422
      %v1743 = vunpack.c.l.b16 %v424
      %v1744 = vunpack.c.l.b16 %v430
      %v1745 = vunpack.c.l.b16 %v432
      %v1746 = vunpack.c.l.b16 %v434
      %v1747 = vunpack.c.l.b16 %v436
      %v1748 = vunpack.c.l.b16 %v438
      %v1749 = vunpack.c.l.b16 %v440
      %v1750 = vunpack.c.l.b16 %v442
      %v1751 = vunpack.c.l.b16 %v444
      %v1752 = vunpack.c.l.b16 %v450
      %v1753 = vunpack.c.l.b16 %v452
      %v1754 = vunpack.c.l.b16 %v454
      %v1755 = vunpack.c.l.b16 %v456
      %v1756 = vunpack.c.l.b16 %v458
      %v1757 = vunpack.c.l.b16 %v460
      %v1758 = vunpack.c.l.b16 %v462
      %v1759 = vunpack.c.l.b16 %v464
      %v1760 = vunpack.c.l.b16 %v470
      %v1761 = vunpack.c.l.b16 %v472
      %v1762 = vunpack.c.l.b16 %v474
      %v1763 = vunpack.c.l.b16 %v476
      %v1764 = vunpack.c.l.b16 %v478
      %v1765 = vunpack.c.l.b16 %v480
      %v1766 = vunpack.c.l.b16 %v482
      %v1767 = vunpack.c.l.b16 %v484
      %v1768 = vpack.c.b16 %v1737, %v1736
      %v1769 = vpack.c.b16 %v1739, %v1738
      %v1770 = vpack.c.b16 %v1741, %v1740
      %v1771 = vpack.c.b16 %v1743, %v1742
      %v1772 = vpack.c.b16 %v1745, %v1744
      %v1773 = vpack.c.b16 %v1747, %v1746
      %v1774 = vpack.c.b16 %v1749, %v1748
      %v1775 = vpack.c.b16 %v1751, %v1750
      %v1776 = vpack.c.b16 %v1753, %v1752
      %v1777 = vpack.c.b16 %v1755, %v1754
      %v1778 = vpack.c.b16 %v1757, %v1756
      %v1779 = vpack.c.b16 %v1759, %v1758
      %v1780 = vpack.c.b16 %v1761, %v1760
      %v1781 = vpack.c.b16 %v1763, %v1762
      %v1782 = vpack.c.b16 %v1765, %v1764
      %v1783 = vpack.c.b16 %v1767, %v1766
      %v1784 = vunpack.c.l.b16 %v546
      %v1785 = vunpack.c.l.b16 %v560
      %v1786 = vunpack.c.l.b16 %v574
      %v1787 = vunpack.c.l.b16 %v588
      %v1788 = vunpack.c.l.b16 %v602
      %v1789 = vunpack.c.l.b16 %v616
      %v1790 = vunpack.c.l.b16 %v630
      %v1791 = vunpack.c.l.b16 %v644
      %v1792 = vunpack.c.l.b16 %v658
      %v1793 = vunpack.c.l.b16 %v672
      %v1794 = vunpack.c.l.b16 %v686
      %v1795 = vunpack.c.l.b16 %v700
      %v1796 = vunpack.c.l.b16 %v714
      %v1797 = vunpack.c.l.b16 %v728
      %v1798 = vunpack.c.l.b16 %v742
      %v1799 = vunpack.c.l.b16 %v756
      %v1800 = vunpack.c.l.b16 %v770
      %v1801 = vunpack.c.l.b16 %v784
      %v1802 = vunpack.c.l.b16 %v798
      %v1803 = vunpack.c.l.b16 %v812
      %v1804 = vunpack.c.l.b16 %v826
      %v1805 = vunpack.c.l.b16 %v840
      %v1806 = vunpack.c.l.b16 %v854
      %v1807 = vunpack.c.l.b16 %v868
      %v1808 = vunpack.c.l.b16 %v882
      %v1809 = vunpack.c.l.b16 %v896
      %v1810 = vunpack.c.l.b16 %v910
      %v1811 = vunpack.c.l.b16 %v924
      %v1812 = vunpack.c.l.b16 %v938
      %v1813 = vunpack.c.l.b16 %v952
      %v1814 = vunpack.c.l.b16 %v966
      %v1815 = vunpack.c.l.b16 %v980
      %v1816 = vpack.c.b16 %v1785, %v1784
      %v1817 = vpack.c.b16 %v1787, %v1786
      %v1818 = vpack.c.b16 %v1789, %v1788
      %v1819 = vpack.c.b16 %v1791, %v1790
      %v1820 = vpack.c.b16 %v1793, %v1792
      %v1821 = vpack.c.b16 %v1795, %v1794
      %v1822 = vpack.c.b16 %v1797, %v1796
      %v1823 = vpack.c.b16 %v1799, %v1798
      %v1824 = vpack.c.b16 %v1801, %v1800
      %v1825 = vpack.c.b16 %v1803, %v1802
      %v1826 = vpack.c.b16 %v1805, %v1804
      %v1827 = vpack.c.b16 %v1807, %v1806
      %v1828 = vpack.c.b16 %v1809, %v1808
      %v1829 = vpack.c.b16 %v1811, %v1810
      %v1830 = vpack.c.b16 %v1813, %v1812
      %v1831 = vpack.c.b16 %v1815, %v1814
      %1832 = vrot.lane.b32.xlu0 %v1816, 4
      %v1833 = vpop.permute.xlu0 %1832
      %1834 = vrot.lane.b32.xlu0 %v1817, 4
      %v1835 = vpop.permute.xlu0 %1834
      %1836 = vrot.lane.b32.xlu0 %v1818, 4
      %v1837 = vpop.permute.xlu0 %1836
      %1838 = vrot.lane.b32.xlu0 %v1819, 4
      %v1839 = vpop.permute.xlu0 %1838
      %1840 = vrot.lane.b32.xlu0 %v1820, 4
      %v1841 = vpop.permute.xlu0 %1840
      %1842 = vrot.lane.b32.xlu0 %v1821, 4
      %v1843 = vpop.permute.xlu0 %1842
      %1844 = vrot.lane.b32.xlu0 %v1822, 4
      %v1845 = vpop.permute.xlu0 %1844
      %1846 = vrot.lane.b32.xlu0 %v1823, 4
      %v1847 = vpop.permute.xlu0 %1846
      %1848 = vrot.lane.b32.xlu0 %v1824, 4
      %v1849 = vpop.permute.xlu0 %1848
      %1850 = vrot.lane.b32.xlu0 %v1825, 4
      %v1851 = vpop.permute.xlu0 %1850
      %1852 = vrot.lane.b32.xlu0 %v1826, 4
      %v1853 = vpop.permute.xlu0 %1852
      %1854 = vrot.lane.b32.xlu0 %v1827, 4
      %v1855 = vpop.permute.xlu0 %1854
      %1856 = vrot.lane.b32.xlu0 %v1828, 4
      %v1857 = vpop.permute.xlu0 %1856
      %1858 = vrot.lane.b32.xlu0 %v1829, 4
      %v1859 = vpop.permute.xlu0 %1858
      %1860 = vrot.lane.b32.xlu0 %v1830, 4
      %v1861 = vpop.permute.xlu0 %1860
      %1862 = vrot.lane.b32.xlu0 %v1831, 4
      %v1863 = vpop.permute.xlu0 %1862
      %v1864 = vunpack.c.l.b16 %v1051
      %v1865 = vunpack.c.l.b16 %v1055
      %v1866 = vunpack.c.l.b16 %v1059
      %v1867 = vunpack.c.l.b16 %v1063
      %v1868 = vunpack.c.l.b16 %v1067
      %v1869 = vunpack.c.l.b16 %v1071
      %v1870 = vunpack.c.l.b16 %v1075
      %v1871 = vunpack.c.l.b16 %v1079
      %v1872 = vunpack.c.l.b16 %v1083
      %v1873 = vunpack.c.l.b16 %v1087
      %v1874 = vunpack.c.l.b16 %v1091
      %v1875 = vunpack.c.l.b16 %v1095
      %v1876 = vunpack.c.l.b16 %v1099
      %v1877 = vunpack.c.l.b16 %v1103
      %v1878 = vunpack.c.l.b16 %v1107
      %v1879 = vunpack.c.l.b16 %v1111
      %v1880 = vunpack.c.l.b16 %v1115
      %v1881 = vunpack.c.l.b16 %v1119
      %v1882 = vunpack.c.l.b16 %v1123
      %v1883 = vunpack.c.l.b16 %v1127
      %v1884 = vunpack.c.l.b16 %v1131
      %v1885 = vunpack.c.l.b16 %v1135
      %v1886 = vunpack.c.l.b16 %v1139
      %v1887 = vunpack.c.l.b16 %v1143
      %v1888 = vunpack.c.l.b16 %v1147
      %v1889 = vunpack.c.l.b16 %v1151
      %v1890 = vunpack.c.l.b16 %v1155
      %v1891 = vunpack.c.l.b16 %v1159
      %v1892 = vunpack.c.l.b16 %v1163
      %v1893 = vunpack.c.l.b16 %v1167
      %v1894 = vunpack.c.l.b16 %v1171
      %v1895 = vunpack.c.l.b16 %v1175
      %v1896 = vpack.c.b16 %v1865, %v1864
      %v1897 = vpack.c.b16 %v1867, %v1866
      %v1898 = vpack.c.b16 %v1869, %v1868
      %v1899 = vpack.c.b16 %v1871, %v1870
      %v1900 = vpack.c.b16 %v1873, %v1872
      %v1901 = vpack.c.b16 %v1875, %v1874
      %v1902 = vpack.c.b16 %v1877, %v1876
      %v1903 = vpack.c.b16 %v1879, %v1878
      %v1904 = vpack.c.b16 %v1881, %v1880
      %v1905 = vpack.c.b16 %v1883, %v1882
      %v1906 = vpack.c.b16 %v1885, %v1884
      %v1907 = vpack.c.b16 %v1887, %v1886
      %v1908 = vpack.c.b16 %v1889, %v1888
      %v1909 = vpack.c.b16 %v1891, %v1890
      %v1910 = vpack.c.b16 %v1893, %v1892
      %v1911 = vpack.c.b16 %v1895, %v1894
      %1912 = vrot.lane.b32.xlu0 %v1896, 8
      %v1913 = vpop.permute.xlu0 %1912
      %1914 = vrot.lane.b32.xlu0 %v1897, 8
      %v1915 = vpop.permute.xlu0 %1914
      %1916 = vrot.lane.b32.xlu0 %v1898, 8
      %v1917 = vpop.permute.xlu0 %1916
      %1918 = vrot.lane.b32.xlu0 %v1899, 8
      %v1919 = vpop.permute.xlu0 %1918
      %1920 = vrot.lane.b32.xlu0 %v1900, 8
      %v1921 = vpop.permute.xlu0 %1920
      %1922 = vrot.lane.b32.xlu0 %v1901, 8
      %v1923 = vpop.permute.xlu0 %1922
      %1924 = vrot.lane.b32.xlu0 %v1902, 8
      %v1925 = vpop.permute.xlu0 %1924
      %1926 = vrot.lane.b32.xlu0 %v1903, 8
      %v1927 = vpop.permute.xlu0 %1926
      %1928 = vrot.lane.b32.xlu0 %v1904, 8
      %v1929 = vpop.permute.xlu0 %1928
      %1930 = vrot.lane.b32.xlu0 %v1905, 8
      %v1931 = vpop.permute.xlu0 %1930
      %1932 = vrot.lane.b32.xlu0 %v1906, 8
      %v1933 = vpop.permute.xlu0 %1932
      %1934 = vrot.lane.b32.xlu0 %v1907, 8
      %v1935 = vpop.permute.xlu0 %1934
      %1936 = vrot.lane.b32.xlu0 %v1908, 8
      %v1937 = vpop.permute.xlu0 %1936
      %1938 = vrot.lane.b32.xlu0 %v1909, 8
      %v1939 = vpop.permute.xlu0 %1938
      %1940 = vrot.lane.b32.xlu0 %v1910, 8
      %v1941 = vpop.permute.xlu0 %1940
      %1942 = vrot.lane.b32.xlu0 %v1911, 8
      %v1943 = vpop.permute.xlu0 %1942
      %v1944 = vunpack.c.l.b16 %v426
      %v1945 = vunpack.c.l.b16 %v446
      %v1946 = vunpack.c.l.b16 %v466
      %v1947 = vunpack.c.l.b16 %v486
      %v1948 = vpack.c.b16 %v1738, %v1737
      %v1949 = vpack.c.b16 %v1740, %v1739
      %v1950 = vpack.c.b16 %v1742, %v1741
      %v1951 = vpack.c.b16 %v1944, %v1743
      %v1952 = vpack.c.b16 %v1746, %v1745
      %v1953 = vpack.c.b16 %v1748, %v1747
      %v1954 = vpack.c.b16 %v1750, %v1749
      %v1955 = vpack.c.b16 %v1945, %v1751
      %v1956 = vpack.c.b16 %v1754, %v1753
      %v1957 = vpack.c.b16 %v1756, %v1755
      %v1958 = vpack.c.b16 %v1758, %v1757
      %v1959 = vpack.c.b16 %v1946, %v1759
      %v1960 = vpack.c.b16 %v1762, %v1761
      %v1961 = vpack.c.b16 %v1764, %v1763
      %v1962 = vpack.c.b16 %v1766, %v1765
      %v1963 = vpack.c.b16 %v1947, %v1767
      %1964 = vrot.lane.b32.xlu0 %v1948, 12
      %v1965 = vpop.permute.xlu0 %1964
      %1966 = vrot.lane.b32.xlu0 %v1949, 12
      %v1967 = vpop.permute.xlu0 %1966
      %1968 = vrot.lane.b32.xlu0 %v1950, 12
      %v1969 = vpop.permute.xlu0 %1968
      %1970 = vrot.lane.b32.xlu0 %v1951, 12
      %v1971 = vpop.permute.xlu0 %1970
      %1972 = vrot.lane.b32.xlu0 %v1952, 12
      %v1973 = vpop.permute.xlu0 %1972
      %1974 = vrot.lane.b32.xlu0 %v1953, 12
      %v1975 = vpop.permute.xlu0 %1974
      %1976 = vrot.lane.b32.xlu0 %v1954, 12
      %v1977 = vpop.permute.xlu0 %1976
      %1978 = vrot.lane.b32.xlu0 %v1955, 12
      %v1979 = vpop.permute.xlu0 %1978
      %1980 = vrot.lane.b32.xlu0 %v1956, 12
      %v1981 = vpop.permute.xlu0 %1980
      %1982 = vrot.lane.b32.xlu0 %v1957, 12
      %v1983 = vpop.permute.xlu0 %1982
      %1984 = vrot.lane.b32.xlu0 %v1958, 12
      %v1985 = vpop.permute.xlu0 %1984
      %1986 = vrot.lane.b32.xlu0 %v1959, 12
      %v1987 = vpop.permute.xlu0 %1986
      %1988 = vrot.lane.b32.xlu0 %v1960, 12
      %v1989 = vpop.permute.xlu0 %1988
      %1990 = vrot.lane.b32.xlu0 %v1961, 12
      %v1991 = vpop.permute.xlu0 %1990
      %1992 = vrot.lane.b32.xlu0 %v1962, 12
      %v1993 = vpop.permute.xlu0 %1992
      %1994 = vrot.lane.b32.xlu0 %v1963, 12
      %v1995 = vpop.permute.xlu0 %1994
      %v1996 = vunpack.c.l.b16 %v1189
      %v1997 = vunpack.c.l.b16 %v1203
      %v1998 = vunpack.c.l.b16 %v1217
      %v1999 = vunpack.c.l.b16 %v1231
      %v2000 = vpack.c.b16 %v1786, %v1785
      %v2001 = vpack.c.b16 %v1788, %v1787
      %v2002 = vpack.c.b16 %v1790, %v1789
      %v2003 = vpack.c.b16 %v1996, %v1791
      %v2004 = vpack.c.b16 %v1794, %v1793
      %v2005 = vpack.c.b16 %v1796, %v1795
      %v2006 = vpack.c.b16 %v1798, %v1797
      %v2007 = vpack.c.b16 %v1997, %v1799
      %v2008 = vpack.c.b16 %v1802, %v1801
      %v2009 = vpack.c.b16 %v1804, %v1803
      %v2010 = vpack.c.b16 %v1806, %v1805
      %v2011 = vpack.c.b16 %v1998, %v1807
      %v2012 = vpack.c.b16 %v1810, %v1809
      %v2013 = vpack.c.b16 %v1812, %v1811
      %v2014 = vpack.c.b16 %v1814, %v1813
      %v2015 = vpack.c.b16 %v1999, %v1815
      %2016 = vrot.lane.b32.xlu0 %v2000, 16
      %v2017 = vpop.permute.xlu0 %2016
      %2018 = vrot.lane.b32.xlu0 %v2001, 16
      %v2019 = vpop.permute.xlu0 %2018
      %2020 = vrot.lane.b32.xlu0 %v2002, 16
      %v2021 = vpop.permute.xlu0 %2020
      %2022 = vrot.lane.b32.xlu0 %v2003, 16
      %v2023 = vpop.permute.xlu0 %2022
      %2024 = vrot.lane.b32.xlu0 %v2004, 16
      %v2025 = vpop.permute.xlu0 %2024
      %2026 = vrot.lane.b32.xlu0 %v2005, 16
      %v2027 = vpop.permute.xlu0 %2026
      %2028 = vrot.lane.b32.xlu0 %v2006, 16
      %v2029 = vpop.permute.xlu0 %2028
      %2030 = vrot.lane.b32.xlu0 %v2007, 16
      %v2031 = vpop.permute.xlu0 %2030
      %2032 = vrot.lane.b32.xlu0 %v2008, 16
      %v2033 = vpop.permute.xlu0 %2032
      %2034 = vrot.lane.b32.xlu0 %v2009, 16
      %v2035 = vpop.permute.xlu0 %2034
      %2036 = vrot.lane.b32.xlu0 %v2010, 16
      %v2037 = vpop.permute.xlu0 %2036
      %2038 = vrot.lane.b32.xlu0 %v2011, 16
      %v2039 = vpop.permute.xlu0 %2038
      %2040 = vrot.lane.b32.xlu0 %v2012, 16
      %v2041 = vpop.permute.xlu0 %2040
      %2042 = vrot.lane.b32.xlu0 %v2013, 16
      %v2043 = vpop.permute.xlu0 %2042
      %2044 = vrot.lane.b32.xlu0 %v2014, 16
      %v2045 = vpop.permute.xlu0 %2044
      %2046 = vrot.lane.b32.xlu0 %v2015, 16
      %v2047 = vpop.permute.xlu0 %2046
      %v2048 = vunpack.c.l.b16 %v1243
      %v2049 = vunpack.c.l.b16 %v1247
      %v2050 = vunpack.c.l.b16 %v1251
      %v2051 = vunpack.c.l.b16 %v1255
      %v2052 = vpack.c.b16 %v1866, %v1865
      %v2053 = vpack.c.b16 %v1868, %v1867
      %v2054 = vpack.c.b16 %v1870, %v1869
      %v2055 = vpack.c.b16 %v2048, %v1871
      %v2056 = vpack.c.b16 %v1874, %v1873
      %v2057 = vpack.c.b16 %v1876, %v1875
      %v2058 = vpack.c.b16 %v1878, %v1877
      %v2059 = vpack.c.b16 %v2049, %v1879
      %v2060 = vpack.c.b16 %v1882, %v1881
      %v2061 = vpack.c.b16 %v1884, %v1883
      %v2062 = vpack.c.b16 %v1886, %v1885
      %v2063 = vpack.c.b16 %v2050, %v1887
      %v2064 = vpack.c.b16 %v1890, %v1889
      %v2065 = vpack.c.b16 %v1892, %v1891
      %v2066 = vpack.c.b16 %v1894, %v1893
      %v2067 = vpack.c.b16 %v2051, %v1895
      %2068 = vrot.lane.b32.xlu0 %v2052, 20
      %v2069 = vpop.permute.xlu0 %2068
      %2070 = vrot.lane.b32.xlu0 %v2053, 20
      %v2071 = vpop.permute.xlu0 %2070
      %2072 = vrot.lane.b32.xlu0 %v2054, 20
      %v2073 = vpop.permute.xlu0 %2072
      %2074 = vrot.lane.b32.xlu0 %v2055, 20
      %v2075 = vpop.permute.xlu0 %2074
      %2076 = vrot.lane.b32.xlu0 %v2056, 20
      %v2077 = vpop.permute.xlu0 %2076
      %2078 = vrot.lane.b32.xlu0 %v2057, 20
      %v2079 = vpop.permute.xlu0 %2078
      %2080 = vrot.lane.b32.xlu0 %v2058, 20
      %v2081 = vpop.permute.xlu0 %2080
      %2082 = vrot.lane.b32.xlu0 %v2059, 20
      %v2083 = vpop.permute.xlu0 %2082
      %2084 = vrot.lane.b32.xlu0 %v2060, 20
      %v2085 = vpop.permute.xlu0 %2084
      %2086 = vrot.lane.b32.xlu0 %v2061, 20
      %v2087 = vpop.permute.xlu0 %2086
      %2088 = vrot.lane.b32.xlu0 %v2062, 20
      %v2089 = vpop.permute.xlu0 %2088
      %2090 = vrot.lane.b32.xlu0 %v2063, 20
      %v2091 = vpop.permute.xlu0 %2090
      %2092 = vrot.lane.b32.xlu0 %v2064, 20
      %v2093 = vpop.permute.xlu0 %2092
      %2094 = vrot.lane.b32.xlu0 %v2065, 20
      %v2095 = vpop.permute.xlu0 %2094
      %2096 = vrot.lane.b32.xlu0 %v2066, 20
      %v2097 = vpop.permute.xlu0 %2096
      %2098 = vrot.lane.b32.xlu0 %v2067, 20
      %v2099 = vpop.permute.xlu0 %2098
      %v2100 = vunpack.c.l.b16 %v428
      %v2101 = vunpack.c.l.b16 %v448
      %v2102 = vunpack.c.l.b16 %v468
      %v2103 = vunpack.c.l.b16 %v488
      %v2104 = vpack.c.b16 %v2100, %v1944
      %v2105 = vpack.c.b16 %v2101, %v1945
      %v2106 = vpack.c.b16 %v2102, %v1946
      %v2107 = vpack.c.b16 %v2103, %v1947
      %2108 = vrot.lane.b32.xlu0 %v1769, 24
      %v2109 = vpop.permute.xlu0 %2108
      %2110 = vrot.lane.b32.xlu0 %v1770, 24
      %v2111 = vpop.permute.xlu0 %2110
      %2112 = vrot.lane.b32.xlu0 %v1771, 24
      %v2113 = vpop.permute.xlu0 %2112
      %2114 = vrot.lane.b32.xlu0 %v2104, 24
      %v2115 = vpop.permute.xlu0 %2114
      %2116 = vrot.lane.b32.xlu0 %v1773, 24
      %v2117 = vpop.permute.xlu0 %2116
      %2118 = vrot.lane.b32.xlu0 %v1774, 24
      %v2119 = vpop.permute.xlu0 %2118
      %2120 = vrot.lane.b32.xlu0 %v1775, 24
      %v2121 = vpop.permute.xlu0 %2120
      %2122 = vrot.lane.b32.xlu0 %v2105, 24
      %v2123 = vpop.permute.xlu0 %2122
      %2124 = vrot.lane.b32.xlu0 %v1777, 24
      %v2125 = vpop.permute.xlu0 %2124
      %2126 = vrot.lane.b32.xlu0 %v1778, 24
      %v2127 = vpop.permute.xlu0 %2126
      %2128 = vrot.lane.b32.xlu0 %v1779, 24
      %v2129 = vpop.permute.xlu0 %2128
      %2130 = vrot.lane.b32.xlu0 %v2106, 24
      %v2131 = vpop.permute.xlu0 %2130
      %2132 = vrot.lane.b32.xlu0 %v1781, 24
      %v2133 = vpop.permute.xlu0 %2132
      %2134 = vrot.lane.b32.xlu0 %v1782, 24
      %v2135 = vpop.permute.xlu0 %2134
      %2136 = vrot.lane.b32.xlu0 %v1783, 24
      %v2137 = vpop.permute.xlu0 %2136
      %2138 = vrot.lane.b32.xlu0 %v2107, 24
      %v2139 = vpop.permute.xlu0 %2138
      %v2140 = vunpack.c.l.b16 %v1269
      %v2141 = vunpack.c.l.b16 %v1283
      %v2142 = vunpack.c.l.b16 %v1297
      %v2143 = vunpack.c.l.b16 %v1311
      %v2144 = vpack.c.b16 %v2140, %v1996
      %v2145 = vpack.c.b16 %v2141, %v1997
      %v2146 = vpack.c.b16 %v2142, %v1998
      %v2147 = vpack.c.b16 %v2143, %v1999
      %2148 = vrot.lane.b32.xlu0 %v1817, 28
      %v2149 = vpop.permute.xlu0 %2148
      %2150 = vrot.lane.b32.xlu0 %v1818, 28
      %v2151 = vpop.permute.xlu0 %2150
      %2152 = vrot.lane.b32.xlu0 %v1819, 28
      %v2153 = vpop.permute.xlu0 %2152
      %2154 = vrot.lane.b32.xlu0 %v2144, 28
      %v2155 = vpop.permute.xlu0 %2154
      %2156 = vrot.lane.b32.xlu0 %v1821, 28
      %v2157 = vpop.permute.xlu0 %2156
      %2158 = vrot.lane.b32.xlu0 %v1822, 28
      %v2159 = vpop.permute.xlu0 %2158
      %2160 = vrot.lane.b32.xlu0 %v1823, 28
      %v2161 = vpop.permute.xlu0 %2160
      %2162 = vrot.lane.b32.xlu0 %v2145, 28
      %v2163 = vpop.permute.xlu0 %2162
      %2164 = vrot.lane.b32.xlu0 %v1825, 28
      %v2165 = vpop.permute.xlu0 %2164
      %2166 = vrot.lane.b32.xlu0 %v1826, 28
      %v2167 = vpop.permute.xlu0 %2166
      %2168 = vrot.lane.b32.xlu0 %v1827, 28
      %v2169 = vpop.permute.xlu0 %2168
      %2170 = vrot.lane.b32.xlu0 %v2146, 28
      %v2171 = vpop.permute.xlu0 %2170
      %2172 = vrot.lane.b32.xlu0 %v1829, 28
      %v2173 = vpop.permute.xlu0 %2172
      %2174 = vrot.lane.b32.xlu0 %v1830, 28
      %v2175 = vpop.permute.xlu0 %2174
      %2176 = vrot.lane.b32.xlu0 %v1831, 28
      %v2177 = vpop.permute.xlu0 %2176
      %2178 = vrot.lane.b32.xlu0 %v2147, 28
      %v2179 = vpop.permute.xlu0 %2178
      %v2180 = vunpack.c.l.b16 %v1323
      %v2181 = vunpack.c.l.b16 %v1327
      %v2182 = vunpack.c.l.b16 %v1331
      %v2183 = vunpack.c.l.b16 %v1335
      %v2184 = vpack.c.b16 %v2180, %v2048
      %v2185 = vpack.c.b16 %v2181, %v2049
      %v2186 = vpack.c.b16 %v2182, %v2050
      %v2187 = vpack.c.b16 %v2183, %v2051
      %2188 = vrot.lane.b32.xlu0 %v1897, 32
      %v2189 = vpop.permute.xlu0 %2188
      %2190 = vrot.lane.b32.xlu0 %v1898, 32
      %v2191 = vpop.permute.xlu0 %2190
      %2192 = vrot.lane.b32.xlu0 %v1899, 32
      %v2193 = vpop.permute.xlu0 %2192
      %2194 = vrot.lane.b32.xlu0 %v2184, 32
      %v2195 = vpop.permute.xlu0 %2194
      %2196 = vrot.lane.b32.xlu0 %v1901, 32
      %v2197 = vpop.permute.xlu0 %2196
      %2198 = vrot.lane.b32.xlu0 %v1902, 32
      %v2199 = vpop.permute.xlu0 %2198
      %2200 = vrot.lane.b32.xlu0 %v1903, 32
      %v2201 = vpop.permute.xlu0 %2200
      %2202 = vrot.lane.b32.xlu0 %v2185, 32
      %v2203 = vpop.permute.xlu0 %2202
      %2204 = vrot.lane.b32.xlu0 %v1905, 32
      %v2205 = vpop.permute.xlu0 %2204
      %2206 = vrot.lane.b32.xlu0 %v1906, 32
      %v2207 = vpop.permute.xlu0 %2206
      %2208 = vrot.lane.b32.xlu0 %v1907, 32
      %v2209 = vpop.permute.xlu0 %2208
      %2210 = vrot.lane.b32.xlu0 %v2186, 32
      %v2211 = vpop.permute.xlu0 %2210
      %2212 = vrot.lane.b32.xlu0 %v1909, 32
      %v2213 = vpop.permute.xlu0 %2212
      %2214 = vrot.lane.b32.xlu0 %v1910, 32
      %v2215 = vpop.permute.xlu0 %2214
      %2216 = vrot.lane.b32.xlu0 %v1911, 32
      %v2217 = vpop.permute.xlu0 %2216
      %2218 = vrot.lane.b32.xlu0 %v2187, 32
      %v2219 = vpop.permute.xlu0 %2218
      %v2220 = vunpack.c.l.b16 %v490
      %v2221 = vunpack.c.l.b16 %v492
      %v2222 = vunpack.c.l.b16 %v494
      %v2223 = vunpack.c.l.b16 %v496
      %v2224 = vunpack.c.l.b16 %v498
      %v2225 = vunpack.c.l.b16 %v500
      %v2226 = vunpack.c.l.b16 %v502
      %v2227 = vunpack.c.l.b16 %v504
      %v2228 = vpack.c.b16 %v2221, %v2220
      %v2229 = vpack.c.b16 %v2223, %v2222
      %v2230 = vpack.c.b16 %v2225, %v2224
      %v2231 = vpack.c.b16 %v2227, %v2226
      %2232 = vrot.lane.b32.xlu0 %v1772, 36
      %v2233 = vpop.permute.xlu0 %2232
      %2234 = vrot.lane.b32.xlu0 %v1773, 36
      %v2235 = vpop.permute.xlu0 %2234
      %2236 = vrot.lane.b32.xlu0 %v1774, 36
      %v2237 = vpop.permute.xlu0 %2236
      %2238 = vrot.lane.b32.xlu0 %v1775, 36
      %v2239 = vpop.permute.xlu0 %2238
      %2240 = vrot.lane.b32.xlu0 %v1776, 36
      %v2241 = vpop.permute.xlu0 %2240
      %2242 = vrot.lane.b32.xlu0 %v1777, 36
      %v2243 = vpop.permute.xlu0 %2242
      %2244 = vrot.lane.b32.xlu0 %v1778, 36
      %v2245 = vpop.permute.xlu0 %2244
      %2246 = vrot.lane.b32.xlu0 %v1779, 36
      %v2247 = vpop.permute.xlu0 %2246
      %2248 = vrot.lane.b32.xlu0 %v1780, 36
      %v2249 = vpop.permute.xlu0 %2248
      %2250 = vrot.lane.b32.xlu0 %v1781, 36
      %v2251 = vpop.permute.xlu0 %2250
      %2252 = vrot.lane.b32.xlu0 %v1782, 36
      %v2253 = vpop.permute.xlu0 %2252
      %2254 = vrot.lane.b32.xlu0 %v1783, 36
      %v2255 = vpop.permute.xlu0 %2254
      %2256 = vrot.lane.b32.xlu0 %v2228, 36
      %v2257 = vpop.permute.xlu0 %2256
      %2258 = vrot.lane.b32.xlu0 %v2229, 36
      %v2259 = vpop.permute.xlu0 %2258
      %2260 = vrot.lane.b32.xlu0 %v2230, 36
      %v2261 = vpop.permute.xlu0 %2260
      %2262 = vrot.lane.b32.xlu0 %v2231, 36
      %v2263 = vpop.permute.xlu0 %2262
      %v2264 = vunpack.c.l.b16 %v1349
      %v2265 = vunpack.c.l.b16 %v1363
      %v2266 = vunpack.c.l.b16 %v1377
      %v2267 = vunpack.c.l.b16 %v1391
      %v2268 = vunpack.c.l.b16 %v1405
      %v2269 = vunpack.c.l.b16 %v1419
      %v2270 = vunpack.c.l.b16 %v1433
      %v2271 = vunpack.c.l.b16 %v1447
      %v2272 = vpack.c.b16 %v2265, %v2264
      %v2273 = vpack.c.b16 %v2267, %v2266
      %v2274 = vpack.c.b16 %v2269, %v2268
      %v2275 = vpack.c.b16 %v2271, %v2270
      %2276 = vrot.lane.b32.xlu0 %v1820, 40
      %v2277 = vpop.permute.xlu0 %2276
      %2278 = vrot.lane.b32.xlu0 %v1821, 40
      %v2279 = vpop.permute.xlu0 %2278
      %2280 = vrot.lane.b32.xlu0 %v1822, 40
      %v2281 = vpop.permute.xlu0 %2280
      %2282 = vrot.lane.b32.xlu0 %v1823, 40
      %v2283 = vpop.permute.xlu0 %2282
      %2284 = vrot.lane.b32.xlu0 %v1824, 40
      %v2285 = vpop.permute.xlu0 %2284
      %2286 = vrot.lane.b32.xlu0 %v1825, 40
      %v2287 = vpop.permute.xlu0 %2286
      %2288 = vrot.lane.b32.xlu0 %v1826, 40
      %v2289 = vpop.permute.xlu0 %2288
      %2290 = vrot.lane.b32.xlu0 %v1827, 40
      %v2291 = vpop.permute.xlu0 %2290
      %2292 = vrot.lane.b32.xlu0 %v1828, 40
      %v2293 = vpop.permute.xlu0 %2292
      %2294 = vrot.lane.b32.xlu0 %v1829, 40
      %v2295 = vpop.permute.xlu0 %2294
      %2296 = vrot.lane.b32.xlu0 %v1830, 40
      %v2297 = vpop.permute.xlu0 %2296
      %2298 = vrot.lane.b32.xlu0 %v1831, 40
      %v2299 = vpop.permute.xlu0 %2298
      %2300 = vrot.lane.b32.xlu0 %v2272, 40
      %v2301 = vpop.permute.xlu0 %2300
      %2302 = vrot.lane.b32.xlu0 %v2273, 40
      %v2303 = vpop.permute.xlu0 %2302
      %2304 = vrot.lane.b32.xlu0 %v2274, 40
      %v2305 = vpop.permute.xlu0 %2304
      %2306 = vrot.lane.b32.xlu0 %v2275, 40
      %v2307 = vpop.permute.xlu0 %2306
      %v2308 = vunpack.c.l.b16 %v1467
      %v2309 = vunpack.c.l.b16 %v1471
      %v2310 = vunpack.c.l.b16 %v1475
      %v2311 = vunpack.c.l.b16 %v1479
      %v2312 = vunpack.c.l.b16 %v1483
      %v2313 = vunpack.c.l.b16 %v1487
      %v2314 = vunpack.c.l.b16 %v1491
      %v2315 = vunpack.c.l.b16 %v1495
      %v2316 = vpack.c.b16 %v2309, %v2308
      %v2317 = vpack.c.b16 %v2311, %v2310
      %v2318 = vpack.c.b16 %v2313, %v2312
      %v2319 = vpack.c.b16 %v2315, %v2314
      %2320 = vrot.lane.b32.xlu0 %v1900, 44
      %v2321 = vpop.permute.xlu0 %2320
      %2322 = vrot.lane.b32.xlu0 %v1901, 44
      %v2323 = vpop.permute.xlu0 %2322
      %2324 = vrot.lane.b32.xlu0 %v1902, 44
      %v2325 = vpop.permute.xlu0 %2324
      %2326 = vrot.lane.b32.xlu0 %v1903, 44
      %v2327 = vpop.permute.xlu0 %2326
      %2328 = vrot.lane.b32.xlu0 %v1904, 44
      %v2329 = vpop.permute.xlu0 %2328
      %2330 = vrot.lane.b32.xlu0 %v1905, 44
      %v2331 = vpop.permute.xlu0 %2330
      %2332 = vrot.lane.b32.xlu0 %v1906, 44
      %v2333 = vpop.permute.xlu0 %2332
      %2334 = vrot.lane.b32.xlu0 %v1907, 44
      %v2335 = vpop.permute.xlu0 %2334
      %2336 = vrot.lane.b32.xlu0 %v1908, 44
      %v2337 = vpop.permute.xlu0 %2336
      %2338 = vrot.lane.b32.xlu0 %v1909, 44
      %v2339 = vpop.permute.xlu0 %2338
      %2340 = vrot.lane.b32.xlu0 %v1910, 44
      %v2341 = vpop.permute.xlu0 %2340
      %2342 = vrot.lane.b32.xlu0 %v1911, 44
      %v2343 = vpop.permute.xlu0 %2342
      %2344 = vrot.lane.b32.xlu0 %v2316, 44
      %v2345 = vpop.permute.xlu0 %2344
      %2346 = vrot.lane.b32.xlu0 %v2317, 44
      %v2347 = vpop.permute.xlu0 %2346
      %2348 = vrot.lane.b32.xlu0 %v2318, 44
      %v2349 = vpop.permute.xlu0 %2348
      %2350 = vrot.lane.b32.xlu0 %v2319, 44
      %v2351 = vpop.permute.xlu0 %2350
      %v2352 = vunpack.c.l.b16 %v506
      %v2353 = vpack.c.b16 %v2222, %v2221
      %v2354 = vpack.c.b16 %v2224, %v2223
      %v2355 = vpack.c.b16 %v2226, %v2225
      %v2356 = vpack.c.b16 %v2352, %v2227
      %2357 = vrot.lane.b32.xlu0 %v1952, 48
      %v2358 = vpop.permute.xlu0 %2357
      %2359 = vrot.lane.b32.xlu0 %v1953, 48
      %v2360 = vpop.permute.xlu0 %2359
      %2361 = vrot.lane.b32.xlu0 %v1954, 48
      %v2362 = vpop.permute.xlu0 %2361
      %2363 = vrot.lane.b32.xlu0 %v1955, 48
      %v2364 = vpop.permute.xlu0 %2363
      %2365 = vrot.lane.b32.xlu0 %v1956, 48
      %v2366 = vpop.permute.xlu0 %2365
      %2367 = vrot.lane.b32.xlu0 %v1957, 48
      %v2368 = vpop.permute.xlu0 %2367
      %2369 = vrot.lane.b32.xlu0 %v1958, 48
      %v2370 = vpop.permute.xlu0 %2369
      %2371 = vrot.lane.b32.xlu0 %v1959, 48
      %v2372 = vpop.permute.xlu0 %2371
      %2373 = vrot.lane.b32.xlu0 %v1960, 48
      %v2374 = vpop.permute.xlu0 %2373
      %2375 = vrot.lane.b32.xlu0 %v1961, 48
      %v2376 = vpop.permute.xlu0 %2375
      %2377 = vrot.lane.b32.xlu0 %v1962, 48
      %v2378 = vpop.permute.xlu0 %2377
      %2379 = vrot.lane.b32.xlu0 %v1963, 48
      %v2380 = vpop.permute.xlu0 %2379
      %2381 = vrot.lane.b32.xlu0 %v2353, 48
      %v2382 = vpop.permute.xlu0 %2381
      %2383 = vrot.lane.b32.xlu0 %v2354, 48
      %v2384 = vpop.permute.xlu0 %2383
      %2385 = vrot.lane.b32.xlu0 %v2355, 48
      %v2386 = vpop.permute.xlu0 %2385
      %2387 = vrot.lane.b32.xlu0 %v2356, 48
      %v2388 = vpop.permute.xlu0 %2387
      %v2389 = vunpack.c.l.b16 %v1509
      %v2390 = vpack.c.b16 %v2266, %v2265
      %v2391 = vpack.c.b16 %v2268, %v2267
      %v2392 = vpack.c.b16 %v2270, %v2269
      %v2393 = vpack.c.b16 %v2389, %v2271
      %2394 = vrot.lane.b32.xlu0 %v2004, 52
      %v2395 = vpop.permute.xlu0 %2394
      %2396 = vrot.lane.b32.xlu0 %v2005, 52
      %v2397 = vpop.permute.xlu0 %2396
      %2398 = vrot.lane.b32.xlu0 %v2006, 52
      %v2399 = vpop.permute.xlu0 %2398
      %2400 = vrot.lane.b32.xlu0 %v2007, 52
      %v2401 = vpop.permute.xlu0 %2400
      %2402 = vrot.lane.b32.xlu0 %v2008, 52
      %v2403 = vpop.permute.xlu0 %2402
      %2404 = vrot.lane.b32.xlu0 %v2009, 52
      %v2405 = vpop.permute.xlu0 %2404
      %2406 = vrot.lane.b32.xlu0 %v2010, 52
      %v2407 = vpop.permute.xlu0 %2406
      %2408 = vrot.lane.b32.xlu0 %v2011, 52
      %v2409 = vpop.permute.xlu0 %2408
      %2410 = vrot.lane.b32.xlu0 %v2012, 52
      %v2411 = vpop.permute.xlu0 %2410
      %2412 = vrot.lane.b32.xlu0 %v2013, 52
      %v2413 = vpop.permute.xlu0 %2412
      %2414 = vrot.lane.b32.xlu0 %v2014, 52
      %v2415 = vpop.permute.xlu0 %2414
      %2416 = vrot.lane.b32.xlu0 %v2015, 52
      %v2417 = vpop.permute.xlu0 %2416
      %2418 = vrot.lane.b32.xlu0 %v2390, 52
      %v2419 = vpop.permute.xlu0 %2418
      %2420 = vrot.lane.b32.xlu0 %v2391, 52
      %v2421 = vpop.permute.xlu0 %2420
      %2422 = vrot.lane.b32.xlu0 %v2392, 52
      %v2423 = vpop.permute.xlu0 %2422
      %2424 = vrot.lane.b32.xlu0 %v2393, 52
      %v2425 = vpop.permute.xlu0 %2424
      %v2426 = vunpack.c.l.b16 %v1515
      %v2427 = vpack.c.b16 %v2310, %v2309
      %v2428 = vpack.c.b16 %v2312, %v2311
      %v2429 = vpack.c.b16 %v2314, %v2313
      %v2430 = vpack.c.b16 %v2426, %v2315
      %2431 = vrot.lane.b32.xlu0 %v2056, 56
      %v2432 = vpop.permute.xlu0 %2431
      %2433 = vrot.lane.b32.xlu0 %v2057, 56
      %v2434 = vpop.permute.xlu0 %2433
      %2435 = vrot.lane.b32.xlu0 %v2058, 56
      %v2436 = vpop.permute.xlu0 %2435
      %2437 = vrot.lane.b32.xlu0 %v2059, 56
      %v2438 = vpop.permute.xlu0 %2437
      %2439 = vrot.lane.b32.xlu0 %v2060, 56
      %v2440 = vpop.permute.xlu0 %2439
      %2441 = vrot.lane.b32.xlu0 %v2061, 56
      %v2442 = vpop.permute.xlu0 %2441
      %2443 = vrot.lane.b32.xlu0 %v2062, 56
      %v2444 = vpop.permute.xlu0 %2443
      %2445 = vrot.lane.b32.xlu0 %v2063, 56
      %v2446 = vpop.permute.xlu0 %2445
      %2447 = vrot.lane.b32.xlu0 %v2064, 56
      %v2448 = vpop.permute.xlu0 %2447
      %2449 = vrot.lane.b32.xlu0 %v2065, 56
      %v2450 = vpop.permute.xlu0 %2449
      %2451 = vrot.lane.b32.xlu0 %v2066, 56
      %v2452 = vpop.permute.xlu0 %2451
      %2453 = vrot.lane.b32.xlu0 %v2067, 56
      %v2454 = vpop.permute.xlu0 %2453
      %2455 = vrot.lane.b32.xlu0 %v2427, 56
      %v2456 = vpop.permute.xlu0 %2455
      %2457 = vrot.lane.b32.xlu0 %v2428, 56
      %v2458 = vpop.permute.xlu0 %2457
      %2459 = vrot.lane.b32.xlu0 %v2429, 56
      %v2460 = vpop.permute.xlu0 %2459
      %2461 = vrot.lane.b32.xlu0 %v2430, 56
      %v2462 = vpop.permute.xlu0 %2461
      %v2463 = vunpack.c.l.b16 %v508
      %v2464 = vpack.c.b16 %v2463, %v2352
      %2465 = vrot.lane.b32.xlu0 %v1773, 60
      %v2466 = vpop.permute.xlu0 %2465
      %2467 = vrot.lane.b32.xlu0 %v1774, 60
      %v2468 = vpop.permute.xlu0 %2467
      %2469 = vrot.lane.b32.xlu0 %v1775, 60
      %v2470 = vpop.permute.xlu0 %2469
      %2471 = vrot.lane.b32.xlu0 %v2105, 60
      %v2472 = vpop.permute.xlu0 %2471
      %2473 = vrot.lane.b32.xlu0 %v1777, 60
      %v2474 = vpop.permute.xlu0 %2473
      %2475 = vrot.lane.b32.xlu0 %v1778, 60
      %v2476 = vpop.permute.xlu0 %2475
      %2477 = vrot.lane.b32.xlu0 %v1779, 60
      %v2478 = vpop.permute.xlu0 %2477
      %2479 = vrot.lane.b32.xlu0 %v2106, 60
      %v2480 = vpop.permute.xlu0 %2479
      %2481 = vrot.lane.b32.xlu0 %v1781, 60
      %v2482 = vpop.permute.xlu0 %2481
      %2483 = vrot.lane.b32.xlu0 %v1782, 60
      %v2484 = vpop.permute.xlu0 %2483
      %2485 = vrot.lane.b32.xlu0 %v1783, 60
      %v2486 = vpop.permute.xlu0 %2485
      %2487 = vrot.lane.b32.xlu0 %v2107, 60
      %v2488 = vpop.permute.xlu0 %2487
      %2489 = vrot.lane.b32.xlu0 %v2229, 60
      %v2490 = vpop.permute.xlu0 %2489
      %2491 = vrot.lane.b32.xlu0 %v2230, 60
      %v2492 = vpop.permute.xlu0 %2491
      %2493 = vrot.lane.b32.xlu0 %v2231, 60
      %v2494 = vpop.permute.xlu0 %2493
      %2495 = vrot.lane.b32.xlu0 %v2464, 60
      %v2496 = vpop.permute.xlu0 %2495
      %vm2497 = vcmask 31744
      %v2500 = vsel %vm2497, %v1768, %v1833
      %v2503 = vsel %vm2497, %v1769, %v1835
      %v2506 = vsel %vm2497, %v1770, %v1837
      %v2509 = vsel %vm2497, %v1771, %v1839
      %v2512 = vsel %vm2497, %v1772, %v1841
      %v2515 = vsel %vm2497, %v1773, %v1843
      %v2518 = vsel %vm2497, %v1774, %v1845
      %v2521 = vsel %vm2497, %v1775, %v1847
      %v2524 = vsel %vm2497, %v1776, %v1849
      %v2527 = vsel %vm2497, %v1777, %v1851
      %v2530 = vsel %vm2497, %v1778, %v1853
      %v2533 = vsel %vm2497, %v1779, %v1855
      %v2536 = vsel %vm2497, %v1780, %v1857
      %v2539 = vsel %vm2497, %v1781, %v1859
      %v2542 = vsel %vm2497, %v1782, %v1861
      %v2545 = vsel %vm2497, %v1783, %v1863
      %vm2546 = vcmask 64512
      %v2548 = vsel %vm2546, %v2500, %v1913
      %v2550 = vsel %vm2546, %v2503, %v1915
      %v2552 = vsel %vm2546, %v2506, %v1917
      %v2554 = vsel %vm2546, %v2509, %v1919
      %v2556 = vsel %vm2546, %v2512, %v1921
      %v2558 = vsel %vm2546, %v2515, %v1923
      %v2560 = vsel %vm2546, %v2518, %v1925
      %v2562 = vsel %vm2546, %v2521, %v1927
      %v2564 = vsel %vm2546, %v2524, %v1929
      %v2566 = vsel %vm2546, %v2527, %v1931
      %v2568 = vsel %vm2546, %v2530, %v1933
      %v2570 = vsel %vm2546, %v2533, %v1935
      %v2572 = vsel %vm2546, %v2536, %v1937
      %v2574 = vsel %vm2546, %v2539, %v1939
      %v2576 = vsel %vm2546, %v2542, %v1941
      %v2578 = vsel %vm2546, %v2545, %v1943
      %vm2579 = vcmask 97280
      %v2581 = vsel %vm2579, %v2548, %v1965
      %v2583 = vsel %vm2579, %v2550, %v1967
      %v2585 = vsel %vm2579, %v2552, %v1969
      %v2587 = vsel %vm2579, %v2554, %v1971
      %v2589 = vsel %vm2579, %v2556, %v1973
      %v2591 = vsel %vm2579, %v2558, %v1975
      %v2593 = vsel %vm2579, %v2560, %v1977
      %v2595 = vsel %vm2579, %v2562, %v1979
      %v2597 = vsel %vm2579, %v2564, %v1981
      %v2599 = vsel %vm2579, %v2566, %v1983
      %v2601 = vsel %vm2579, %v2568, %v1985
      %v2603 = vsel %vm2579, %v2570, %v1987
      %v2605 = vsel %vm2579, %v2572, %v1989
      %v2607 = vsel %vm2579, %v2574, %v1991
      %v2609 = vsel %vm2579, %v2576, %v1993
      %v2611 = vsel %vm2579, %v2578, %v1995
      %vm2612 = vcmask 130048
      %v2614 = vsel %vm2612, %v2581, %v2017
      %v2616 = vsel %vm2612, %v2583, %v2019
      %v2618 = vsel %vm2612, %v2585, %v2021
      %v2620 = vsel %vm2612, %v2587, %v2023
      %v2622 = vsel %vm2612, %v2589, %v2025
      %v2624 = vsel %vm2612, %v2591, %v2027
      %v2626 = vsel %vm2612, %v2593, %v2029
      %v2628 = vsel %vm2612, %v2595, %v2031
      %v2630 = vsel %vm2612, %v2597, %v2033
      %v2632 = vsel %vm2612, %v2599, %v2035
      %v2634 = vsel %vm2612, %v2601, %v2037
      %v2636 = vsel %vm2612, %v2603, %v2039
      %v2638 = vsel %vm2612, %v2605, %v2041
      %v2640 = vsel %vm2612, %v2607, %v2043
      %v2642 = vsel %vm2612, %v2609, %v2045
      %v2644 = vsel %vm2612, %v2611, %v2047
      %vm2645 = vcmask 162816
      %v2647 = vsel %vm2645, %v2614, %v2069
      %v2649 = vsel %vm2645, %v2616, %v2071
      %v2651 = vsel %vm2645, %v2618, %v2073
      %v2653 = vsel %vm2645, %v2620, %v2075
      %v2655 = vsel %vm2645, %v2622, %v2077
      %v2657 = vsel %vm2645, %v2624, %v2079
      %v2659 = vsel %vm2645, %v2626, %v2081
      %v2661 = vsel %vm2645, %v2628, %v2083
      %v2663 = vsel %vm2645, %v2630, %v2085
      %v2665 = vsel %vm2645, %v2632, %v2087
      %v2667 = vsel %vm2645, %v2634, %v2089
      %v2669 = vsel %vm2645, %v2636, %v2091
      %v2671 = vsel %vm2645, %v2638, %v2093
      %v2673 = vsel %vm2645, %v2640, %v2095
      %v2675 = vsel %vm2645, %v2642, %v2097
      %v2677 = vsel %vm2645, %v2644, %v2099
      %vm2678 = vcmask 195584
      %v2680 = vsel %vm2678, %v2647, %v2109
      %v2682 = vsel %vm2678, %v2649, %v2111
      %v2684 = vsel %vm2678, %v2651, %v2113
      %v2686 = vsel %vm2678, %v2653, %v2115
      %v2688 = vsel %vm2678, %v2655, %v2117
      %v2690 = vsel %vm2678, %v2657, %v2119
      %v2692 = vsel %vm2678, %v2659, %v2121
      %v2694 = vsel %vm2678, %v2661, %v2123
      %v2696 = vsel %vm2678, %v2663, %v2125
      %v2698 = vsel %vm2678, %v2665, %v2127
      %v2700 = vsel %vm2678, %v2667, %v2129
      %v2702 = vsel %vm2678, %v2669, %v2131
      %v2704 = vsel %vm2678, %v2671, %v2133
      %v2706 = vsel %vm2678, %v2673, %v2135
      %v2708 = vsel %vm2678, %v2675, %v2137
      %v2710 = vsel %vm2678, %v2677, %v2139
      %vm2711 = vcmask 228352
      %v2713 = vsel %vm2711, %v2680, %v2149
      %v2715 = vsel %vm2711, %v2682, %v2151
      %v2717 = vsel %vm2711, %v2684, %v2153
      %v2719 = vsel %vm2711, %v2686, %v2155
      %v2721 = vsel %vm2711, %v2688, %v2157
      %v2723 = vsel %vm2711, %v2690, %v2159
      %v2725 = vsel %vm2711, %v2692, %v2161
      %v2727 = vsel %vm2711, %v2694, %v2163
      %v2729 = vsel %vm2711, %v2696, %v2165
      %v2731 = vsel %vm2711, %v2698, %v2167
      %v2733 = vsel %vm2711, %v2700, %v2169
      %v2735 = vsel %vm2711, %v2702, %v2171
      %v2737 = vsel %vm2711, %v2704, %v2173
      %v2739 = vsel %vm2711, %v2706, %v2175
      %v2741 = vsel %vm2711, %v2708, %v2177
      %v2743 = vsel %vm2711, %v2710, %v2179
      %vm2744 = vcmask 261120
      %v2746 = vsel %vm2744, %v2713, %v2189
      %v2748 = vsel %vm2744, %v2715, %v2191
      %v2750 = vsel %vm2744, %v2717, %v2193
      %v2752 = vsel %vm2744, %v2719, %v2195
      %v2754 = vsel %vm2744, %v2721, %v2197
      %v2756 = vsel %vm2744, %v2723, %v2199
      %v2758 = vsel %vm2744, %v2725, %v2201
      %v2760 = vsel %vm2744, %v2727, %v2203
      %v2762 = vsel %vm2744, %v2729, %v2205
      %v2764 = vsel %vm2744, %v2731, %v2207
      %v2766 = vsel %vm2744, %v2733, %v2209
      %v2768 = vsel %vm2744, %v2735, %v2211
      %v2770 = vsel %vm2744, %v2737, %v2213
      %v2772 = vsel %vm2744, %v2739, %v2215
      %v2774 = vsel %vm2744, %v2741, %v2217
      %v2776 = vsel %vm2744, %v2743, %v2219
      %vm2777 = vcmask 293888
      %v2779 = vsel %vm2777, %v2746, %v2233
      %v2781 = vsel %vm2777, %v2748, %v2235
      %v2783 = vsel %vm2777, %v2750, %v2237
      %v2785 = vsel %vm2777, %v2752, %v2239
      %v2787 = vsel %vm2777, %v2754, %v2241
      %v2789 = vsel %vm2777, %v2756, %v2243
      %v2791 = vsel %vm2777, %v2758, %v2245
      %v2793 = vsel %vm2777, %v2760, %v2247
      %v2795 = vsel %vm2777, %v2762, %v2249
      %v2797 = vsel %vm2777, %v2764, %v2251
      %v2799 = vsel %vm2777, %v2766, %v2253
      %v2801 = vsel %vm2777, %v2768, %v2255
      %v2803 = vsel %vm2777, %v2770, %v2257
      %v2805 = vsel %vm2777, %v2772, %v2259
      %v2807 = vsel %vm2777, %v2774, %v2261
      %v2809 = vsel %vm2777, %v2776, %v2263
      %vm2810 = vcmask 326656
      %v2812 = vsel %vm2810, %v2779, %v2277
      %v2814 = vsel %vm2810, %v2781, %v2279
      %v2816 = vsel %vm2810, %v2783, %v2281
      %v2818 = vsel %vm2810, %v2785, %v2283
      %v2820 = vsel %vm2810, %v2787, %v2285
      %v2822 = vsel %vm2810, %v2789, %v2287
      %v2824 = vsel %vm2810, %v2791, %v2289
      %v2826 = vsel %vm2810, %v2793, %v2291
      %v2828 = vsel %vm2810, %v2795, %v2293
      %v2830 = vsel %vm2810, %v2797, %v2295
      %v2832 = vsel %vm2810, %v2799, %v2297
      %v2834 = vsel %vm2810, %v2801, %v2299
      %v2836 = vsel %vm2810, %v2803, %v2301
      %v2838 = vsel %vm2810, %v2805, %v2303
      %v2840 = vsel %vm2810, %v2807, %v2305
      %v2842 = vsel %vm2810, %v2809, %v2307
      %vm2843 = vcmask 359424
      %v2845 = vsel %vm2843, %v2812, %v2321
      %v2847 = vsel %vm2843, %v2814, %v2323
      %v2849 = vsel %vm2843, %v2816, %v2325
      %v2851 = vsel %vm2843, %v2818, %v2327
      %v2853 = vsel %vm2843, %v2820, %v2329
      %v2855 = vsel %vm2843, %v2822, %v2331
      %v2857 = vsel %vm2843, %v2824, %v2333
      %v2859 = vsel %vm2843, %v2826, %v2335
      %v2861 = vsel %vm2843, %v2828, %v2337
      %v2863 = vsel %vm2843, %v2830, %v2339
      %v2865 = vsel %vm2843, %v2832, %v2341
      %v2867 = vsel %vm2843, %v2834, %v2343
      %v2869 = vsel %vm2843, %v2836, %v2345
      %v2871 = vsel %vm2843, %v2838, %v2347
      %v2873 = vsel %vm2843, %v2840, %v2349
      %v2875 = vsel %vm2843, %v2842, %v2351
      %vm2876 = vcmask 392192
      %v2878 = vsel %vm2876, %v2845, %v2358
      %v2880 = vsel %vm2876, %v2847, %v2360
      %v2882 = vsel %vm2876, %v2849, %v2362
      %v2884 = vsel %vm2876, %v2851, %v2364
      %v2886 = vsel %vm2876, %v2853, %v2366
      %v2888 = vsel %vm2876, %v2855, %v2368
      %v2890 = vsel %vm2876, %v2857, %v2370
      %v2892 = vsel %vm2876, %v2859, %v2372
      %v2894 = vsel %vm2876, %v2861, %v2374
      %v2896 = vsel %vm2876, %v2863, %v2376
      %v2898 = vsel %vm2876, %v2865, %v2378
      %v2900 = vsel %vm2876, %v2867, %v2380
      %v2902 = vsel %vm2876, %v2869, %v2382
      %v2904 = vsel %vm2876, %v2871, %v2384
      %v2906 = vsel %vm2876, %v2873, %v2386
      %v2908 = vsel %vm2876, %v2875, %v2388
      %vm2909 = vcmask 424960
      %v2911 = vsel %vm2909, %v2878, %v2395
      %v2913 = vsel %vm2909, %v2880, %v2397
      %v2915 = vsel %vm2909, %v2882, %v2399
      %v2917 = vsel %vm2909, %v2884, %v2401
      %v2919 = vsel %vm2909, %v2886, %v2403
      %v2921 = vsel %vm2909, %v2888, %v2405
      %v2923 = vsel %vm2909, %v2890, %v2407
      %v2925 = vsel %vm2909, %v2892, %v2409
      %v2927 = vsel %vm2909, %v2894, %v2411
      %v2929 = vsel %vm2909, %v2896, %v2413
      %v2931 = vsel %vm2909, %v2898, %v2415
      %v2933 = vsel %vm2909, %v2900, %v2417
      %v2935 = vsel %vm2909, %v2902, %v2419
      %v2937 = vsel %vm2909, %v2904, %v2421
      %v2939 = vsel %vm2909, %v2906, %v2423
      %v2941 = vsel %vm2909, %v2908, %v2425
      %vm2942 = vcmask 457728
      %v2944 = vsel %vm2942, %v2911, %v2432
      %v2946 = vsel %vm2942, %v2913, %v2434
      %v2948 = vsel %vm2942, %v2915, %v2436
      %v2950 = vsel %vm2942, %v2917, %v2438
      %v2952 = vsel %vm2942, %v2919, %v2440
      %v2954 = vsel %vm2942, %v2921, %v2442
      %v2956 = vsel %vm2942, %v2923, %v2444
      %v2958 = vsel %vm2942, %v2925, %v2446
      %v2960 = vsel %vm2942, %v2927, %v2448
      %v2962 = vsel %vm2942, %v2929, %v2450
      %v2964 = vsel %vm2942, %v2931, %v2452
      %v2966 = vsel %vm2942, %v2933, %v2454
      %v2968 = vsel %vm2942, %v2935, %v2456
      %v2970 = vsel %vm2942, %v2937, %v2458
      %v2972 = vsel %vm2942, %v2939, %v2460
      %v2974 = vsel %vm2942, %v2941, %v2462
      %vm2975 = vcmask 490496
      %v2977 = vsel %vm2975, %v2944, %v2466
      %v2979 = vsel %vm2975, %v2946, %v2468
      %v2981 = vsel %vm2975, %v2948, %v2470
      %v2983 = vsel %vm2975, %v2950, %v2472
      %v2985 = vsel %vm2975, %v2952, %v2474
      %v2987 = vsel %vm2975, %v2954, %v2476
      %v2989 = vsel %vm2975, %v2956, %v2478
      %v2991 = vsel %vm2975, %v2958, %v2480
      %v2993 = vsel %vm2975, %v2960, %v2482
      %v2995 = vsel %vm2975, %v2962, %v2484
      %v2997 = vsel %vm2975, %v2964, %v2486
      %v2999 = vsel %vm2975, %v2966, %v2488
      %v3001 = vsel %vm2975, %v2968, %v2490
      %v3003 = vsel %vm2975, %v2970, %v2492
      %v3005 = vsel %vm2975, %v2972, %v2494
      %v3007 = vsel %vm2975, %v2974, %v2496
      %v3008 = vunpack.c.l.b16 %v1529
      %v3009 = vpack.c.b16 %v3008, %v2389
      %v3010 = vunpack.c.l.b16 %v1535
      %v3011 = vpack.c.b16 %v3010, %v2426
      %3012 = vrot.lane.b32.xlu0 %v1901, 4
      %v3013 = vpop.permute.xlu0 %3012
      %3014 = vrot.lane.b32.xlu0 %v1902, 4
      %v3015 = vpop.permute.xlu0 %3014
      %3016 = vrot.lane.b32.xlu0 %v1903, 4
      %v3017 = vpop.permute.xlu0 %3016
      %3018 = vrot.lane.b32.xlu0 %v2185, 4
      %v3019 = vpop.permute.xlu0 %3018
      %3020 = vrot.lane.b32.xlu0 %v1905, 4
      %v3021 = vpop.permute.xlu0 %3020
      %3022 = vrot.lane.b32.xlu0 %v1906, 4
      %v3023 = vpop.permute.xlu0 %3022
      %3024 = vrot.lane.b32.xlu0 %v1907, 4
      %v3025 = vpop.permute.xlu0 %3024
      %3026 = vrot.lane.b32.xlu0 %v2186, 4
      %v3027 = vpop.permute.xlu0 %3026
      %3028 = vrot.lane.b32.xlu0 %v1909, 4
      %v3029 = vpop.permute.xlu0 %3028
      %3030 = vrot.lane.b32.xlu0 %v1910, 4
      %v3031 = vpop.permute.xlu0 %3030
      %3032 = vrot.lane.b32.xlu0 %v1911, 4
      %v3033 = vpop.permute.xlu0 %3032
      %3034 = vrot.lane.b32.xlu0 %v2187, 4
      %v3035 = vpop.permute.xlu0 %3034
      %3036 = vrot.lane.b32.xlu0 %v2317, 4
      %v3037 = vpop.permute.xlu0 %3036
      %3038 = vrot.lane.b32.xlu0 %v2318, 4
      %v3039 = vpop.permute.xlu0 %3038
      %3040 = vrot.lane.b32.xlu0 %v2319, 4
      %v3041 = vpop.permute.xlu0 %3040
      %3042 = vrot.lane.b32.xlu0 %v3011, 4
      %v3043 = vpop.permute.xlu0 %3042
      %v3044 = vunpack.c.l.b16 %v510
      %v3045 = vunpack.c.l.b16 %v512
      %v3046 = vunpack.c.l.b16 %v514
      %v3047 = vunpack.c.l.b16 %v516
      %v3048 = vunpack.c.l.b16 %v518
      %v3049 = vunpack.c.l.b16 %v520
      %v3050 = vunpack.c.l.b16 %v522
      %v3051 = vunpack.c.l.b16 %v524
      %v3052 = vpack.c.b16 %v3045, %v3044
      %v3053 = vpack.c.b16 %v3047, %v3046
      %v3054 = vpack.c.b16 %v3049, %v3048
      %v3055 = vpack.c.b16 %v3051, %v3050
      %3056 = vrot.lane.b32.xlu0 %v1776, 8
      %v3057 = vpop.permute.xlu0 %3056
      %3058 = vrot.lane.b32.xlu0 %v1777, 8
      %v3059 = vpop.permute.xlu0 %3058
      %3060 = vrot.lane.b32.xlu0 %v1778, 8
      %v3061 = vpop.permute.xlu0 %3060
      %3062 = vrot.lane.b32.xlu0 %v1779, 8
      %v3063 = vpop.permute.xlu0 %3062
      %3064 = vrot.lane.b32.xlu0 %v1780, 8
      %v3065 = vpop.permute.xlu0 %3064
      %3066 = vrot.lane.b32.xlu0 %v1781, 8
      %v3067 = vpop.permute.xlu0 %3066
      %3068 = vrot.lane.b32.xlu0 %v1782, 8
      %v3069 = vpop.permute.xlu0 %3068
      %3070 = vrot.lane.b32.xlu0 %v1783, 8
      %v3071 = vpop.permute.xlu0 %3070
      %3072 = vrot.lane.b32.xlu0 %v2228, 8
      %v3073 = vpop.permute.xlu0 %3072
      %3074 = vrot.lane.b32.xlu0 %v2229, 8
      %v3075 = vpop.permute.xlu0 %3074
      %3076 = vrot.lane.b32.xlu0 %v2230, 8
      %v3077 = vpop.permute.xlu0 %3076
      %3078 = vrot.lane.b32.xlu0 %v2231, 8
      %v3079 = vpop.permute.xlu0 %3078
      %3080 = vrot.lane.b32.xlu0 %v3052, 8
      %v3081 = vpop.permute.xlu0 %3080
      %3082 = vrot.lane.b32.xlu0 %v3053, 8
      %v3083 = vpop.permute.xlu0 %3082
      %3084 = vrot.lane.b32.xlu0 %v3054, 8
      %v3085 = vpop.permute.xlu0 %3084
      %3086 = vrot.lane.b32.xlu0 %v3055, 8
      %v3087 = vpop.permute.xlu0 %3086
      %v3088 = vunpack.c.l.b16 %v1549
      %v3089 = vunpack.c.l.b16 %v1563
      %v3090 = vunpack.c.l.b16 %v1577
      %v3091 = vunpack.c.l.b16 %v1591
      %v3092 = vunpack.c.l.b16 %v1605
      %v3093 = vunpack.c.l.b16 %v1619
      %v3094 = vunpack.c.l.b16 %v1633
      %v3095 = vunpack.c.l.b16 %v1647
      %v3096 = vpack.c.b16 %v3089, %v3088
      %v3097 = vpack.c.b16 %v3091, %v3090
      %v3098 = vpack.c.b16 %v3093, %v3092
      %v3099 = vpack.c.b16 %v3095, %v3094
      %3100 = vrot.lane.b32.xlu0 %v1824, 12
      %v3101 = vpop.permute.xlu0 %3100
      %3102 = vrot.lane.b32.xlu0 %v1825, 12
      %v3103 = vpop.permute.xlu0 %3102
      %3104 = vrot.lane.b32.xlu0 %v1826, 12
      %v3105 = vpop.permute.xlu0 %3104
      %3106 = vrot.lane.b32.xlu0 %v1827, 12
      %v3107 = vpop.permute.xlu0 %3106
      %3108 = vrot.lane.b32.xlu0 %v1828, 12
      %v3109 = vpop.permute.xlu0 %3108
      %3110 = vrot.lane.b32.xlu0 %v1829, 12
      %v3111 = vpop.permute.xlu0 %3110
      %3112 = vrot.lane.b32.xlu0 %v1830, 12
      %v3113 = vpop.permute.xlu0 %3112
      %3114 = vrot.lane.b32.xlu0 %v1831, 12
      %v3115 = vpop.permute.xlu0 %3114
      %3116 = vrot.lane.b32.xlu0 %v2272, 12
      %v3117 = vpop.permute.xlu0 %3116
      %3118 = vrot.lane.b32.xlu0 %v2273, 12
      %v3119 = vpop.permute.xlu0 %3118
      %3120 = vrot.lane.b32.xlu0 %v2274, 12
      %v3121 = vpop.permute.xlu0 %3120
      %3122 = vrot.lane.b32.xlu0 %v2275, 12
      %v3123 = vpop.permute.xlu0 %3122
      %3124 = vrot.lane.b32.xlu0 %v3096, 12
      %v3125 = vpop.permute.xlu0 %3124
      %3126 = vrot.lane.b32.xlu0 %v3097, 12
      %v3127 = vpop.permute.xlu0 %3126
      %3128 = vrot.lane.b32.xlu0 %v3098, 12
      %v3129 = vpop.permute.xlu0 %3128
      %3130 = vrot.lane.b32.xlu0 %v3099, 12
      %v3131 = vpop.permute.xlu0 %3130
      %v3132 = vunpack.c.l.b16 %v1667
      %v3133 = vunpack.c.l.b16 %v1671
      %v3134 = vunpack.c.l.b16 %v1675
      %v3135 = vunpack.c.l.b16 %v1679
      %v3136 = vunpack.c.l.b16 %v1683
      %v3137 = vunpack.c.l.b16 %v1687
      %v3138 = vunpack.c.l.b16 %v1691
      %v3139 = vunpack.c.l.b16 %v1695
      %v3140 = vpack.c.b16 %v3133, %v3132
      %v3141 = vpack.c.b16 %v3135, %v3134
      %v3142 = vpack.c.b16 %v3137, %v3136
      %v3143 = vpack.c.b16 %v3139, %v3138
      %3144 = vrot.lane.b32.xlu0 %v1904, 16
      %v3145 = vpop.permute.xlu0 %3144
      %3146 = vrot.lane.b32.xlu0 %v1905, 16
      %v3147 = vpop.permute.xlu0 %3146
      %3148 = vrot.lane.b32.xlu0 %v1906, 16
      %v3149 = vpop.permute.xlu0 %3148
      %3150 = vrot.lane.b32.xlu0 %v1907, 16
      %v3151 = vpop.permute.xlu0 %3150
      %3152 = vrot.lane.b32.xlu0 %v1908, 16
      %v3153 = vpop.permute.xlu0 %3152
      %3154 = vrot.lane.b32.xlu0 %v1909, 16
      %v3155 = vpop.permute.xlu0 %3154
      %3156 = vrot.lane.b32.xlu0 %v1910, 16
      %v3157 = vpop.permute.xlu0 %3156
      %3158 = vrot.lane.b32.xlu0 %v1911, 16
      %v3159 = vpop.permute.xlu0 %3158
      %3160 = vrot.lane.b32.xlu0 %v2316, 16
      %v3161 = vpop.permute.xlu0 %3160
      %3162 = vrot.lane.b32.xlu0 %v2317, 16
      %v3163 = vpop.permute.xlu0 %3162
      %3164 = vrot.lane.b32.xlu0 %v2318, 16
      %v3165 = vpop.permute.xlu0 %3164
      %3166 = vrot.lane.b32.xlu0 %v2319, 16
      %v3167 = vpop.permute.xlu0 %3166
      %3168 = vrot.lane.b32.xlu0 %v3140, 16
      %v3169 = vpop.permute.xlu0 %3168
      %3170 = vrot.lane.b32.xlu0 %v3141, 16
      %v3171 = vpop.permute.xlu0 %3170
      %3172 = vrot.lane.b32.xlu0 %v3142, 16
      %v3173 = vpop.permute.xlu0 %3172
      %3174 = vrot.lane.b32.xlu0 %v3143, 16
      %v3175 = vpop.permute.xlu0 %3174
      %v3176 = vunpack.c.l.b16 %v526
      %v3177 = vpack.c.b16 %v3046, %v3045
      %v3178 = vpack.c.b16 %v3048, %v3047
      %v3179 = vpack.c.b16 %v3050, %v3049
      %v3180 = vpack.c.b16 %v3176, %v3051
      %3181 = vrot.lane.b32.xlu0 %v1956, 20
      %v3182 = vpop.permute.xlu0 %3181
      %3183 = vrot.lane.b32.xlu0 %v1957, 20
      %v3184 = vpop.permute.xlu0 %3183
      %3185 = vrot.lane.b32.xlu0 %v1958, 20
      %v3186 = vpop.permute.xlu0 %3185
      %3187 = vrot.lane.b32.xlu0 %v1959, 20
      %v3188 = vpop.permute.xlu0 %3187
      %3189 = vrot.lane.b32.xlu0 %v1960, 20
      %v3190 = vpop.permute.xlu0 %3189
      %3191 = vrot.lane.b32.xlu0 %v1961, 20
      %v3192 = vpop.permute.xlu0 %3191
      %3193 = vrot.lane.b32.xlu0 %v1962, 20
      %v3194 = vpop.permute.xlu0 %3193
      %3195 = vrot.lane.b32.xlu0 %v1963, 20
      %v3196 = vpop.permute.xlu0 %3195
      %3197 = vrot.lane.b32.xlu0 %v2353, 20
      %v3198 = vpop.permute.xlu0 %3197
      %3199 = vrot.lane.b32.xlu0 %v2354, 20
      %v3200 = vpop.permute.xlu0 %3199
      %3201 = vrot.lane.b32.xlu0 %v2355, 20
      %v3202 = vpop.permute.xlu0 %3201
      %3203 = vrot.lane.b32.xlu0 %v2356, 20
      %v3204 = vpop.permute.xlu0 %3203
      %3205 = vrot.lane.b32.xlu0 %v3177, 20
      %v3206 = vpop.permute.xlu0 %3205
      %3207 = vrot.lane.b32.xlu0 %v3178, 20
      %v3208 = vpop.permute.xlu0 %3207
      %3209 = vrot.lane.b32.xlu0 %v3179, 20
      %v3210 = vpop.permute.xlu0 %3209
      %3211 = vrot.lane.b32.xlu0 %v3180, 20
      %v3212 = vpop.permute.xlu0 %3211
      %v3213 = vunpack.c.l.b16 %v1709
      %v3214 = vpack.c.b16 %v3090, %v3089
      %v3215 = vpack.c.b16 %v3092, %v3091
      %v3216 = vpack.c.b16 %v3094, %v3093
      %v3217 = vpack.c.b16 %v3213, %v3095
      %3218 = vrot.lane.b32.xlu0 %v2008, 24
      %v3219 = vpop.permute.xlu0 %3218
      %3220 = vrot.lane.b32.xlu0 %v2009, 24
      %v3221 = vpop.permute.xlu0 %3220
      %3222 = vrot.lane.b32.xlu0 %v2010, 24
      %v3223 = vpop.permute.xlu0 %3222
      %3224 = vrot.lane.b32.xlu0 %v2011, 24
      %v3225 = vpop.permute.xlu0 %3224
      %3226 = vrot.lane.b32.xlu0 %v2012, 24
      %v3227 = vpop.permute.xlu0 %3226
      %3228 = vrot.lane.b32.xlu0 %v2013, 24
      %v3229 = vpop.permute.xlu0 %3228
      %3230 = vrot.lane.b32.xlu0 %v2014, 24
      %v3231 = vpop.permute.xlu0 %3230
      %3232 = vrot.lane.b32.xlu0 %v2015, 24
      %v3233 = vpop.permute.xlu0 %3232
      %3234 = vrot.lane.b32.xlu0 %v2390, 24
      %v3235 = vpop.permute.xlu0 %3234
      %3236 = vrot.lane.b32.xlu0 %v2391, 24
      %v3237 = vpop.permute.xlu0 %3236
      %3238 = vrot.lane.b32.xlu0 %v2392, 24
      %v3239 = vpop.permute.xlu0 %3238
      %3240 = vrot.lane.b32.xlu0 %v2393, 24
      %v3241 = vpop.permute.xlu0 %3240
      %3242 = vrot.lane.b32.xlu0 %v3214, 24
      %v3243 = vpop.permute.xlu0 %3242
      %3244 = vrot.lane.b32.xlu0 %v3215, 24
      %v3245 = vpop.permute.xlu0 %3244
      %3246 = vrot.lane.b32.xlu0 %v3216, 24
      %v3247 = vpop.permute.xlu0 %3246
      %3248 = vrot.lane.b32.xlu0 %v3217, 24
      %v3249 = vpop.permute.xlu0 %3248
      %v3250 = vunpack.c.l.b16 %v1715
      %v3251 = vpack.c.b16 %v3134, %v3133
      %v3252 = vpack.c.b16 %v3136, %v3135
      %v3253 = vpack.c.b16 %v3138, %v3137
      %v3254 = vpack.c.b16 %v3250, %v3139
      %3255 = vrot.lane.b32.xlu0 %v2060, 28
      %v3256 = vpop.permute.xlu0 %3255
      %3257 = vrot.lane.b32.xlu0 %v2061, 28
      %v3258 = vpop.permute.xlu0 %3257
      %3259 = vrot.lane.b32.xlu0 %v2062, 28
      %v3260 = vpop.permute.xlu0 %3259
      %3261 = vrot.lane.b32.xlu0 %v2063, 28
      %v3262 = vpop.permute.xlu0 %3261
      %3263 = vrot.lane.b32.xlu0 %v2064, 28
      %v3264 = vpop.permute.xlu0 %3263
      %3265 = vrot.lane.b32.xlu0 %v2065, 28
      %v3266 = vpop.permute.xlu0 %3265
      %3267 = vrot.lane.b32.xlu0 %v2066, 28
      %v3268 = vpop.permute.xlu0 %3267
      %3269 = vrot.lane.b32.xlu0 %v2067, 28
      %v3270 = vpop.permute.xlu0 %3269
      %3271 = vrot.lane.b32.xlu0 %v2427, 28
      %v3272 = vpop.permute.xlu0 %3271
      %3273 = vrot.lane.b32.xlu0 %v2428, 28
      %v3274 = vpop.permute.xlu0 %3273
      %3275 = vrot.lane.b32.xlu0 %v2429, 28
      %v3276 = vpop.permute.xlu0 %3275
      %3277 = vrot.lane.b32.xlu0 %v2430, 28
      %v3278 = vpop.permute.xlu0 %3277
      %3279 = vrot.lane.b32.xlu0 %v3251, 28
      %v3280 = vpop.permute.xlu0 %3279
      %3281 = vrot.lane.b32.xlu0 %v3252, 28
      %v3282 = vpop.permute.xlu0 %3281
      %3283 = vrot.lane.b32.xlu0 %v3253, 28
      %v3284 = vpop.permute.xlu0 %3283
      %3285 = vrot.lane.b32.xlu0 %v3254, 28
      %v3286 = vpop.permute.xlu0 %3285
      %v3287 = vunpack.c.l.b16 %v528
      %v3288 = vpack.c.b16 %v3287, %v3176
      %3289 = vrot.lane.b32.xlu0 %v1777, 32
      %v3290 = vpop.permute.xlu0 %3289
      %3291 = vrot.lane.b32.xlu0 %v1778, 32
      %v3292 = vpop.permute.xlu0 %3291
      %3293 = vrot.lane.b32.xlu0 %v1779, 32
      %v3294 = vpop.permute.xlu0 %3293
      %3295 = vrot.lane.b32.xlu0 %v2106, 32
      %v3296 = vpop.permute.xlu0 %3295
      %3297 = vrot.lane.b32.xlu0 %v1781, 32
      %v3298 = vpop.permute.xlu0 %3297
      %3299 = vrot.lane.b32.xlu0 %v1782, 32
      %v3300 = vpop.permute.xlu0 %3299
      %3301 = vrot.lane.b32.xlu0 %v1783, 32
      %v3302 = vpop.permute.xlu0 %3301
      %3303 = vrot.lane.b32.xlu0 %v2107, 32
      %v3304 = vpop.permute.xlu0 %3303
      %3305 = vrot.lane.b32.xlu0 %v2229, 32
      %v3306 = vpop.permute.xlu0 %3305
      %3307 = vrot.lane.b32.xlu0 %v2230, 32
      %v3308 = vpop.permute.xlu0 %3307
      %3309 = vrot.lane.b32.xlu0 %v2231, 32
      %v3310 = vpop.permute.xlu0 %3309
      %3311 = vrot.lane.b32.xlu0 %v2464, 32
      %v3312 = vpop.permute.xlu0 %3311
      %3313 = vrot.lane.b32.xlu0 %v3053, 32
      %v3314 = vpop.permute.xlu0 %3313
      %3315 = vrot.lane.b32.xlu0 %v3054, 32
      %v3316 = vpop.permute.xlu0 %3315
      %3317 = vrot.lane.b32.xlu0 %v3055, 32
      %v3318 = vpop.permute.xlu0 %3317
      %3319 = vrot.lane.b32.xlu0 %v3288, 32
      %v3320 = vpop.permute.xlu0 %3319
      %v3321 = vunpack.c.l.b16 %v1729
      %v3322 = vpack.c.b16 %v3321, %v3213
      %3323 = vrot.lane.b32.xlu0 %v1825, 36
      %v3324 = vpop.permute.xlu0 %3323
      %3325 = vrot.lane.b32.xlu0 %v1826, 36
      %v3326 = vpop.permute.xlu0 %3325
      %3327 = vrot.lane.b32.xlu0 %v1827, 36
      %v3328 = vpop.permute.xlu0 %3327
      %3329 = vrot.lane.b32.xlu0 %v2146, 36
      %v3330 = vpop.permute.xlu0 %3329
      %3331 = vrot.lane.b32.xlu0 %v1829, 36
      %v3332 = vpop.permute.xlu0 %3331
      %3333 = vrot.lane.b32.xlu0 %v1830, 36
      %v3334 = vpop.permute.xlu0 %3333
      %3335 = vrot.lane.b32.xlu0 %v1831, 36
      %v3336 = vpop.permute.xlu0 %3335
      %3337 = vrot.lane.b32.xlu0 %v2147, 36
      %v3338 = vpop.permute.xlu0 %3337
      %3339 = vrot.lane.b32.xlu0 %v2273, 36
      %v3340 = vpop.permute.xlu0 %3339
      %3341 = vrot.lane.b32.xlu0 %v2274, 36
      %v3342 = vpop.permute.xlu0 %3341
      %3343 = vrot.lane.b32.xlu0 %v2275, 36
      %v3344 = vpop.permute.xlu0 %3343
      %3345 = vrot.lane.b32.xlu0 %v3009, 36
      %v3346 = vpop.permute.xlu0 %3345
      %3347 = vrot.lane.b32.xlu0 %v3097, 36
      %v3348 = vpop.permute.xlu0 %3347
      %3349 = vrot.lane.b32.xlu0 %v3098, 36
      %v3350 = vpop.permute.xlu0 %3349
      %3351 = vrot.lane.b32.xlu0 %v3099, 36
      %v3352 = vpop.permute.xlu0 %3351
      %3353 = vrot.lane.b32.xlu0 %v3322, 36
      %v3354 = vpop.permute.xlu0 %3353
      %v3355 = vunpack.c.l.b16 %v1735
      %v3356 = vpack.c.b16 %v3355, %v3250
      %3357 = vrot.lane.b32.xlu0 %v1905, 40
      %v3358 = vpop.permute.xlu0 %3357
      %3359 = vrot.lane.b32.xlu0 %v1906, 40
      %v3360 = vpop.permute.xlu0 %3359
      %3361 = vrot.lane.b32.xlu0 %v1907, 40
      %v3362 = vpop.permute.xlu0 %3361
      %3363 = vrot.lane.b32.xlu0 %v2186, 40
      %v3364 = vpop.permute.xlu0 %3363
      %3365 = vrot.lane.b32.xlu0 %v1909, 40
      %v3366 = vpop.permute.xlu0 %3365
      %3367 = vrot.lane.b32.xlu0 %v1910, 40
      %v3368 = vpop.permute.xlu0 %3367
      %3369 = vrot.lane.b32.xlu0 %v1911, 40
      %v3370 = vpop.permute.xlu0 %3369
      %3371 = vrot.lane.b32.xlu0 %v2187, 40
      %v3372 = vpop.permute.xlu0 %3371
      %3373 = vrot.lane.b32.xlu0 %v2317, 40
      %v3374 = vpop.permute.xlu0 %3373
      %3375 = vrot.lane.b32.xlu0 %v2318, 40
      %v3376 = vpop.permute.xlu0 %3375
      %3377 = vrot.lane.b32.xlu0 %v2319, 40
      %v3378 = vpop.permute.xlu0 %3377
      %3379 = vrot.lane.b32.xlu0 %v3011, 40
      %v3380 = vpop.permute.xlu0 %3379
      %3381 = vrot.lane.b32.xlu0 %v3141, 40
      %v3382 = vpop.permute.xlu0 %3381
      %3383 = vrot.lane.b32.xlu0 %v3142, 40
      %v3384 = vpop.permute.xlu0 %3383
      %3385 = vrot.lane.b32.xlu0 %v3143, 40
      %v3386 = vpop.permute.xlu0 %3385
      %3387 = vrot.lane.b32.xlu0 %v3356, 40
      %v3388 = vpop.permute.xlu0 %3387
      %v3391 = vsel %vm2497, %v1821, %v3013
      %v3394 = vsel %vm2497, %v1822, %v3015
      %v3397 = vsel %vm2497, %v1823, %v3017
      %v3400 = vsel %vm2497, %v2145, %v3019
      %v3403 = vsel %vm2497, %v1825, %v3021
      %v3406 = vsel %vm2497, %v1826, %v3023
      %v3409 = vsel %vm2497, %v1827, %v3025
      %v3412 = vsel %vm2497, %v2146, %v3027
      %v3415 = vsel %vm2497, %v1829, %v3029
      %v3418 = vsel %vm2497, %v1830, %v3031
      %v3421 = vsel %vm2497, %v1831, %v3033
      %v3424 = vsel %vm2497, %v2147, %v3035
      %v3427 = vsel %vm2497, %v2273, %v3037
      %v3430 = vsel %vm2497, %v2274, %v3039
      %v3433 = vsel %vm2497, %v2275, %v3041
      %v3436 = vsel %vm2497, %v3009, %v3043
      %v3438 = vsel %vm2546, %v3391, %v3057
      %v3440 = vsel %vm2546, %v3394, %v3059
      %v3442 = vsel %vm2546, %v3397, %v3061
      %v3444 = vsel %vm2546, %v3400, %v3063
      %v3446 = vsel %vm2546, %v3403, %v3065
      %v3448 = vsel %vm2546, %v3406, %v3067
      %v3450 = vsel %vm2546, %v3409, %v3069
      %v3452 = vsel %vm2546, %v3412, %v3071
      %v3454 = vsel %vm2546, %v3415, %v3073
      %v3456 = vsel %vm2546, %v3418, %v3075
      %v3458 = vsel %vm2546, %v3421, %v3077
      %v3460 = vsel %vm2546, %v3424, %v3079
      %v3462 = vsel %vm2546, %v3427, %v3081
      %v3464 = vsel %vm2546, %v3430, %v3083
      %v3466 = vsel %vm2546, %v3433, %v3085
      %v3468 = vsel %vm2546, %v3436, %v3087
      %v3470 = vsel %vm2579, %v3438, %v3101
      %v3472 = vsel %vm2579, %v3440, %v3103
      %v3474 = vsel %vm2579, %v3442, %v3105
      %v3476 = vsel %vm2579, %v3444, %v3107
      %v3478 = vsel %vm2579, %v3446, %v3109
      %v3480 = vsel %vm2579, %v3448, %v3111
      %v3482 = vsel %vm2579, %v3450, %v3113
      %v3484 = vsel %vm2579, %v3452, %v3115
      %v3486 = vsel %vm2579, %v3454, %v3117
      %v3488 = vsel %vm2579, %v3456, %v3119
      %v3490 = vsel %vm2579, %v3458, %v3121
      %v3492 = vsel %vm2579, %v3460, %v3123
      %v3494 = vsel %vm2579, %v3462, %v3125
      %v3496 = vsel %vm2579, %v3464, %v3127
      %v3498 = vsel %vm2579, %v3466, %v3129
      %v3500 = vsel %vm2579, %v3468, %v3131
      %v3502 = vsel %vm2612, %v3470, %v3145
      %v3504 = vsel %vm2612, %v3472, %v3147
      %v3506 = vsel %vm2612, %v3474, %v3149
      %v3508 = vsel %vm2612, %v3476, %v3151
      %v3510 = vsel %vm2612, %v3478, %v3153
      %v3512 = vsel %vm2612, %v3480, %v3155
      %v3514 = vsel %vm2612, %v3482, %v3157
      %v3516 = vsel %vm2612, %v3484, %v3159
      %v3518 = vsel %vm2612, %v3486, %v3161
      %v3520 = vsel %vm2612, %v3488, %v3163
      %v3522 = vsel %vm2612, %v3490, %v3165
      %v3524 = vsel %vm2612, %v3492, %v3167
      %v3526 = vsel %vm2612, %v3494, %v3169
      %v3528 = vsel %vm2612, %v3496, %v3171
      %v3530 = vsel %vm2612, %v3498, %v3173
      %v3532 = vsel %vm2612, %v3500, %v3175
      %v3534 = vsel %vm2645, %v3502, %v3182
      %v3536 = vsel %vm2645, %v3504, %v3184
      %v3538 = vsel %vm2645, %v3506, %v3186
      %v3540 = vsel %vm2645, %v3508, %v3188
      %v3542 = vsel %vm2645, %v3510, %v3190
      %v3544 = vsel %vm2645, %v3512, %v3192
      %v3546 = vsel %vm2645, %v3514, %v3194
      %v3548 = vsel %vm2645, %v3516, %v3196
      %v3550 = vsel %vm2645, %v3518, %v3198
      %v3552 = vsel %vm2645, %v3520, %v3200
      %v3554 = vsel %vm2645, %v3522, %v3202
      %v3556 = vsel %vm2645, %v3524, %v3204
      %v3558 = vsel %vm2645, %v3526, %v3206
      %v3560 = vsel %vm2645, %v3528, %v3208
      %v3562 = vsel %vm2645, %v3530, %v3210
      %v3564 = vsel %vm2645, %v3532, %v3212
      %v3566 = vsel %vm2678, %v3534, %v3219
      %v3568 = vsel %vm2678, %v3536, %v3221
      %v3570 = vsel %vm2678, %v3538, %v3223
      %v3572 = vsel %vm2678, %v3540, %v3225
      %v3574 = vsel %vm2678, %v3542, %v3227
      %v3576 = vsel %vm2678, %v3544, %v3229
      %v3578 = vsel %vm2678, %v3546, %v3231
      %v3580 = vsel %vm2678, %v3548, %v3233
      %v3582 = vsel %vm2678, %v3550, %v3235
      %v3584 = vsel %vm2678, %v3552, %v3237
      %v3586 = vsel %vm2678, %v3554, %v3239
      %v3588 = vsel %vm2678, %v3556, %v3241
      %v3590 = vsel %vm2678, %v3558, %v3243
      %v3592 = vsel %vm2678, %v3560, %v3245
      %v3594 = vsel %vm2678, %v3562, %v3247
      %v3596 = vsel %vm2678, %v3564, %v3249
      %v3598 = vsel %vm2711, %v3566, %v3256
      %v3600 = vsel %vm2711, %v3568, %v3258
      %v3602 = vsel %vm2711, %v3570, %v3260
      %v3604 = vsel %vm2711, %v3572, %v3262
      %v3606 = vsel %vm2711, %v3574, %v3264
      %v3608 = vsel %vm2711, %v3576, %v3266
      %v3610 = vsel %vm2711, %v3578, %v3268
      %v3612 = vsel %vm2711, %v3580, %v3270
      %v3614 = vsel %vm2711, %v3582, %v3272
      %v3616 = vsel %vm2711, %v3584, %v3274
      %v3618 = vsel %vm2711, %v3586, %v3276
      %v3620 = vsel %vm2711, %v3588, %v3278
      %v3622 = vsel %vm2711, %v3590, %v3280
      %v3624 = vsel %vm2711, %v3592, %v3282
      %v3626 = vsel %vm2711, %v3594, %v3284
      %v3628 = vsel %vm2711, %v3596, %v3286
      %v3630 = vsel %vm2744, %v3598, %v3290
      %v3632 = vsel %vm2744, %v3600, %v3292
      %v3634 = vsel %vm2744, %v3602, %v3294
      %v3636 = vsel %vm2744, %v3604, %v3296
      %v3638 = vsel %vm2744, %v3606, %v3298
      %v3640 = vsel %vm2744, %v3608, %v3300
      %v3642 = vsel %vm2744, %v3610, %v3302
      %v3644 = vsel %vm2744, %v3612, %v3304
      %v3646 = vsel %vm2744, %v3614, %v3306
      %v3648 = vsel %vm2744, %v3616, %v3308
      %v3650 = vsel %vm2744, %v3618, %v3310
      %v3652 = vsel %vm2744, %v3620, %v3312
      %v3654 = vsel %vm2744, %v3622, %v3314
      %v3656 = vsel %vm2744, %v3624, %v3316
      %v3658 = vsel %vm2744, %v3626, %v3318
      %v3660 = vsel %vm2744, %v3628, %v3320
      %v3662 = vsel %vm2777, %v3630, %v3324
      %v3664 = vsel %vm2777, %v3632, %v3326
      %v3666 = vsel %vm2777, %v3634, %v3328
      %v3668 = vsel %vm2777, %v3636, %v3330
      %v3670 = vsel %vm2777, %v3638, %v3332
      %v3672 = vsel %vm2777, %v3640, %v3334
      %v3674 = vsel %vm2777, %v3642, %v3336
      %v3676 = vsel %vm2777, %v3644, %v3338
      %v3678 = vsel %vm2777, %v3646, %v3340
      %v3680 = vsel %vm2777, %v3648, %v3342
      %v3682 = vsel %vm2777, %v3650, %v3344
      %v3684 = vsel %vm2777, %v3652, %v3346
      %v3686 = vsel %vm2777, %v3654, %v3348
      %v3688 = vsel %vm2777, %v3656, %v3350
      %v3690 = vsel %vm2777, %v3658, %v3352
      %v3692 = vsel %vm2777, %v3660, %v3354
      %v3694 = vsel %vm2810, %v3662, %v3358
      %v3696 = vsel %vm2810, %v3664, %v3360
      %v3698 = vsel %vm2810, %v3666, %v3362
      %v3700 = vsel %vm2810, %v3668, %v3364
      %v3702 = vsel %vm2810, %v3670, %v3366
      %v3704 = vsel %vm2810, %v3672, %v3368
      %v3706 = vsel %vm2810, %v3674, %v3370
      %v3708 = vsel %vm2810, %v3676, %v3372
      %v3710 = vsel %vm2810, %v3678, %v3374
      %v3712 = vsel %vm2810, %v3680, %v3376
      %v3714 = vsel %vm2810, %v3682, %v3378
      %v3716 = vsel %vm2810, %v3684, %v3380
      %v3718 = vsel %vm2810, %v3686, %v3382
      %v3720 = vsel %vm2810, %v3688, %v3384
      %v3722 = vsel %vm2810, %v3690, %v3386
      %v3724 = vsel %vm2810, %v3692, %v3388
      %v3726 = vsel %vm2843, %v3694, 0
      %v3727 = vsel %vm2843, %v3696, 0
      %v3728 = vsel %vm2843, %v3698, 0
      %v3729 = vsel %vm2843, %v3700, 0
      %v3730 = vsel %vm2843, %v3702, 0
      %v3731 = vsel %vm2843, %v3704, 0
      %v3732 = vsel %vm2843, %v3706, 0
      %v3733 = vsel %vm2843, %v3708, 0
      %v3734 = vsel %vm2843, %v3710, 0
      %v3735 = vsel %vm2843, %v3712, 0
      %v3736 = vsel %vm2843, %v3714, 0
      %v3737 = vsel %vm2843, %v3716, 0
      %v3738 = vsel %vm2843, %v3718, 0
      %v3739 = vsel %vm2843, %v3720, 0
      %v3740 = vsel %vm2843, %v3722, 0
      %v3741 = vsel %vm2843, %v3724, 0
      %3758 = vrot.lane.b32.xlu0 %v3726, 64
      %v3759 = vpop.permute.xlu0 %3758
      %3760 = vrot.lane.b32.xlu0 %v3727, 64
      %v3761 = vpop.permute.xlu0 %3760
      %3762 = vrot.lane.b32.xlu0 %v3728, 64
      %v3763 = vpop.permute.xlu0 %3762
      %3764 = vrot.lane.b32.xlu0 %v3729, 64
      %v3765 = vpop.permute.xlu0 %3764
      %3766 = vrot.lane.b32.xlu0 %v3730, 64
      %v3767 = vpop.permute.xlu0 %3766
      %3768 = vrot.lane.b32.xlu0 %v3731, 64
      %v3769 = vpop.permute.xlu0 %3768
      %3770 = vrot.lane.b32.xlu0 %v3732, 64
      %v3771 = vpop.permute.xlu0 %3770
      %3772 = vrot.lane.b32.xlu0 %v3733, 64
      %v3773 = vpop.permute.xlu0 %3772
      %3774 = vrot.lane.b32.xlu0 %v3734, 64
      %v3775 = vpop.permute.xlu0 %3774
      %3776 = vrot.lane.b32.xlu0 %v3735, 64
      %v3777 = vpop.permute.xlu0 %3776
      %3778 = vrot.lane.b32.xlu0 %v3736, 64
      %v3779 = vpop.permute.xlu0 %3778
      %3780 = vrot.lane.b32.xlu0 %v3737, 64
      %v3781 = vpop.permute.xlu0 %3780
      %3782 = vrot.lane.b32.xlu0 %v3738, 64
      %v3783 = vpop.permute.xlu0 %3782
      %3784 = vrot.lane.b32.xlu0 %v3739, 64
      %v3785 = vpop.permute.xlu0 %3784
      %3786 = vrot.lane.b32.xlu0 %v3740, 64
      %v3787 = vpop.permute.xlu0 %3786
      %3788 = vrot.lane.b32.xlu0 %v3741, 64
      %v3789 = vpop.permute.xlu0 %3788
      %vm3790 = vcmask 523264
      %v3792 = vsel %vm3790, %v2977, %v3759
      %v3795 = vsel %vm3790, %v2979, %v3761
      %v3798 = vsel %vm3790, %v2981, %v3763
      %v3801 = vsel %vm3790, %v2983, %v3765
      %v3804 = vsel %vm3790, %v2985, %v3767
      %v3807 = vsel %vm3790, %v2987, %v3769
      %v3810 = vsel %vm3790, %v2989, %v3771
      %v3813 = vsel %vm3790, %v2991, %v3773
      %v3816 = vsel %vm3790, %v2993, %v3775
      %v3819 = vsel %vm3790, %v2995, %v3777
      %v3822 = vsel %vm3790, %v2997, %v3779
      %v3825 = vsel %vm3790, %v2999, %v3781
      %v3828 = vsel %vm3790, %v3001, %v3783
      %v3831 = vsel %vm3790, %v3003, %v3785
      %v3834 = vsel %vm3790, %v3005, %v3787
      %v3837 = vsel %vm3790, %v3007, %v3789
      %v3839 = vld [vmem:[%s3] sm:$0xf]
      %v3840 = vld [vmem:[%s3 + $0x4] sm:$0xf]
      %v3841 = vld [vmem:[%s3 + $0x8] sm:$0xf]
      %v3842 = vld [vmem:[%s3 + $0xc] sm:$0xf]
      %v3843 = vld [vmem:[%s3 + $0x10] sm:$0xf]
      %v3844 = vld [vmem:[%s3 + $0x14] sm:$0xf]
      %v3845 = vld [vmem:[%s3 + $0x18] sm:$0xf]
      %v3846 = vld [vmem:[%s3 + $0x1c] sm:$0xf]
      %v3847 = vld [vmem:[%s3 + $0x20] sm:$0xf]
      %v3848 = vld [vmem:[%s3 + $0x24] sm:$0xf]
      %v3849 = vld [vmem:[%s3 + $0x28] sm:$0xf]
      %v3850 = vld [vmem:[%s3 + $0x2c] sm:$0xf]
      %v3851 = vld [vmem:[%s3 + $0x30] sm:$0xf]
      %v3852 = vld [vmem:[%s3 + $0x34] sm:$0xf]
      %v3853 = vld [vmem:[%s3 + $0x38] sm:$0xf]
      %v3854 = vld [vmem:[%s3 + $0x3c] sm:$0xf]
      %v3855 = vld [vmem:[%s4] sm:$0x1]
      %v3857 = vlaneseq
      %v3858 = vshrl.u32 %v3857, 7
      %v3859 = vsub.s32 0, %v3858
      %v3860 = vrot.slane %v3855, %v3859
      %v3878 = vunpack.c.l.b16 %v3839
      %v3879 = vunpack.c.l.b16 %v3840
      %v3880 = vunpack.c.l.b16 %v3841
      %v3881 = vunpack.c.l.b16 %v3842
      %v3882 = vunpack.c.l.b16 %v3843
      %v3883 = vunpack.c.l.b16 %v3844
      %v3884 = vunpack.c.l.b16 %v3845
      %v3885 = vunpack.c.l.b16 %v3846
      %v3886 = vunpack.c.l.b16 %v3847
      %v3887 = vunpack.c.l.b16 %v3848
      %v3888 = vunpack.c.l.b16 %v3849
      %v3889 = vunpack.c.l.b16 %v3850
      %v3890 = vunpack.c.l.b16 %v3851
      %v3891 = vunpack.c.l.b16 %v3852
      %v3892 = vunpack.c.l.b16 %v3853
      %v3893 = vunpack.c.l.b16 %v3854
      %v3894 = vpack.c.b16 %v3879, %v3878
      %v3895 = vpack.c.b16 %v3881, %v3880
      %v3896 = vpack.c.b16 %v3883, %v3882
      %v3897 = vpack.c.b16 %v3885, %v3884
      %v3898 = vpack.c.b16 %v3887, %v3886
      %v3899 = vpack.c.b16 %v3889, %v3888
      %v3900 = vpack.c.b16 %v3891, %v3890
      %v3901 = vpack.c.b16 %v3893, %v3892
      %3910 = vmatprep.subr.bf16.mxu0 0
      %3911 = vmatpush1.bf16.msra.mxu0 %v3894
      %3912 = vmatprep.subr.bf16.mxu0 0
      %3913 = vmatpush1.bf16.msra.mxu0 %v3895
      %3914 = vmatprep.subr.bf16.mxu0 0
      %3915 = vmatpush1.bf16.msra.mxu0 %v3896
      %3916 = vmatprep.subr.bf16.mxu0 0
      %3917 = vmatpush1.bf16.msra.mxu0 %v3897
      %3918 = vmatprep.subr.bf16.mxu0 0
      %3919 = vmatpush1.bf16.msra.mxu0 %v3898
      %3920 = vmatprep.subr.bf16.mxu0 0
      %3921 = vmatpush1.bf16.msra.mxu0 %v3899
      %3922 = vmatprep.subr.bf16.mxu0 0
      %3923 = vmatpush1.bf16.msra.mxu0 %v3900
      %3924 = vmatprep.subr.bf16.mxu0 0
      %3925 = vmatpush1.bf16.msra.mxu0 %v3901
      %3926 = vmatprep.subr.bf16.mxu0 0
      %3927 = vmatpush1.bf16.msra.mxu0 0
      %3928 = vmatprep.subr.bf16.mxu0 0
      %3929 = vmatpush1.bf16.msra.mxu0 0
      %3930 = vmatprep.subr.bf16.mxu0 0
      %3931 = vmatpush1.bf16.msra.mxu0 0
      %3932 = vmatprep.subr.bf16.mxu0 0
      %3933 = vmatpush1.bf16.msra.mxu0 0
      %3934 = vmatprep.subr.bf16.mxu0 0
      %3935 = vmatpush1.bf16.msra.mxu0 0
      %3936 = vmatprep.subr.bf16.mxu0 0
      %3937 = vmatpush1.bf16.msra.mxu0 0
      %3938 = vmatprep.subr.bf16.mxu0 0
      %3939 = vmatpush1.bf16.msra.mxu0 0
      %3940 = vmatprep.subr.bf16.mxu0 0
      %3941 = vmatpush1.bf16.msra.mxu0 0
      %3942 = vmatprep.mubr.bf16.mxu0 0
      %3943 = vmatmul.mubr.bf16.gmra.mrb[0].mxu0 %v3792
      %v3944 = vpop.f32.mrb[0].mxu0
      %v3945 = vadd.f32 %v3860, %v3944
      %v3946 = vpop.f32.mrb[0].mxu0
      %v3947 = vpop.f32.mrb[0].mxu0
      %v3948 = vadd.f32 %v3860, %v3947
      %v3949 = vpop.f32.mrb[0].mxu0
      %3950 = vmatprep.mubr.bf16.mxu0 0
      %3951 = vmatmul.mubr.bf16.gmra.mrb[0].mxu0 %v3795
      %v3952 = vpop.f32.mrb[0].mxu0
      %v3953 = vadd.f32 %v3860, %v3952
      %v3954 = vpop.f32.mrb[0].mxu0
      %v3955 = vpop.f32.mrb[0].mxu0
      %v3956 = vadd.f32 %v3860, %v3955
      %v3957 = vpop.f32.mrb[0].mxu0
      %3958 = vmatprep.mubr.bf16.mxu0 0
      %3959 = vmatmul.mubr.bf16.gmra.mrb[0].mxu0 %v3798
      %v3960 = vpop.f32.mrb[0].mxu0
      %v3961 = vadd.f32 %v3860, %v3960
      %v3962 = vpop.f32.mrb[0].mxu0
      %v3963 = vpop.f32.mrb[0].mxu0
      %v3964 = vadd.f32 %v3860, %v3963
      %v3965 = vpop.f32.mrb[0].mxu0
      %3966 = vmatprep.mubr.bf16.mxu0 0
      %3967 = vmatmul.mubr.bf16.gmra.mrb[0].mxu0 %v3801
      %v3968 = vpop.f32.mrb[0].mxu0
      %v3969 = vadd.f32 %v3860, %v3968
      %v3970 = vpop.f32.mrb[0].mxu0
      %v3971 = vpop.f32.mrb[0].mxu0
      %v3972 = vadd.f32 %v3860, %v3971
      %v3973 = vpop.f32.mrb[0].mxu0
      %3974 = vmatprep.mubr.bf16.mxu0 0
      %3975 = vmatmul.mubr.bf16.gmra.mrb[0].mxu0 %v3804
      %v3976 = vpop.f32.mrb[0].mxu0
      %v3977 = vadd.f32 %v3860, %v3976
      %v3978 = vpop.f32.mrb[0].mxu0
      %v3979 = vpop.f32.mrb[0].mxu0
      %v3980 = vadd.f32 %v3860, %v3979
      %v3981 = vpop.f32.mrb[0].mxu0
      %3982 = vmatprep.mubr.bf16.mxu0 0
      %3983 = vmatmul.mubr.bf16.gmra.mrb[0].mxu0 %v3807
      %v3984 = vpop.f32.mrb[0].mxu0
      %v3985 = vadd.f32 %v3860, %v3984
      %v3986 = vpop.f32.mrb[0].mxu0
      %v3987 = vpop.f32.mrb[0].mxu0
      %v3988 = vadd.f32 %v3860, %v3987
      %v3989 = vpop.f32.mrb[0].mxu0
      %3990 = vmatprep.mubr.bf16.mxu0 0
      %3991 = vmatmul.mubr.bf16.gmra.mrb[0].mxu0 %v3810
      %v3992 = vpop.f32.mrb[0].mxu0
      %v3993 = vadd.f32 %v3860, %v3992
      %v3994 = vpop.f32.mrb[0].mxu0
      %v3995 = vpop.f32.mrb[0].mxu0
      %v3996 = vadd.f32 %v3860, %v3995
      %v3997 = vpop.f32.mrb[0].mxu0
      %3998 = vmatprep.mubr.bf16.mxu0 0
      %3999 = vmatmul.mubr.bf16.gmra.mrb[0].mxu0 %v3813
      %v4000 = vpop.f32.mrb[0].mxu0
      %v4001 = vadd.f32 %v3860, %v4000
      %v4002 = vpop.f32.mrb[0].mxu0
      %v4003 = vpop.f32.mrb[0].mxu0
      %v4004 = vadd.f32 %v3860, %v4003
      %v4005 = vpop.f32.mrb[0].mxu0
      %4006 = vmatprep.mubr.bf16.mxu0 0
      %4007 = vmatmul.mubr.bf16.gmra.mrb[0].mxu0 %v3816
      %v4008 = vpop.f32.mrb[0].mxu0
      %v4009 = vadd.f32 %v3860, %v4008
      %v4010 = vpop.f32.mrb[0].mxu0
      %v4011 = vpop.f32.mrb[0].mxu0
      %v4012 = vadd.f32 %v3860, %v4011
      %v4013 = vpop.f32.mrb[0].mxu0
      %4014 = vmatprep.mubr.bf16.mxu0 0
      %4015 = vmatmul.mubr.bf16.gmra.mrb[0].mxu0 %v3819
      %v4016 = vpop.f32.mrb[0].mxu0
      %v4017 = vadd.f32 %v3860, %v4016
      %v4018 = vpop.f32.mrb[0].mxu0
      %v4019 = vpop.f32.mrb[0].mxu0
      %v4020 = vadd.f32 %v3860, %v4019
      %v4021 = vpop.f32.mrb[0].mxu0
      %4022 = vmatprep.mubr.bf16.mxu0 0
      %4023 = vmatmul.mubr.bf16.gmra.mrb[0].mxu0 %v3822
      %v4024 = vpop.f32.mrb[0].mxu0
      %v4025 = vadd.f32 %v3860, %v4024
      %v4026 = vpop.f32.mrb[0].mxu0
      %v4027 = vpop.f32.mrb[0].mxu0
      %v4028 = vadd.f32 %v3860, %v4027
      %v4029 = vpop.f32.mrb[0].mxu0
      %4030 = vmatprep.mubr.bf16.mxu0 0
      %4031 = vmatmul.mubr.bf16.gmra.mrb[0].mxu0 %v3825
      %v4032 = vpop.f32.mrb[0].mxu0
      %v4033 = vadd.f32 %v3860, %v4032
      %v4034 = vpop.f32.mrb[0].mxu0
      %v4035 = vpop.f32.mrb[0].mxu0
      %v4036 = vadd.f32 %v3860, %v4035
      %v4037 = vpop.f32.mrb[0].mxu0
      %4038 = vmatprep.mubr.bf16.mxu0 0
      %4039 = vmatmul.mubr.bf16.gmra.mrb[0].mxu0 %v3828
      %v4040 = vpop.f32.mrb[0].mxu0
      %v4041 = vadd.f32 %v3860, %v4040
      %v4042 = vpop.f32.mrb[0].mxu0
      %v4043 = vpop.f32.mrb[0].mxu0
      %v4044 = vadd.f32 %v3860, %v4043
      %v4045 = vpop.f32.mrb[0].mxu0
      %4046 = vmatprep.mubr.bf16.mxu0 0
      %4047 = vmatmul.mubr.bf16.gmra.mrb[0].mxu0 %v3831
      %v4048 = vpop.f32.mrb[0].mxu0
      %v4049 = vadd.f32 %v3860, %v4048
      %v4050 = vpop.f32.mrb[0].mxu0
      %v4051 = vpop.f32.mrb[0].mxu0
      %v4052 = vadd.f32 %v3860, %v4051
      %v4053 = vpop.f32.mrb[0].mxu0
      %4054 = vmatprep.mubr.bf16.mxu0 0
      %4055 = vmatmul.mubr.bf16.gmra.mrb[0].mxu0 %v3834
      %v4056 = vpop.f32.mrb[0].mxu0
      %v4057 = vadd.f32 %v3860, %v4056
      %v4058 = vpop.f32.mrb[0].mxu0
      %v4059 = vpop.f32.mrb[0].mxu0
      %v4060 = vadd.f32 %v3860, %v4059
      %v4061 = vpop.f32.mrb[0].mxu0
      %4062 = vmatprep.mubr.bf16.mxu0 0
      %4063 = vmatmul.mubr.bf16.gmra.mrb[0].mxu0 %v3837
      %v4064 = vpop.f32.mrb[0].mxu0
      %v4065 = vadd.f32 %v3860, %v4064
      %v4066 = vpop.f32.mrb[0].mxu0
      %v4067 = vpop.f32.mrb[0].mxu0
      %v4068 = vadd.f32 %v3860, %v4067
      %v4069 = vpop.f32.mrb[0].mxu0
      %4070 = vdwg.mxu0
      %v4071 = vpack.c.bf16 %v3948, %v3945
      %v4072 = vpack.c.bf16 %v3956, %v3953
      %v4073 = vpack.c.bf16 %v3964, %v3961
      %v4074 = vpack.c.bf16 %v3972, %v3969
      %v4075 = vpack.c.bf16 %v3980, %v3977
      %v4076 = vpack.c.bf16 %v3988, %v3985
      %v4077 = vpack.c.bf16 %v3996, %v3993
      %v4078 = vpack.c.bf16 %v4004, %v4001
      %v4079 = vpack.c.bf16 %v4012, %v4009
      %v4080 = vpack.c.bf16 %v4020, %v4017
      %v4081 = vpack.c.bf16 %v4028, %v4025
      %v4082 = vpack.c.bf16 %v4036, %v4033
      %v4083 = vpack.c.bf16 %v4044, %v4041
      %v4084 = vpack.c.bf16 %v4052, %v4049
      %v4085 = vpack.c.bf16 %v4060, %v4057
      %v4086 = vpack.c.bf16 %v4068, %v4065
      %v4103 = vunpack.c.l.b16 %v4071
      %v4104 = vunpack.c.h.b16 %v4071
      %v4105 = vunpack.c.l.b16 %v4072
      %v4106 = vunpack.c.h.b16 %v4072
      %v4107 = vunpack.c.l.b16 %v4073
      %v4108 = vunpack.c.h.b16 %v4073
      %v4109 = vunpack.c.l.b16 %v4074
      %v4110 = vunpack.c.h.b16 %v4074
      %v4111 = vunpack.c.l.b16 %v4075
      %v4112 = vunpack.c.h.b16 %v4075
      %v4113 = vunpack.c.l.b16 %v4076
      %v4114 = vunpack.c.h.b16 %v4076
      %v4115 = vunpack.c.l.b16 %v4077
      %v4116 = vunpack.c.h.b16 %v4077
      %v4117 = vunpack.c.l.b16 %v4078
      %v4118 = vunpack.c.h.b16 %v4078
      %v4119 = vunpack.c.l.b16 %v4079
      %v4120 = vunpack.c.h.b16 %v4079
      %v4121 = vunpack.c.l.b16 %v4080
      %v4122 = vunpack.c.h.b16 %v4080
      %v4123 = vunpack.c.l.b16 %v4081
      %v4124 = vunpack.c.h.b16 %v4081
      %v4125 = vunpack.c.l.b16 %v4082
      %v4126 = vunpack.c.h.b16 %v4082
      %v4127 = vunpack.c.l.b16 %v4083
      %v4128 = vunpack.c.h.b16 %v4083
      %v4129 = vunpack.c.l.b16 %v4084
      %v4130 = vunpack.c.h.b16 %v4084
      %v4131 = vunpack.c.l.b16 %v4085
      %v4132 = vunpack.c.h.b16 %v4085
      %v4133 = vunpack.c.l.b16 %v4086
      %v4134 = vunpack.c.h.b16 %v4086
      %v4135 = vpack.c.b16 %v4103, %v4103
      %v4136 = vpack.c.b16 %v4104, %v4104
      %v4137 = vpack.c.b16 %v4105, %v4105
      %v4138 = vpack.c.b16 %v4106, %v4106
      %v4139 = vpack.c.b16 %v4107, %v4107
      %v4140 = vpack.c.b16 %v4108, %v4108
      %v4141 = vpack.c.b16 %v4109, %v4109
      %v4142 = vpack.c.b16 %v4110, %v4110
      %v4143 = vpack.c.b16 %v4111, %v4111
      %v4144 = vpack.c.b16 %v4112, %v4112
      %v4145 = vpack.c.b16 %v4113, %v4113
      %v4146 = vpack.c.b16 %v4114, %v4114
      %v4147 = vpack.c.b16 %v4115, %v4115
      %v4148 = vpack.c.b16 %v4116, %v4116
      %v4149 = vpack.c.b16 %v4117, %v4117
      %v4150 = vpack.c.b16 %v4118, %v4118
      %v4151 = vpack.c.b16 %v4119, %v4119
      %v4152 = vpack.c.b16 %v4120, %v4120
      %v4153 = vpack.c.b16 %v4121, %v4121
      %v4154 = vpack.c.b16 %v4122, %v4122
      %v4155 = vpack.c.b16 %v4123, %v4123
      %v4156 = vpack.c.b16 %v4124, %v4124
      %v4157 = vpack.c.b16 %v4125, %v4125
      %v4158 = vpack.c.b16 %v4126, %v4126
      %v4159 = vpack.c.b16 %v4127, %v4127
      %v4160 = vpack.c.b16 %v4128, %v4128
      %v4161 = vpack.c.b16 %v4129, %v4129
      %v4162 = vpack.c.b16 %v4130, %v4130
      %v4163 = vpack.c.b16 %v4131, %v4131
      %v4164 = vpack.c.b16 %v4132, %v4132
      %v4165 = vpack.c.b16 %v4133, %v4133
      %v4166 = vpack.c.b16 %v4134, %v4134
      %4199 = vst [vmem:[%s407] sm:$0xf] %v4135
      %4200 = vst [vmem:[%s407 + $0x4] sm:$0xf] %v4136
      %4201 = vst [vmem:[%s407 + $0x8] sm:$0xf] %v4137
      %4202 = vst [vmem:[%s407 + $0xc] sm:$0xf] %v4138
      %4203 = vst [vmem:[%s407 + $0x10] sm:$0xf] %v4139
      %4204 = vst [vmem:[%s407 + $0x14] sm:$0xf] %v4140
      %4205 = vst [vmem:[%s407 + $0x18] sm:$0xf] %v4141
      %4206 = vst [vmem:[%s407 + $0x1c] sm:$0xf] %v4142
      %4207 = vst [vmem:[%s407 + $0x20] sm:$0xf] %v4143
      %4208 = vst [vmem:[%s407 + $0x24] sm:$0xf] %v4144
      %4209 = vst [vmem:[%s407 + $0x28] sm:$0xf] %v4145
      %4210 = vst [vmem:[%s407 + $0x2c] sm:$0xf] %v4146
      %4211 = vst [vmem:[%s407 + $0x30] sm:$0xf] %v4147
      %4212 = vst [vmem:[%s407 + $0x34] sm:$0xf] %v4148
      %4213 = vst [vmem:[%s407 + $0x38] sm:$0xf] %v4149
      %4214 = vst [vmem:[%s407 + $0x3c] sm:$0xf] %v4150
      %4215 = vst [vmem:[%s407 + $0x40] sm:$0xf] %v4151
      %4216 = vst [vmem:[%s407 + $0x44] sm:$0xf] %v4152
      %4217 = vst [vmem:[%s407 + $0x48] sm:$0xf] %v4153
      %4218 = vst [vmem:[%s407 + $0x4c] sm:$0xf] %v4154
      %4219 = vst [vmem:[%s407 + $0x50] sm:$0xf] %v4155
      %4220 = vst [vmem:[%s407 + $0x54] sm:$0xf] %v4156
      %4221 = vst [vmem:[%s407 + $0x58] sm:$0xf] %v4157
      %4222 = vst [vmem:[%s407 + $0x5c] sm:$0xf] %v4158
      %4223 = vst [vmem:[%s407 + $0x60] sm:$0xf] %v4159
      %4224 = vst [vmem:[%s407 + $0x64] sm:$0xf] %v4160
      %4225 = vst [vmem:[%s407 + $0x68] sm:$0xf] %v4161
      %4226 = vst [vmem:[%s407 + $0x6c] sm:$0xf] %v4162
      %4227 = vst [vmem:[%s407 + $0x70] sm:$0xf] %v4163
      %4228 = vst [vmem:[%s407 + $0x74] sm:$0xf] %v4164
      %4229 = vst [vmem:[%s407 + $0x78] sm:$0xf] %v4165
      %4230 = vst [vmem:[%s407 + $0x7c] sm:$0xf] %v4166
      %s4231 = smul.u32 4, %s21
      %p4232 = scmp.lt.s32.totalorder %s20, 1
      %s4233 = scalar_select %p4232, %s20, 1
      %p4234 = scmp.lt.s32.totalorder %s4231, 7
      %s4235 = scalar_select %p4234, %s4231, 7
      %s4236 = smul.addr %s4235, 8
      %s4237 = smul.addr %s4233, 64
      %s4238 = sadd.s32 %s4236, %s4237
      %s4239 = smul.addr %s4238, 4
      %s4240 = scalar_lea.vmem %s5, %s4239
      // Predicated region
      $region41: #{resize_conv_forward.1} parent=39 // pred_check
        %p4241 = pneg %p186
      $region42: #{resize_conv_forward.1} parent=39 // pred_check_branch
        %4243 = sbr.rel (%p4241) target = $region44
      $region43: #{resize_conv_forward.1} parent=39 // pred_region
        %s4244 = smul.u32 4, %s21
      $region44: #{resize_conv_forward.1} parent=39 // pred_fallthru
        _
    $region40: #{resize_conv_forward.1} parent=5 // pred_fallthru
      _
    %p4245 = scmp.le.s32.totalorder 2, %s11
    // Predicated region
    $region45: #{resize_conv_forward.1} parent=5 // pred_check
      %p4246 = pneg %p4245
    $region46: #{resize_conv_forward.1} parent=5 // pred_check_branch
      %4248 = sbr.rel (%p4246) target = $region48
    $region47: #{resize_conv_forward.1} parent=5 // pred_region
      %s4249 = ssub.s32 %s11, 2
      // Predicated region
      $region49: #{resize_conv_forward.1} parent=47 // pred_check
        %p4250 = pneg %p192
      $region50: #{resize_conv_forward.1} parent=47 // pred_check_branch
        %4252 = sbr.rel (%p4250) target = $region52
      $region51: #{resize_conv_forward.1} parent=47 // pred_region
        %s4253 = smul.u32 4, %s23
        %p4254 = scmp.lt.s32.totalorder %s22, 1
        %s4255 = scalar_select %p4254, %s22, 1
        %p4256 = scmp.lt.s32.totalorder %s4253, 7
        %s4257 = scalar_select %p4256, %s4253, 7
        %s4258 = smul.addr %s4257, 8
        %s4259 = smul.addr %s4255, 64
        %s4260 = sadd.s32 %s4258, %s4259
        %s4261 = smul.addr %s4260, 4
        %s4262 = scalar_lea.vmem %s5, %s4261
      $region52: #{resize_conv_forward.1} parent=47 // pred_fallthru
        _
    $region48: #{resize_conv_forward.1} parent=5 // pred_fallthru
      _
  $region6: #{resize_conv_forward.1} parent=0 // loop_footer
    %s15 = sadd.s32 1, %s11
  $region7: #{resize_conv_forward.1} parent=0 // loop_footer_branch
    %10 = sbr.rel target = $region3
  $region8: #{resize_conv_forward.1} parent=0 // loop_exit
    _

</llo_original>
